<compile_context>
chip_gen: v7x
topology: tpu7x:2x2x1
jax: 0.10.0
libtpu: 0.0.40
codegen_flags: <defaults>
</compile_context>

<pallas_src>
import math

import jax
import jax.numpy as jnp
from jax import lax
from jax.experimental import pallas as pl
from jax.experimental.pallas import tpu as pltpu

D_MODEL = 32
NHEAD = 4
HEAD_DIM = D_MODEL // NHEAD
DIM_FF = 64
EPS = 1e-5  # nn.LayerNorm default eps


# ----------------------------- kernel helpers ------------------------------
def _layernorm(x, g, b):
    mu = jnp.mean(x, axis=-1, keepdims=True)
    var = jnp.mean((x - mu) ** 2, axis=-1, keepdims=True)
    return (x - mu) * lax.rsqrt(var + EPS) * g + b


def _attention(q, k, v, wo, bt, sq, sk):
    """Batched MHA on a batch tile.

    q: (bt*sq, D) f32, already scaled by 1/sqrt(head_dim) via Wq;
    k, v: (bt*sk, D) f32; wo: (D, D) bf16.  Returns (bt*sq, D) f32.
    """
    D = q.shape[-1]
    q3 = q.reshape(bt, sq, D)            # sublane-only reshapes (last dim kept)
    k3 = k.reshape(bt, sk, D)
    v3 = v.reshape(bt, sk, D)

    head_outs = []
    for h in range(NHEAD):               # static unroll over 4 heads
        sl = slice(h * HEAD_DIM, (h + 1) * HEAD_DIM)
        qh = q3[..., sl].astype(jnp.bfloat16)
        kh = k3[..., sl].astype(jnp.bfloat16)
        vh = v3[..., sl].astype(jnp.bfloat16)
        s = jnp.einsum('bqd,bkd->bqk', qh, kh,
                       preferred_element_type=jnp.float32)
        s = s - jnp.max(s, axis=-1, keepdims=True)
        p = jnp.exp(s)
        inv = pl.reciprocal(jnp.sum(p, axis=-1, keepdims=True), approx=True)
        p = (p * inv).astype(jnp.bfloat16)
        head_outs.append(jnp.einsum('bqk,bkd->bqd', p, vh,
                                    preferred_element_type=jnp.float32))

    # Lane-concatenate the 4 head outputs into one (bt, sq, D) slab and push
    # it through Wo with a single matmul (1 MXU weight latch instead of 4).
    o = jnp.concatenate(head_outs, axis=-1).reshape(bt * sq, D)
    return jnp.dot(o.astype(jnp.bfloat16), wo,
                   preferred_element_type=jnp.float32)


# --------------------------------- kernel ----------------------------------
def _decoder_kernel(tgt_ref, mem_ref, qpos_ref, pos_ref,
                    sa_wqkv, sa_wo,
                    ca_wq, ca_wkv, ca_wo,
                    l1w, l1b, l2w, l2b,
                    n1g, n1b, n2g, n2b, n3g, n3b,
                    out_ref):
    bt, S, D = tgt_ref.shape
    Sm = mem_ref.shape[1]
    bf16 = jnp.bfloat16

    # flatten leading dims (sublane-only reshape) -> wide row-slab matmuls
    tgt = tgt_ref[...].reshape(bt * S, D)
    qpos = qpos_ref[...].reshape(bt * S, D)
    mem = mem_ref[...].reshape(bt * Sm, D)
    pos = pos_ref[...].reshape(bt * Sm, D)

    # --- self-attention: tgt += SA(norm1(tgt)+qpos, norm1(tgt)+qpos, norm1(tgt))
    t2 = _layernorm(tgt, n1g[...], n1b[...])
    qk_in = t2 + qpos
    # single matmul: [Q | K | V] = [qk_in | t2] @ [[Wq, Wk, 0], [0, 0, Wv]]
    sa_in = jnp.concatenate([qk_in, t2], axis=-1).astype(bf16)      # (rows, 2D)
    qkv = jnp.dot(sa_in, sa_wqkv[...],
                  preferred_element_type=jnp.float32)               # (rows, 3D)
    tgt = tgt + _attention(qkv[:, :D], qkv[:, D:2 * D], qkv[:, 2 * D:],
                           sa_wo[...], bt, S, S)

    # --- cross-attention: tgt += CA(norm2(tgt)+qpos, mem+pos, mem)
    t2 = _layernorm(tgt, n2g[...], n2b[...])
    q = jnp.dot((t2 + qpos).astype(bf16), ca_wq[...],
                preferred_element_type=jnp.float32)
    # single matmul: [K | V] = [mem+pos | mem] @ blockdiag(Wk, Wv)
    kv_in = jnp.concatenate([mem + pos, mem], axis=-1).astype(bf16)  # (rows, 2D)
    kv = jnp.dot(kv_in, ca_wkv[...], preferred_element_type=jnp.float32)
    tgt = tgt + _attention(q, kv[:, :D], kv[:, D:], ca_wo[...], bt, S, Sm)

    # --- feed-forward block (activation = relu)
    t2 = _layernorm(tgt, n3g[...], n3b[...])
    h = jnp.maximum(
        jnp.dot(t2.astype(bf16), l1w[...],
                preferred_element_type=jnp.float32) + l1b[...],
        0.0)
    ff = jnp.dot(h.astype(bf16), l2w[...],
                 preferred_element_type=jnp.float32) + l2b[...]
    tgt = tgt + ff

    out_ref[...] = tgt.reshape(bt, S, D).astype(out_ref.dtype)


# -------------------------------- wrapper -----------------------------------
_WEIGHT_ORDER = ("sa_wqkv", "sa_wo",
                 "ca_wq", "ca_wkv", "ca_wo",
                 "l1w", "l1b", "l2w", "l2b",
                 "n1g", "n1b", "n2g", "n2b", "n3g", "n3b")


def _default_num_steps(batch):
    """Generation-aware grid sizing: split the batch only across real
    TensorCores.  v7x has 2 TCs/chip; v5e/v6e have 1, where extra grid steps
    only add fixed per-step overhead and duplicate MXU weight latches."""
    n_tc = 1
    try:
        kind = jax.devices()[0].device_kind.lower()
        if "v7" in kind or "tpu7" in kind:
            n_tc = 2
    except Exception:
        pass
    steps = max(1, min(batch, n_tc))
    while batch % steps:                 # keep the batch evenly divisible
        steps -= 1
    return steps


def transformer_decoder_layer(tgt, memory, query_pos, pos, params,
                              num_steps=None):
    B, S, D = tgt.shape
    Sm = memory.shape[1]
    if num_steps is None:
        num_steps = _default_num_steps(B)
    assert B % num_steps == 0, "batch must divide evenly into grid steps"
    bt = B // num_steps
    # NOTE: if B*S grows large, cap rows-per-step (bt*S) instead so the
    # per-step activation slab stays comfortably inside VMEM; at the current
    # footprint (a few KB/step) no tiling is needed on any generation.

    def batched_spec(seq):
        return pl.BlockSpec((bt, seq, D), lambda i: (i, 0, 0))

    weights = [params[k] for k in _WEIGHT_ORDER]
    # Constant index_map -> weight tiles stay resident in VMEM across steps;
    # default 2-deep BlockSpec pipelining is kept (working set is a few KB).
    weight_specs = [pl.BlockSpec(w.shape, lambda i: (0, 0)) for w in weights]

    return pl.pallas_call(
        _decoder_kernel,
        out_shape=jax.ShapeDtypeStruct((B, S, D), jnp.float32),
        grid_spec=pltpu.PrefetchScalarGridSpec(
            num_scalar_prefetch=0,
            grid=(num_steps,),
            in_specs=[batched_spec(S), batched_spec(Sm),
                      batched_spec(S), batched_spec(Sm)] + weight_specs,
            out_specs=batched_spec(S)),
        compiler_params=pltpu.CompilerParams(
            dimension_semantics=("parallel",)),
    )(tgt, memory, query_pos, pos, *weights)


# ----------------------- deterministic parameter init -----------------------
def init_torch_params(key):
    """Deterministic parameters in native PyTorch layout."""
    d, ff = D_MODEL, DIM_FF
    ks = jax.random.split(key, 14)

    def w(k, shape, scale=0.1):
        return scale * jax.random.normal(k, shape, dtype=jnp.float32)

    return dict(
        sa_in=w(ks[0], (3 * d, d)),    # MultiheadAttention.in_proj_weight
        sa_out=w(ks[1], (d, d)),       # out_proj.weight (bias=False)
        ca_in=w(ks[2], (3 * d, d)),
        ca_out=w(ks[3], (d, d)),
        l1_w=w(ks[4], (ff, d)), l1_b=w(ks[5], (ff,)),
        l2_w=w(ks[6], (d, ff)), l2_b=w(ks[7], (d,)),
        n1_g=1.0 + w(ks[8], (d,)), n1_b=w(ks[9], (d,)),
        n2_g=1.0 + w(ks[10], (d,)), n2_b=w(ks[11], (d,)),
        n3_g=1.0 + w(ks[12], (d,)), n3_b=w(ks[13], (d,)),
    )


def prepare_kernel_params(tp):
    """One-time weight prep: transpose to x@W form, fold 1/sqrt(head_dim)
    into Wq, build the fused block weights (self-attn QKV, cross-attn KV),
    cast matmul weights to bf16, keep biases / LayerNorm params in f32."""
    d = D_MODEL
    scale = 1.0 / math.sqrt(HEAD_DIM)
    zeros = jnp.zeros((d, d), jnp.float32)

    sa_wq = tp["sa_in"][:d].T * scale
    sa_wk = tp["sa_in"][d:2 * d].T
    sa_wv = tp["sa_in"][2 * d:].T
    # [qk_in | t2] @ sa_wqkv == [qk_in@Wq | qk_in@Wk | t2@Wv]
    sa_wqkv = jnp.concatenate(
        [jnp.concatenate([sa_wq, sa_wk, zeros], axis=1),
         jnp.concatenate([zeros, zeros, sa_wv], axis=1)], axis=0)   # (2d, 3d)

    ca_wq = tp["ca_in"][:d].T * scale
    ca_wk = tp["ca_in"][d:2 * d].T
    ca_wv = tp["ca_in"][2 * d:].T
    # [mem+pos | mem] @ ca_wkv == [(mem+pos)@Wk | mem@Wv]
    ca_wkv = jnp.concatenate(
        [jnp.concatenate([ca_wk, zeros], axis=1),
         jnp.concatenate([zeros, ca_wv], axis=1)], axis=0)          # (2d, 2d)

    bf = lambda x: x.astype(jnp.bfloat16)
    row = lambda x: x.reshape(1, -1).astype(jnp.float32)
    return dict(
        sa_wqkv=bf(sa_wqkv), sa_wo=bf(tp["sa_out"].T),
        ca_wq=bf(ca_wq), ca_wkv=bf(ca_wkv), ca_wo=bf(tp["ca_out"].T),
        l1w=bf(tp["l1_w"].T), l1b=row(tp["l1_b"]),
        l2w=bf(tp["l2_w"].T), l2b=row(tp["l2_b"]),
        n1g=row(tp["n1_g"]), n1b=row(tp["n1_b"]),
        n2g=row(tp["n2_g"]), n2b=row(tp["n2_b"]),
        n3g=row(tp["n3_g"]), n3b=row(tp["n3_b"]),
    )


# ---------------------------- plain-JAX reference ---------------------------
def reference(tgt, memory, query_pos, pos, tp):
    """f32 reference using the raw PyTorch-layout (unfused, unscaled) weights."""
    def ln(x, g, b):
        mu = x.mean(-1, keepdims=True)
        var = ((x - mu) ** 2).mean(-1, keepdims=True)
        return (x - mu) / jnp.sqrt(var + EPS) * g + b

    def mha(q_in, k_in, v_in, in_proj, out_proj):
        B, Sq, D = q_in.shape
        Sk = k_in.shape[1]
        wq, wk, wv = in_proj[:D], in_proj[D:2 * D], in_proj[2 * D:]
        q = (q_in @ wq.T).reshape(B, Sq, NHEAD, HEAD_DIM).transpose(0, 2, 1, 3)
        k = (k_in @ wk.T).reshape(B, Sk, NHEAD, HEAD_DIM).transpose(0, 2, 1, 3)
        v = (v_in @ wv.T).reshape(B, Sk, NHEAD, HEAD_DIM).transpose(0, 2, 1, 3)
        s = (q / math.sqrt(HEAD_DIM)) @ k.transpose(0, 1, 3, 2)
        o = jax.nn.softmax(s, axis=-1) @ v
        return o.transpose(0, 2, 1, 3).reshape(B, Sq, D) @ out_proj.T

    t2 = ln(tgt, tp["n1_g"], tp["n1_b"])
    qk = t2 + query_pos
    tgt = tgt + mha(qk, qk, t2, tp["sa_in"], tp["sa_out"])
    t2 = ln(tgt, tp["n2_g"], tp["n2_b"])
    tgt = tgt + mha(t2 + query_pos, memory + pos, memory,
                    tp["ca_in"], tp["ca_out"])
    t2 = ln(tgt, tp["n3_g"], tp["n3_b"])
    h = jax.nn.relu(t2 @ tp["l1_w"].T + tp["l1_b"])
    return tgt + (h @ tp["l2_w"].T + tp["l2_b"])


# ----------------------------------- main -----------------------------------
if __name__ == "__main__":
    key = jax.random.PRNGKey(0)
    kp, kt, km, kq, kpo = jax.random.split(key, 5)
    B, S, Sm = 2, 8, 16

    tgt = jax.random.normal(kt, (B, S, D_MODEL), dtype=jnp.float32)
    memory = jax.random.normal(km, (B, Sm, D_MODEL), dtype=jnp.float32)
    query_pos = jax.random.normal(kq, (B, S, D_MODEL), dtype=jnp.float32)
    pos = jax.random.normal(kpo, (B, Sm, D_MODEL), dtype=jnp.float32)

    torch_params = init_torch_params(kp)
    kernel_params = prepare_kernel_params(torch_params)

    out = transformer_decoder_layer(tgt, memory, query_pos, pos, kernel_params)
    out = jax.block_until_ready(out)

    ref = reference(tgt, memory, query_pos, pos, torch_params)
    err = float(jnp.max(jnp.abs(out - ref)))
    # MXU operands are bf16 (f32 accumulation) and the softmax denominator
    # uses the EUP approx reciprocal, so compare against the f32 reference at
    # bf16-appropriate tolerance.
    assert jnp.allclose(out, ref, atol=3e-2, rtol=3e-2), f"max abs err={err}"

    print("KERNEL_OK")
</pallas_src>

<mosaic_0001>
module attributes {stable_mosaic.version = 11 : i64} {
  func.func @_decoder_kernel(%arg0: i32, %arg1: memref<2x8x32xf32, #tpu.memory_space<vmem>>, %arg2: memref<2x16x32xf32, #tpu.memory_space<vmem>>, %arg3: memref<2x8x32xf32, #tpu.memory_space<vmem>>, %arg4: memref<2x16x32xf32, #tpu.memory_space<vmem>>, %arg5: memref<64x96xbf16, #tpu.memory_space<vmem>>, %arg6: memref<32x32xbf16, #tpu.memory_space<vmem>>, %arg7: memref<32x32xbf16, #tpu.memory_space<vmem>>, %arg8: memref<64x64xbf16, #tpu.memory_space<vmem>>, %arg9: memref<32x32xbf16, #tpu.memory_space<vmem>>, %arg10: memref<32x64xbf16, #tpu.memory_space<vmem>>, %arg11: memref<1x64xf32, #tpu.memory_space<vmem>>, %arg12: memref<64x32xbf16, #tpu.memory_space<vmem>>, %arg13: memref<1x32xf32, #tpu.memory_space<vmem>>, %arg14: memref<1x32xf32, #tpu.memory_space<vmem>>, %arg15: memref<1x32xf32, #tpu.memory_space<vmem>>, %arg16: memref<1x32xf32, #tpu.memory_space<vmem>>, %arg17: memref<1x32xf32, #tpu.memory_space<vmem>>, %arg18: memref<1x32xf32, #tpu.memory_space<vmem>>, %arg19: memref<1x32xf32, #tpu.memory_space<vmem>>, %arg20: memref<2x8x32xf32, #tpu.memory_space<vmem>>) attributes {dimension_semantics = [#tpu.dimension_semantics<parallel>], iteration_bounds = array<i64: 1>, scalar_prefetch = 0 : i64, scratch_operands = 0 : i64, tpu.core_type = #tpu.core_type<tc>, window_params = [{transform_indices = @transform_0, window_bounds = array<i64: 2, 8, 32>}, {transform_indices = @transform_1, window_bounds = array<i64: 2, 16, 32>}, {transform_indices = @transform_2, window_bounds = array<i64: 2, 8, 32>}, {transform_indices = @transform_3, window_bounds = array<i64: 2, 16, 32>}, {pipeline_mode = #tpu.pipeline_mode<synchronous>, transform_indices = @transform_4, window_bounds = array<i64: 64, 96>}, {pipeline_mode = #tpu.pipeline_mode<synchronous>, transform_indices = @transform_5, window_bounds = array<i64: 32, 32>}, {pipeline_mode = #tpu.pipeline_mode<synchronous>, transform_indices = @transform_6, window_bounds = array<i64: 32, 32>}, {pipeline_mode = #tpu.pipeline_mode<synchronous>, transform_indices = @transform_7, window_bounds = array<i64: 64, 64>}, {pipeline_mode = #tpu.pipeline_mode<synchronous>, transform_indices = @transform_8, window_bounds = array<i64: 32, 32>}, {pipeline_mode = #tpu.pipeline_mode<synchronous>, transform_indices = @transform_9, window_bounds = array<i64: 32, 64>}, {pipeline_mode = #tpu.pipeline_mode<synchronous>, transform_indices = @transform_10, window_bounds = array<i64: 1, 64>}, {pipeline_mode = #tpu.pipeline_mode<synchronous>, transform_indices = @transform_11, window_bounds = array<i64: 64, 32>}, {pipeline_mode = #tpu.pipeline_mode<synchronous>, transform_indices = @transform_12, window_bounds = array<i64: 1, 32>}, {pipeline_mode = #tpu.pipeline_mode<synchronous>, transform_indices = @transform_13, window_bounds = array<i64: 1, 32>}, {pipeline_mode = #tpu.pipeline_mode<synchronous>, transform_indices = @transform_14, window_bounds = array<i64: 1, 32>}, {pipeline_mode = #tpu.pipeline_mode<synchronous>, transform_indices = @transform_15, window_bounds = array<i64: 1, 32>}, {pipeline_mode = #tpu.pipeline_mode<synchronous>, transform_indices = @transform_16, window_bounds = array<i64: 1, 32>}, {pipeline_mode = #tpu.pipeline_mode<synchronous>, transform_indices = @transform_17, window_bounds = array<i64: 1, 32>}, {pipeline_mode = #tpu.pipeline_mode<synchronous>, transform_indices = @transform_18, window_bounds = array<i64: 1, 32>}, {transform_indices = @transform_19, window_bounds = array<i64: 2, 8, 32>}]} {
    %c0 = arith.constant 0 : index
    %c0_0 = arith.constant 0 : index
    %c0_1 = arith.constant 0 : index
    %0 = vector.load %arg1[%c0, %c0_0, %c0_1] : memref<2x8x32xf32, #tpu.memory_space<vmem>>, vector<2x8x32xf32>
    %1 = vector.shape_cast %0 : vector<2x8x32xf32> to vector<16x32xf32>
    %c0_2 = arith.constant 0 : index
    %c0_3 = arith.constant 0 : index
    %c0_4 = arith.constant 0 : index
    %2 = vector.load %arg3[%c0_2, %c0_3, %c0_4] : memref<2x8x32xf32, #tpu.memory_space<vmem>>, vector<2x8x32xf32>
    %3 = vector.shape_cast %2 : vector<2x8x32xf32> to vector<16x32xf32>
    %c0_5 = arith.constant 0 : index
    %c0_6 = arith.constant 0 : index
    %c0_7 = arith.constant 0 : index
    %4 = vector.load %arg2[%c0_5, %c0_6, %c0_7] : memref<2x16x32xf32, #tpu.memory_space<vmem>>, vector<2x16x32xf32>
    %5 = vector.shape_cast %4 : vector<2x16x32xf32> to vector<32x32xf32>
    %c0_8 = arith.constant 0 : index
    %c0_9 = arith.constant 0 : index
    %c0_10 = arith.constant 0 : index
    %6 = vector.load %arg4[%c0_8, %c0_9, %c0_10] : memref<2x16x32xf32, #tpu.memory_space<vmem>>, vector<2x16x32xf32>
    %7 = vector.shape_cast %6 : vector<2x16x32xf32> to vector<32x32xf32>
    %c0_11 = arith.constant 0 : index
    %c0_12 = arith.constant 0 : index
    %8 = vector.load %arg14[%c0_11, %c0_12] : memref<1x32xf32, #tpu.memory_space<vmem>>, vector<1x32xf32>
    %c0_13 = arith.constant 0 : index
    %c0_14 = arith.constant 0 : index
    %9 = vector.load %arg15[%c0_13, %c0_14] : memref<1x32xf32, #tpu.memory_space<vmem>>, vector<1x32xf32>
    %cst = arith.constant dense<0.000000e+00> : vector<16xf32>
    %10 = vector.multi_reduction <add>, %1, %cst [1] : vector<16x32xf32> to vector<16xf32>
    %11 = vector.shape_cast %10 : vector<16xf32> to vector<16x1xf32>
    %cst_15 = arith.constant 3.200000e+01 : f32
    %12 = vector.broadcast %cst_15 : f32 to vector<16x1xf32>
    %13 = arith.divf %11, %12 : vector<16x1xf32>
    %14 = vector.broadcast %13 : vector<16x1xf32> to vector<16x32xf32>
    %15 = arith.subf %1, %14 : vector<16x32xf32>
    %16 = arith.mulf %15, %15 : vector<16x32xf32>
    %cst_16 = arith.constant dense<0.000000e+00> : vector<16xf32>
    %17 = vector.multi_reduction <add>, %16, %cst_16 [1] : vector<16x32xf32> to vector<16xf32>
    %18 = vector.shape_cast %17 : vector<16xf32> to vector<16x1xf32>
    %cst_17 = arith.constant 3.200000e+01 : f32
    %19 = vector.broadcast %cst_17 : f32 to vector<16x1xf32>
    %20 = arith.divf %18, %19 : vector<16x1xf32>
    %21 = vector.broadcast %13 : vector<16x1xf32> to vector<16x32xf32>
    %22 = arith.subf %1, %21 : vector<16x32xf32>
    %cst_18 = arith.constant 9.99999974E-6 : f32
    %23 = vector.broadcast %cst_18 : f32 to vector<16x1xf32>
    %24 = arith.addf %20, %23 : vector<16x1xf32>
    %25 = math.rsqrt %24 : vector<16x1xf32>
    %26 = vector.broadcast %25 : vector<16x1xf32> to vector<16x32xf32>
    %27 = arith.mulf %22, %26 : vector<16x32xf32>
    %28 = vector.broadcast %8 : vector<1x32xf32> to vector<16x32xf32>
    %29 = arith.mulf %27, %28 : vector<16x32xf32>
    %30 = vector.broadcast %9 : vector<1x32xf32> to vector<16x32xf32>
    %31 = arith.addf %29, %30 : vector<16x32xf32>
    %32 = arith.addf %31, %3 : vector<16x32xf32>
    %33 = tpu.concatenate %32, %31 in 1 : vector<16x32xf32>, vector<16x32xf32> -> vector<16x64xf32>
    %34 = arith.truncf %33 : vector<16x64xf32> to vector<16x64xbf16>
    %c0_19 = arith.constant 0 : index
    %c0_20 = arith.constant 0 : index
    %35 = vector.load %arg5[%c0_19, %c0_20] : memref<64x96xbf16, #tpu.memory_space<vmem>>, vector<64x96xbf16>
    %cst_21 = arith.constant dense<0.000000e+00> : vector<16x96xf32>
    %36 = tpu.matmul %34, %35, %cst_21 {dimension_numbers = #tpu.dot_dimension_numbers<[1], [0], [0], [1], [0, 0, 1, 1], [], []>} : vector<16x64xbf16>, vector<64x96xbf16>, vector<16x96xf32> -> vector<16x96xf32>
    %37 = vector.extract_strided_slice %36 {offsets = [0, 0], sizes = [16, 32], strides = [1, 1]} : vector<16x96xf32> to vector<16x32xf32>
    %38 = vector.extract_strided_slice %36 {offsets = [0, 32], sizes = [16, 32], strides = [1, 1]} : vector<16x96xf32> to vector<16x32xf32>
    %39 = vector.extract_strided_slice %36 {offsets = [0, 64], sizes = [16, 32], strides = [1, 1]} : vector<16x96xf32> to vector<16x32xf32>
    %c0_22 = arith.constant 0 : index
    %c0_23 = arith.constant 0 : index
    %40 = vector.load %arg6[%c0_22, %c0_23] : memref<32x32xbf16, #tpu.memory_space<vmem>>, vector<32x32xbf16>
    %41 = vector.shape_cast %37 : vector<16x32xf32> to vector<2x8x32xf32>
    %42 = vector.shape_cast %38 : vector<16x32xf32> to vector<2x8x32xf32>
    %43 = vector.shape_cast %39 : vector<16x32xf32> to vector<2x8x32xf32>
    %44 = vector.extract_strided_slice %41 {offsets = [0, 0, 0], sizes = [2, 8, 8], strides = [1, 1, 1]} : vector<2x8x32xf32> to vector<2x8x8xf32>
    %45 = arith.truncf %44 : vector<2x8x8xf32> to vector<2x8x8xbf16>
    %46 = vector.extract_strided_slice %42 {offsets = [0, 0, 0], sizes = [2, 8, 8], strides = [1, 1, 1]} : vector<2x8x32xf32> to vector<2x8x8xf32>
    %47 = arith.truncf %46 : vector<2x8x8xf32> to vector<2x8x8xbf16>
    %48 = vector.extract_strided_slice %43 {offsets = [0, 0, 0], sizes = [2, 8, 8], strides = [1, 1, 1]} : vector<2x8x32xf32> to vector<2x8x8xf32>
    %49 = arith.truncf %48 : vector<2x8x8xf32> to vector<2x8x8xbf16>
    "tpu.trace_start"() <{level = 10 : i32, message = "bqd,bkd->bqk"}> : () -> ()
    %cst_24 = arith.constant dense<0.000000e+00> : vector<2x8x8xf32>
    %50 = tpu.matmul %45, %47, %cst_24 {dimension_numbers = #tpu.dot_dimension_numbers<[2], [2], [1], [1], [0, 0, 0, 1, 1, 1], [0], [0]>} : vector<2x8x8xbf16>, vector<2x8x8xbf16>, vector<2x8x8xf32> -> vector<2x8x8xf32>
    "tpu.trace_stop"() : () -> ()
    %cst_25 = arith.constant dense<0xFF800000> : vector<2x8xf32>
    %51 = vector.multi_reduction <maximumf>, %50, %cst_25 [2] : vector<2x8x8xf32> to vector<2x8xf32>
    %52 = vector.shape_cast %51 : vector<2x8xf32> to vector<2x8x1xf32>
    %53 = vector.broadcast %52 : vector<2x8x1xf32> to vector<2x8x8xf32>
    %54 = arith.subf %50, %53 : vector<2x8x8xf32>
    %55 = math.exp %54 : vector<2x8x8xf32>
    %cst_26 = arith.constant dense<0.000000e+00> : vector<2x8xf32>
    %56 = vector.multi_reduction <add>, %55, %cst_26 [2] : vector<2x8x8xf32> to vector<2x8xf32>
    %57 = vector.shape_cast %56 : vector<2x8xf32> to vector<2x8x1xf32>
    %58 = tpu.reciprocal %57 {approx = true} : vector<2x8x1xf32> -> vector<2x8x1xf32>
    %59 = vector.broadcast %58 : vector<2x8x1xf32> to vector<2x8x8xf32>
    %60 = arith.mulf %55, %59 : vector<2x8x8xf32>
    %61 = arith.truncf %60 : vector<2x8x8xf32> to vector<2x8x8xbf16>
    "tpu.trace_start"() <{level = 10 : i32, message = "bqk,bkd->bqd"}> : () -> ()
    %cst_27 = arith.constant dense<0.000000e+00> : vector<2x8x8xf32>
    %62 = tpu.matmul %61, %49, %cst_27 {dimension_numbers = #tpu.dot_dimension_numbers<[2], [1], [1], [2], [0, 0, 0, 1, 1, 2], [0], [0]>} : vector<2x8x8xbf16>, vector<2x8x8xbf16>, vector<2x8x8xf32> -> vector<2x8x8xf32>
    "tpu.trace_stop"() : () -> ()
    %63 = vector.extract_strided_slice %41 {offsets = [0, 0, 8], sizes = [2, 8, 8], strides = [1, 1, 1]} : vector<2x8x32xf32> to vector<2x8x8xf32>
    %64 = arith.truncf %63 : vector<2x8x8xf32> to vector<2x8x8xbf16>
    %65 = vector.extract_strided_slice %42 {offsets = [0, 0, 8], sizes = [2, 8, 8], strides = [1, 1, 1]} : vector<2x8x32xf32> to vector<2x8x8xf32>
    %66 = arith.truncf %65 : vector<2x8x8xf32> to vector<2x8x8xbf16>
    %67 = vector.extract_strided_slice %43 {offsets = [0, 0, 8], sizes = [2, 8, 8], strides = [1, 1, 1]} : vector<2x8x32xf32> to vector<2x8x8xf32>
    %68 = arith.truncf %67 : vector<2x8x8xf32> to vector<2x8x8xbf16>
    "tpu.trace_start"() <{level = 10 : i32, message = "bqd,bkd->bqk"}> : () -> ()
    %cst_28 = arith.constant dense<0.000000e+00> : vector<2x8x8xf32>
    %69 = tpu.matmul %64, %66, %cst_28 {dimension_numbers = #tpu.dot_dimension_numbers<[2], [2], [1], [1], [0, 0, 0, 1, 1, 1], [0], [0]>} : vector<2x8x8xbf16>, vector<2x8x8xbf16>, vector<2x8x8xf32> -> vector<2x8x8xf32>
    "tpu.trace_stop"() : () -> ()
    %cst_29 = arith.constant dense<0xFF800000> : vector<2x8xf32>
    %70 = vector.multi_reduction <maximumf>, %69, %cst_29 [2] : vector<2x8x8xf32> to vector<2x8xf32>
    %71 = vector.shape_cast %70 : vector<2x8xf32> to vector<2x8x1xf32>
    %72 = vector.broadcast %71 : vector<2x8x1xf32> to vector<2x8x8xf32>
    %73 = arith.subf %69, %72 : vector<2x8x8xf32>
    %74 = math.exp %73 : vector<2x8x8xf32>
    %cst_30 = arith.constant dense<0.000000e+00> : vector<2x8xf32>
    %75 = vector.multi_reduction <add>, %74, %cst_30 [2] : vector<2x8x8xf32> to vector<2x8xf32>
    %76 = vector.shape_cast %75 : vector<2x8xf32> to vector<2x8x1xf32>
    %77 = tpu.reciprocal %76 {approx = true} : vector<2x8x1xf32> -> vector<2x8x1xf32>
    %78 = vector.broadcast %77 : vector<2x8x1xf32> to vector<2x8x8xf32>
    %79 = arith.mulf %74, %78 : vector<2x8x8xf32>
    %80 = arith.truncf %79 : vector<2x8x8xf32> to vector<2x8x8xbf16>
    "tpu.trace_start"() <{level = 10 : i32, message = "bqk,bkd->bqd"}> : () -> ()
    %cst_31 = arith.constant dense<0.000000e+00> : vector<2x8x8xf32>
    %81 = tpu.matmul %80, %68, %cst_31 {dimension_numbers = #tpu.dot_dimension_numbers<[2], [1], [1], [2], [0, 0, 0, 1, 1, 2], [0], [0]>} : vector<2x8x8xbf16>, vector<2x8x8xbf16>, vector<2x8x8xf32> -> vector<2x8x8xf32>
    "tpu.trace_stop"() : () -> ()
    %82 = vector.extract_strided_slice %41 {offsets = [0, 0, 16], sizes = [2, 8, 8], strides = [1, 1, 1]} : vector<2x8x32xf32> to vector<2x8x8xf32>
    %83 = arith.truncf %82 : vector<2x8x8xf32> to vector<2x8x8xbf16>
    %84 = vector.extract_strided_slice %42 {offsets = [0, 0, 16], sizes = [2, 8, 8], strides = [1, 1, 1]} : vector<2x8x32xf32> to vector<2x8x8xf32>
    %85 = arith.truncf %84 : vector<2x8x8xf32> to vector<2x8x8xbf16>
    %86 = vector.extract_strided_slice %43 {offsets = [0, 0, 16], sizes = [2, 8, 8], strides = [1, 1, 1]} : vector<2x8x32xf32> to vector<2x8x8xf32>
    %87 = arith.truncf %86 : vector<2x8x8xf32> to vector<2x8x8xbf16>
    "tpu.trace_start"() <{level = 10 : i32, message = "bqd,bkd->bqk"}> : () -> ()
    %cst_32 = arith.constant dense<0.000000e+00> : vector<2x8x8xf32>
    %88 = tpu.matmul %83, %85, %cst_32 {dimension_numbers = #tpu.dot_dimension_numbers<[2], [2], [1], [1], [0, 0, 0, 1, 1, 1], [0], [0]>} : vector<2x8x8xbf16>, vector<2x8x8xbf16>, vector<2x8x8xf32> -> vector<2x8x8xf32>
    "tpu.trace_stop"() : () -> ()
    %cst_33 = arith.constant dense<0xFF800000> : vector<2x8xf32>
    %89 = vector.multi_reduction <maximumf>, %88, %cst_33 [2] : vector<2x8x8xf32> to vector<2x8xf32>
    %90 = vector.shape_cast %89 : vector<2x8xf32> to vector<2x8x1xf32>
    %91 = vector.broadcast %90 : vector<2x8x1xf32> to vector<2x8x8xf32>
    %92 = arith.subf %88, %91 : vector<2x8x8xf32>
    %93 = math.exp %92 : vector<2x8x8xf32>
    %cst_34 = arith.constant dense<0.000000e+00> : vector<2x8xf32>
    %94 = vector.multi_reduction <add>, %93, %cst_34 [2] : vector<2x8x8xf32> to vector<2x8xf32>
    %95 = vector.shape_cast %94 : vector<2x8xf32> to vector<2x8x1xf32>
    %96 = tpu.reciprocal %95 {approx = true} : vector<2x8x1xf32> -> vector<2x8x1xf32>
    %97 = vector.broadcast %96 : vector<2x8x1xf32> to vector<2x8x8xf32>
    %98 = arith.mulf %93, %97 : vector<2x8x8xf32>
    %99 = arith.truncf %98 : vector<2x8x8xf32> to vector<2x8x8xbf16>
    "tpu.trace_start"() <{level = 10 : i32, message = "bqk,bkd->bqd"}> : () -> ()
    %cst_35 = arith.constant dense<0.000000e+00> : vector<2x8x8xf32>
    %100 = tpu.matmul %99, %87, %cst_35 {dimension_numbers = #tpu.dot_dimension_numbers<[2], [1], [1], [2], [0, 0, 0, 1, 1, 2], [0], [0]>} : vector<2x8x8xbf16>, vector<2x8x8xbf16>, vector<2x8x8xf32> -> vector<2x8x8xf32>
    "tpu.trace_stop"() : () -> ()
    %101 = vector.extract_strided_slice %41 {offsets = [0, 0, 24], sizes = [2, 8, 8], strides = [1, 1, 1]} : vector<2x8x32xf32> to vector<2x8x8xf32>
    %102 = arith.truncf %101 : vector<2x8x8xf32> to vector<2x8x8xbf16>
    %103 = vector.extract_strided_slice %42 {offsets = [0, 0, 24], sizes = [2, 8, 8], strides = [1, 1, 1]} : vector<2x8x32xf32> to vector<2x8x8xf32>
    %104 = arith.truncf %103 : vector<2x8x8xf32> to vector<2x8x8xbf16>
    %105 = vector.extract_strided_slice %43 {offsets = [0, 0, 24], sizes = [2, 8, 8], strides = [1, 1, 1]} : vector<2x8x32xf32> to vector<2x8x8xf32>
    %106 = arith.truncf %105 : vector<2x8x8xf32> to vector<2x8x8xbf16>
    "tpu.trace_start"() <{level = 10 : i32, message = "bqd,bkd->bqk"}> : () -> ()
    %cst_36 = arith.constant dense<0.000000e+00> : vector<2x8x8xf32>
    %107 = tpu.matmul %102, %104, %cst_36 {dimension_numbers = #tpu.dot_dimension_numbers<[2], [2], [1], [1], [0, 0, 0, 1, 1, 1], [0], [0]>} : vector<2x8x8xbf16>, vector<2x8x8xbf16>, vector<2x8x8xf32> -> vector<2x8x8xf32>
    "tpu.trace_stop"() : () -> ()
    %cst_37 = arith.constant dense<0xFF800000> : vector<2x8xf32>
    %108 = vector.multi_reduction <maximumf>, %107, %cst_37 [2] : vector<2x8x8xf32> to vector<2x8xf32>
    %109 = vector.shape_cast %108 : vector<2x8xf32> to vector<2x8x1xf32>
    %110 = vector.broadcast %109 : vector<2x8x1xf32> to vector<2x8x8xf32>
    %111 = arith.subf %107, %110 : vector<2x8x8xf32>
    %112 = math.exp %111 : vector<2x8x8xf32>
    %cst_38 = arith.constant dense<0.000000e+00> : vector<2x8xf32>
    %113 = vector.multi_reduction <add>, %112, %cst_38 [2] : vector<2x8x8xf32> to vector<2x8xf32>
    %114 = vector.shape_cast %113 : vector<2x8xf32> to vector<2x8x1xf32>
    %115 = tpu.reciprocal %114 {approx = true} : vector<2x8x1xf32> -> vector<2x8x1xf32>
    %116 = vector.broadcast %115 : vector<2x8x1xf32> to vector<2x8x8xf32>
    %117 = arith.mulf %112, %116 : vector<2x8x8xf32>
    %118 = arith.truncf %117 : vector<2x8x8xf32> to vector<2x8x8xbf16>
    "tpu.trace_start"() <{level = 10 : i32, message = "bqk,bkd->bqd"}> : () -> ()
    %cst_39 = arith.constant dense<0.000000e+00> : vector<2x8x8xf32>
    %119 = tpu.matmul %118, %106, %cst_39 {dimension_numbers = #tpu.dot_dimension_numbers<[2], [1], [1], [2], [0, 0, 0, 1, 1, 2], [0], [0]>} : vector<2x8x8xbf16>, vector<2x8x8xbf16>, vector<2x8x8xf32> -> vector<2x8x8xf32>
    "tpu.trace_stop"() : () -> ()
    %120 = tpu.concatenate %62, %81, %100, %119 in 2 : vector<2x8x8xf32>, vector<2x8x8xf32>, vector<2x8x8xf32>, vector<2x8x8xf32> -> vector<2x8x32xf32>
    %121 = vector.shape_cast %120 : vector<2x8x32xf32> to vector<16x32xf32>
    %122 = arith.truncf %121 : vector<16x32xf32> to vector<16x32xbf16>
    %cst_40 = arith.constant dense<0.000000e+00> : vector<16x32xf32>
    %123 = tpu.matmul %122, %40, %cst_40 {dimension_numbers = #tpu.dot_dimension_numbers<[1], [0], [0], [1], [0, 0, 1, 1], [], []>} : vector<16x32xbf16>, vector<32x32xbf16>, vector<16x32xf32> -> vector<16x32xf32>
    %124 = arith.addf %1, %123 : vector<16x32xf32>
    %c0_41 = arith.constant 0 : index
    %c0_42 = arith.constant 0 : index
    %125 = vector.load %arg16[%c0_41, %c0_42] : memref<1x32xf32, #tpu.memory_space<vmem>>, vector<1x32xf32>
    %c0_43 = arith.constant 0 : index
    %c0_44 = arith.constant 0 : index
    %126 = vector.load %arg17[%c0_43, %c0_44] : memref<1x32xf32, #tpu.memory_space<vmem>>, vector<1x32xf32>
    %cst_45 = arith.constant dense<0.000000e+00> : vector<16xf32>
    %127 = vector.multi_reduction <add>, %124, %cst_45 [1] : vector<16x32xf32> to vector<16xf32>
    %128 = vector.shape_cast %127 : vector<16xf32> to vector<16x1xf32>
    %cst_46 = arith.constant 3.200000e+01 : f32
    %129 = vector.broadcast %cst_46 : f32 to vector<16x1xf32>
    %130 = arith.divf %128, %129 : vector<16x1xf32>
    %131 = vector.broadcast %130 : vector<16x1xf32> to vector<16x32xf32>
    %132 = arith.subf %124, %131 : vector<16x32xf32>
    %133 = arith.mulf %132, %132 : vector<16x32xf32>
    %cst_47 = arith.constant dense<0.000000e+00> : vector<16xf32>
    %134 = vector.multi_reduction <add>, %133, %cst_47 [1] : vector<16x32xf32> to vector<16xf32>
    %135 = vector.shape_cast %134 : vector<16xf32> to vector<16x1xf32>
    %cst_48 = arith.constant 3.200000e+01 : f32
    %136 = vector.broadcast %cst_48 : f32 to vector<16x1xf32>
    %137 = arith.divf %135, %136 : vector<16x1xf32>
    %138 = vector.broadcast %130 : vector<16x1xf32> to vector<16x32xf32>
    %139 = arith.subf %124, %138 : vector<16x32xf32>
    %cst_49 = arith.constant 9.99999974E-6 : f32
    %140 = vector.broadcast %cst_49 : f32 to vector<16x1xf32>
    %141 = arith.addf %137, %140 : vector<16x1xf32>
    %142 = math.rsqrt %141 : vector<16x1xf32>
    %143 = vector.broadcast %142 : vector<16x1xf32> to vector<16x32xf32>
    %144 = arith.mulf %139, %143 : vector<16x32xf32>
    %145 = vector.broadcast %125 : vector<1x32xf32> to vector<16x32xf32>
    %146 = arith.mulf %144, %145 : vector<16x32xf32>
    %147 = vector.broadcast %126 : vector<1x32xf32> to vector<16x32xf32>
    %148 = arith.addf %146, %147 : vector<16x32xf32>
    %149 = arith.addf %148, %3 : vector<16x32xf32>
    %150 = arith.truncf %149 : vector<16x32xf32> to vector<16x32xbf16>
    %c0_50 = arith.constant 0 : index
    %c0_51 = arith.constant 0 : index
    %151 = vector.load %arg7[%c0_50, %c0_51] : memref<32x32xbf16, #tpu.memory_space<vmem>>, vector<32x32xbf16>
    %cst_52 = arith.constant dense<0.000000e+00> : vector<16x32xf32>
    %152 = tpu.matmul %150, %151, %cst_52 {dimension_numbers = #tpu.dot_dimension_numbers<[1], [0], [0], [1], [0, 0, 1, 1], [], []>} : vector<16x32xbf16>, vector<32x32xbf16>, vector<16x32xf32> -> vector<16x32xf32>
    %153 = arith.addf %5, %7 : vector<32x32xf32>
    %154 = tpu.concatenate %153, %5 in 1 : vector<32x32xf32>, vector<32x32xf32> -> vector<32x64xf32>
    %155 = arith.truncf %154 : vector<32x64xf32> to vector<32x64xbf16>
    %c0_53 = arith.constant 0 : index
    %c0_54 = arith.constant 0 : index
    %156 = vector.load %arg8[%c0_53, %c0_54] : memref<64x64xbf16, #tpu.memory_space<vmem>>, vector<64x64xbf16>
    %cst_55 = arith.constant dense<0.000000e+00> : vector<32x64xf32>
    %157 = tpu.matmul %155, %156, %cst_55 {dimension_numbers = #tpu.dot_dimension_numbers<[1], [0], [0], [1], [0, 0, 1, 1], [], []>} : vector<32x64xbf16>, vector<64x64xbf16>, vector<32x64xf32> -> vector<32x64xf32>
    %158 = vector.extract_strided_slice %157 {offsets = [0, 0], sizes = [32, 32], strides = [1, 1]} : vector<32x64xf32> to vector<32x32xf32>
    %159 = vector.extract_strided_slice %157 {offsets = [0, 32], sizes = [32, 32], strides = [1, 1]} : vector<32x64xf32> to vector<32x32xf32>
    %c0_56 = arith.constant 0 : index
    %c0_57 = arith.constant 0 : index
    %160 = vector.load %arg9[%c0_56, %c0_57] : memref<32x32xbf16, #tpu.memory_space<vmem>>, vector<32x32xbf16>
    %161 = vector.shape_cast %152 : vector<16x32xf32> to vector<2x8x32xf32>
    %162 = vector.shape_cast %158 : vector<32x32xf32> to vector<2x16x32xf32>
    %163 = vector.shape_cast %159 : vector<32x32xf32> to vector<2x16x32xf32>
    %164 = vector.extract_strided_slice %161 {offsets = [0, 0, 0], sizes = [2, 8, 8], strides = [1, 1, 1]} : vector<2x8x32xf32> to vector<2x8x8xf32>
    %165 = arith.truncf %164 : vector<2x8x8xf32> to vector<2x8x8xbf16>
    %166 = vector.extract_strided_slice %162 {offsets = [0, 0, 0], sizes = [2, 16, 8], strides = [1, 1, 1]} : vector<2x16x32xf32> to vector<2x16x8xf32>
    %167 = arith.truncf %166 : vector<2x16x8xf32> to vector<2x16x8xbf16>
    %168 = vector.extract_strided_slice %163 {offsets = [0, 0, 0], sizes = [2, 16, 8], strides = [1, 1, 1]} : vector<2x16x32xf32> to vector<2x16x8xf32>
    %169 = arith.truncf %168 : vector<2x16x8xf32> to vector<2x16x8xbf16>
    "tpu.trace_start"() <{level = 10 : i32, message = "bqd,bkd->bqk"}> : () -> ()
    %cst_58 = arith.constant dense<0.000000e+00> : vector<2x8x16xf32>
    %170 = tpu.matmul %165, %167, %cst_58 {dimension_numbers = #tpu.dot_dimension_numbers<[2], [2], [1], [1], [0, 0, 0, 1, 1, 1], [0], [0]>} : vector<2x8x8xbf16>, vector<2x16x8xbf16>, vector<2x8x16xf32> -> vector<2x8x16xf32>
    "tpu.trace_stop"() : () -> ()
    %cst_59 = arith.constant dense<0xFF800000> : vector<2x8xf32>
    %171 = vector.multi_reduction <maximumf>, %170, %cst_59 [2] : vector<2x8x16xf32> to vector<2x8xf32>
    %172 = vector.shape_cast %171 : vector<2x8xf32> to vector<2x8x1xf32>
    %173 = vector.broadcast %172 : vector<2x8x1xf32> to vector<2x8x16xf32>
    %174 = arith.subf %170, %173 : vector<2x8x16xf32>
    %175 = math.exp %174 : vector<2x8x16xf32>
    %cst_60 = arith.constant dense<0.000000e+00> : vector<2x8xf32>
    %176 = vector.multi_reduction <add>, %175, %cst_60 [2] : vector<2x8x16xf32> to vector<2x8xf32>
    %177 = vector.shape_cast %176 : vector<2x8xf32> to vector<2x8x1xf32>
    %178 = tpu.reciprocal %177 {approx = true} : vector<2x8x1xf32> -> vector<2x8x1xf32>
    %179 = vector.broadcast %178 : vector<2x8x1xf32> to vector<2x8x16xf32>
    %180 = arith.mulf %175, %179 : vector<2x8x16xf32>
    %181 = arith.truncf %180 : vector<2x8x16xf32> to vector<2x8x16xbf16>
    "tpu.trace_start"() <{level = 10 : i32, message = "bqk,bkd->bqd"}> : () -> ()
    %cst_61 = arith.constant dense<0.000000e+00> : vector<2x8x8xf32>
    %182 = tpu.matmul %181, %169, %cst_61 {dimension_numbers = #tpu.dot_dimension_numbers<[2], [1], [1], [2], [0, 0, 0, 1, 1, 2], [0], [0]>} : vector<2x8x16xbf16>, vector<2x16x8xbf16>, vector<2x8x8xf32> -> vector<2x8x8xf32>
    "tpu.trace_stop"() : () -> ()
    %183 = vector.extract_strided_slice %161 {offsets = [0, 0, 8], sizes = [2, 8, 8], strides = [1, 1, 1]} : vector<2x8x32xf32> to vector<2x8x8xf32>
    %184 = arith.truncf %183 : vector<2x8x8xf32> to vector<2x8x8xbf16>
    %185 = vector.extract_strided_slice %162 {offsets = [0, 0, 8], sizes = [2, 16, 8], strides = [1, 1, 1]} : vector<2x16x32xf32> to vector<2x16x8xf32>
    %186 = arith.truncf %185 : vector<2x16x8xf32> to vector<2x16x8xbf16>
    %187 = vector.extract_strided_slice %163 {offsets = [0, 0, 8], sizes = [2, 16, 8], strides = [1, 1, 1]} : vector<2x16x32xf32> to vector<2x16x8xf32>
    %188 = arith.truncf %187 : vector<2x16x8xf32> to vector<2x16x8xbf16>
    "tpu.trace_start"() <{level = 10 : i32, message = "bqd,bkd->bqk"}> : () -> ()
    %cst_62 = arith.constant dense<0.000000e+00> : vector<2x8x16xf32>
    %189 = tpu.matmul %184, %186, %cst_62 {dimension_numbers = #tpu.dot_dimension_numbers<[2], [2], [1], [1], [0, 0, 0, 1, 1, 1], [0], [0]>} : vector<2x8x8xbf16>, vector<2x16x8xbf16>, vector<2x8x16xf32> -> vector<2x8x16xf32>
    "tpu.trace_stop"() : () -> ()
    %cst_63 = arith.constant dense<0xFF800000> : vector<2x8xf32>
    %190 = vector.multi_reduction <maximumf>, %189, %cst_63 [2] : vector<2x8x16xf32> to vector<2x8xf32>
    %191 = vector.shape_cast %190 : vector<2x8xf32> to vector<2x8x1xf32>
    %192 = vector.broadcast %191 : vector<2x8x1xf32> to vector<2x8x16xf32>
    %193 = arith.subf %189, %192 : vector<2x8x16xf32>
    %194 = math.exp %193 : vector<2x8x16xf32>
    %cst_64 = arith.constant dense<0.000000e+00> : vector<2x8xf32>
    %195 = vector.multi_reduction <add>, %194, %cst_64 [2] : vector<2x8x16xf32> to vector<2x8xf32>
    %196 = vector.shape_cast %195 : vector<2x8xf32> to vector<2x8x1xf32>
    %197 = tpu.reciprocal %196 {approx = true} : vector<2x8x1xf32> -> vector<2x8x1xf32>
    %198 = vector.broadcast %197 : vector<2x8x1xf32> to vector<2x8x16xf32>
    %199 = arith.mulf %194, %198 : vector<2x8x16xf32>
    %200 = arith.truncf %199 : vector<2x8x16xf32> to vector<2x8x16xbf16>
    "tpu.trace_start"() <{level = 10 : i32, message = "bqk,bkd->bqd"}> : () -> ()
    %cst_65 = arith.constant dense<0.000000e+00> : vector<2x8x8xf32>
    %201 = tpu.matmul %200, %188, %cst_65 {dimension_numbers = #tpu.dot_dimension_numbers<[2], [1], [1], [2], [0, 0, 0, 1, 1, 2], [0], [0]>} : vector<2x8x16xbf16>, vector<2x16x8xbf16>, vector<2x8x8xf32> -> vector<2x8x8xf32>
    "tpu.trace_stop"() : () -> ()
    %202 = vector.extract_strided_slice %161 {offsets = [0, 0, 16], sizes = [2, 8, 8], strides = [1, 1, 1]} : vector<2x8x32xf32> to vector<2x8x8xf32>
    %203 = arith.truncf %202 : vector<2x8x8xf32> to vector<2x8x8xbf16>
    %204 = vector.extract_strided_slice %162 {offsets = [0, 0, 16], sizes = [2, 16, 8], strides = [1, 1, 1]} : vector<2x16x32xf32> to vector<2x16x8xf32>
    %205 = arith.truncf %204 : vector<2x16x8xf32> to vector<2x16x8xbf16>
    %206 = vector.extract_strided_slice %163 {offsets = [0, 0, 16], sizes = [2, 16, 8], strides = [1, 1, 1]} : vector<2x16x32xf32> to vector<2x16x8xf32>
    %207 = arith.truncf %206 : vector<2x16x8xf32> to vector<2x16x8xbf16>
    "tpu.trace_start"() <{level = 10 : i32, message = "bqd,bkd->bqk"}> : () -> ()
    %cst_66 = arith.constant dense<0.000000e+00> : vector<2x8x16xf32>
    %208 = tpu.matmul %203, %205, %cst_66 {dimension_numbers = #tpu.dot_dimension_numbers<[2], [2], [1], [1], [0, 0, 0, 1, 1, 1], [0], [0]>} : vector<2x8x8xbf16>, vector<2x16x8xbf16>, vector<2x8x16xf32> -> vector<2x8x16xf32>
    "tpu.trace_stop"() : () -> ()
    %cst_67 = arith.constant dense<0xFF800000> : vector<2x8xf32>
    %209 = vector.multi_reduction <maximumf>, %208, %cst_67 [2] : vector<2x8x16xf32> to vector<2x8xf32>
    %210 = vector.shape_cast %209 : vector<2x8xf32> to vector<2x8x1xf32>
    %211 = vector.broadcast %210 : vector<2x8x1xf32> to vector<2x8x16xf32>
    %212 = arith.subf %208, %211 : vector<2x8x16xf32>
    %213 = math.exp %212 : vector<2x8x16xf32>
    %cst_68 = arith.constant dense<0.000000e+00> : vector<2x8xf32>
    %214 = vector.multi_reduction <add>, %213, %cst_68 [2] : vector<2x8x16xf32> to vector<2x8xf32>
    %215 = vector.shape_cast %214 : vector<2x8xf32> to vector<2x8x1xf32>
    %216 = tpu.reciprocal %215 {approx = true} : vector<2x8x1xf32> -> vector<2x8x1xf32>
    %217 = vector.broadcast %216 : vector<2x8x1xf32> to vector<2x8x16xf32>
    %218 = arith.mulf %213, %217 : vector<2x8x16xf32>
    %219 = arith.truncf %218 : vector<2x8x16xf32> to vector<2x8x16xbf16>
    "tpu.trace_start"() <{level = 10 : i32, message = "bqk,bkd->bqd"}> : () -> ()
    %cst_69 = arith.constant dense<0.000000e+00> : vector<2x8x8xf32>
    %220 = tpu.matmul %219, %207, %cst_69 {dimension_numbers = #tpu.dot_dimension_numbers<[2], [1], [1], [2], [0, 0, 0, 1, 1, 2], [0], [0]>} : vector<2x8x16xbf16>, vector<2x16x8xbf16>, vector<2x8x8xf32> -> vector<2x8x8xf32>
    "tpu.trace_stop"() : () -> ()
    %221 = vector.extract_strided_slice %161 {offsets = [0, 0, 24], sizes = [2, 8, 8], strides = [1, 1, 1]} : vector<2x8x32xf32> to vector<2x8x8xf32>
    %222 = arith.truncf %221 : vector<2x8x8xf32> to vector<2x8x8xbf16>
    %223 = vector.extract_strided_slice %162 {offsets = [0, 0, 24], sizes = [2, 16, 8], strides = [1, 1, 1]} : vector<2x16x32xf32> to vector<2x16x8xf32>
    %224 = arith.truncf %223 : vector<2x16x8xf32> to vector<2x16x8xbf16>
    %225 = vector.extract_strided_slice %163 {offsets = [0, 0, 24], sizes = [2, 16, 8], strides = [1, 1, 1]} : vector<2x16x32xf32> to vector<2x16x8xf32>
    %226 = arith.truncf %225 : vector<2x16x8xf32> to vector<2x16x8xbf16>
    "tpu.trace_start"() <{level = 10 : i32, message = "bqd,bkd->bqk"}> : () -> ()
    %cst_70 = arith.constant dense<0.000000e+00> : vector<2x8x16xf32>
    %227 = tpu.matmul %222, %224, %cst_70 {dimension_numbers = #tpu.dot_dimension_numbers<[2], [2], [1], [1], [0, 0, 0, 1, 1, 1], [0], [0]>} : vector<2x8x8xbf16>, vector<2x16x8xbf16>, vector<2x8x16xf32> -> vector<2x8x16xf32>
    "tpu.trace_stop"() : () -> ()
    %cst_71 = arith.constant dense<0xFF800000> : vector<2x8xf32>
    %228 = vector.multi_reduction <maximumf>, %227, %cst_71 [2] : vector<2x8x16xf32> to vector<2x8xf32>
    %229 = vector.shape_cast %228 : vector<2x8xf32> to vector<2x8x1xf32>
    %230 = vector.broadcast %229 : vector<2x8x1xf32> to vector<2x8x16xf32>
    %231 = arith.subf %227, %230 : vector<2x8x16xf32>
    %232 = math.exp %231 : vector<2x8x16xf32>
    %cst_72 = arith.constant dense<0.000000e+00> : vector<2x8xf32>
    %233 = vector.multi_reduction <add>, %232, %cst_72 [2] : vector<2x8x16xf32> to vector<2x8xf32>
    %234 = vector.shape_cast %233 : vector<2x8xf32> to vector<2x8x1xf32>
    %235 = tpu.reciprocal %234 {approx = true} : vector<2x8x1xf32> -> vector<2x8x1xf32>
    %236 = vector.broadcast %235 : vector<2x8x1xf32> to vector<2x8x16xf32>
    %237 = arith.mulf %232, %236 : vector<2x8x16xf32>
    %238 = arith.truncf %237 : vector<2x8x16xf32> to vector<2x8x16xbf16>
    "tpu.trace_start"() <{level = 10 : i32, message = "bqk,bkd->bqd"}> : () -> ()
    %cst_73 = arith.constant dense<0.000000e+00> : vector<2x8x8xf32>
    %239 = tpu.matmul %238, %226, %cst_73 {dimension_numbers = #tpu.dot_dimension_numbers<[2], [1], [1], [2], [0, 0, 0, 1, 1, 2], [0], [0]>} : vector<2x8x16xbf16>, vector<2x16x8xbf16>, vector<2x8x8xf32> -> vector<2x8x8xf32>
    "tpu.trace_stop"() : () -> ()
    %240 = tpu.concatenate %182, %201, %220, %239 in 2 : vector<2x8x8xf32>, vector<2x8x8xf32>, vector<2x8x8xf32>, vector<2x8x8xf32> -> vector<2x8x32xf32>
    %241 = vector.shape_cast %240 : vector<2x8x32xf32> to vector<16x32xf32>
    %242 = arith.truncf %241 : vector<16x32xf32> to vector<16x32xbf16>
    %cst_74 = arith.constant dense<0.000000e+00> : vector<16x32xf32>
    %243 = tpu.matmul %242, %160, %cst_74 {dimension_numbers = #tpu.dot_dimension_numbers<[1], [0], [0], [1], [0, 0, 1, 1], [], []>} : vector<16x32xbf16>, vector<32x32xbf16>, vector<16x32xf32> -> vector<16x32xf32>
    %244 = arith.addf %124, %243 : vector<16x32xf32>
    %c0_75 = arith.constant 0 : index
    %c0_76 = arith.constant 0 : index
    %245 = vector.load %arg18[%c0_75, %c0_76] : memref<1x32xf32, #tpu.memory_space<vmem>>, vector<1x32xf32>
    %c0_77 = arith.constant 0 : index
    %c0_78 = arith.constant 0 : index
    %246 = vector.load %arg19[%c0_77, %c0_78] : memref<1x32xf32, #tpu.memory_space<vmem>>, vector<1x32xf32>
    %cst_79 = arith.constant dense<0.000000e+00> : vector<16xf32>
    %247 = vector.multi_reduction <add>, %244, %cst_79 [1] : vector<16x32xf32> to vector<16xf32>
    %248 = vector.shape_cast %247 : vector<16xf32> to vector<16x1xf32>
    %cst_80 = arith.constant 3.200000e+01 : f32
    %249 = vector.broadcast %cst_80 : f32 to vector<16x1xf32>
    %250 = arith.divf %248, %249 : vector<16x1xf32>
    %251 = vector.broadcast %250 : vector<16x1xf32> to vector<16x32xf32>
    %252 = arith.subf %244, %251 : vector<16x32xf32>
    %253 = arith.mulf %252, %252 : vector<16x32xf32>
    %cst_81 = arith.constant dense<0.000000e+00> : vector<16xf32>
    %254 = vector.multi_reduction <add>, %253, %cst_81 [1] : vector<16x32xf32> to vector<16xf32>
    %255 = vector.shape_cast %254 : vector<16xf32> to vector<16x1xf32>
    %cst_82 = arith.constant 3.200000e+01 : f32
    %256 = vector.broadcast %cst_82 : f32 to vector<16x1xf32>
    %257 = arith.divf %255, %256 : vector<16x1xf32>
    %258 = vector.broadcast %250 : vector<16x1xf32> to vector<16x32xf32>
    %259 = arith.subf %244, %258 : vector<16x32xf32>
    %cst_83 = arith.constant 9.99999974E-6 : f32
    %260 = vector.broadcast %cst_83 : f32 to vector<16x1xf32>
    %261 = arith.addf %257, %260 : vector<16x1xf32>
    %262 = math.rsqrt %261 : vector<16x1xf32>
    %263 = vector.broadcast %262 : vector<16x1xf32> to vector<16x32xf32>
    %264 = arith.mulf %259, %263 : vector<16x32xf32>
    %265 = vector.broadcast %245 : vector<1x32xf32> to vector<16x32xf32>
    %266 = arith.mulf %264, %265 : vector<16x32xf32>
    %267 = vector.broadcast %246 : vector<1x32xf32> to vector<16x32xf32>
    %268 = arith.addf %266, %267 : vector<16x32xf32>
    %269 = arith.truncf %268 : vector<16x32xf32> to vector<16x32xbf16>
    %c0_84 = arith.constant 0 : index
    %c0_85 = arith.constant 0 : index
    %270 = vector.load %arg10[%c0_84, %c0_85] : memref<32x64xbf16, #tpu.memory_space<vmem>>, vector<32x64xbf16>
    %cst_86 = arith.constant dense<0.000000e+00> : vector<16x64xf32>
    %271 = tpu.matmul %269, %270, %cst_86 {dimension_numbers = #tpu.dot_dimension_numbers<[1], [0], [0], [1], [0, 0, 1, 1], [], []>} : vector<16x32xbf16>, vector<32x64xbf16>, vector<16x64xf32> -> vector<16x64xf32>
    %c0_87 = arith.constant 0 : index
    %c0_88 = arith.constant 0 : index
    %272 = vector.load %arg11[%c0_87, %c0_88] : memref<1x64xf32, #tpu.memory_space<vmem>>, vector<1x64xf32>
    %273 = vector.broadcast %272 : vector<1x64xf32> to vector<16x64xf32>
    %274 = arith.addf %271, %273 : vector<16x64xf32>
    %cst_89 = arith.constant 0.000000e+00 : f32
    %275 = vector.broadcast %cst_89 : f32 to vector<16x64xf32>
    %276 = arith.maximumf %274, %275 : vector<16x64xf32>
    %277 = arith.truncf %276 : vector<16x64xf32> to vector<16x64xbf16>
    %c0_90 = arith.constant 0 : index
    %c0_91 = arith.constant 0 : index
    %278 = vector.load %arg12[%c0_90, %c0_91] : memref<64x32xbf16, #tpu.memory_space<vmem>>, vector<64x32xbf16>
    %cst_92 = arith.constant dense<0.000000e+00> : vector<16x32xf32>
    %279 = tpu.matmul %277, %278, %cst_92 {dimension_numbers = #tpu.dot_dimension_numbers<[1], [0], [0], [1], [0, 0, 1, 1], [], []>} : vector<16x64xbf16>, vector<64x32xbf16>, vector<16x32xf32> -> vector<16x32xf32>
    %c0_93 = arith.constant 0 : index
    %c0_94 = arith.constant 0 : index
    %280 = vector.load %arg13[%c0_93, %c0_94] : memref<1x32xf32, #tpu.memory_space<vmem>>, vector<1x32xf32>
    %281 = vector.broadcast %280 : vector<1x32xf32> to vector<16x32xf32>
    %282 = arith.addf %279, %281 : vector<16x32xf32>
    %283 = arith.addf %244, %282 : vector<16x32xf32>
    %284 = vector.shape_cast %283 : vector<16x32xf32> to vector<2x8x32xf32>
    %c0_95 = arith.constant 0 : index
    %c0_96 = arith.constant 0 : index
    %c0_97 = arith.constant 0 : index
    %285 = vector.load %arg20[%c0_95, %c0_96, %c0_97] : memref<2x8x32xf32, #tpu.memory_space<vmem>>, vector<2x8x32xf32>
    tpu.vector_store %arg20[%c0_95, %c0_96, %c0_97], %284 {strides = array<i32>} : memref<2x8x32xf32, #tpu.memory_space<vmem>>, vector<2x8x32xf32>,
    return
  }
  func.func @transform_0(%arg0: i32) -> (i32, i32, i32) {
    %c0_i32 = arith.constant 0 : i32
    %c0_i32_0 = arith.constant 0 : i32
    %c0_i32_1 = arith.constant 0 : i32
    return %arg0, %c0_i32, %c0_i32_0 : i32, i32, i32
  }
  func.func @transform_1(%arg0: i32) -> (i32, i32, i32) {
    %c0_i32 = arith.constant 0 : i32
    %c0_i32_0 = arith.constant 0 : i32
    %c0_i32_1 = arith.constant 0 : i32
    return %arg0, %c0_i32, %c0_i32_0 : i32, i32, i32
  }
  func.func @transform_2(%arg0: i32) -> (i32, i32, i32) {
    %c0_i32 = arith.constant 0 : i32
    %c0_i32_0 = arith.constant 0 : i32
    %c0_i32_1 = arith.constant 0 : i32
    return %arg0, %c0_i32, %c0_i32_0 : i32, i32, i32
  }
  func.func @transform_3(%arg0: i32) -> (i32, i32, i32) {
    %c0_i32 = arith.constant 0 : i32
    %c0_i32_0 = arith.constant 0 : i32
    %c0_i32_1 = arith.constant 0 : i32
    return %arg0, %c0_i32, %c0_i32_0 : i32, i32, i32
  }
  func.func @transform_4(%arg0: i32) -> (i32, i32) {
    %c0_i32 = arith.constant 0 : i32
    %c0_i32_0 = arith.constant 0 : i32
    %c0_i32_1 = arith.constant 0 : i32
    return %c0_i32, %c0_i32_0 : i32, i32
  }
  func.func @transform_5(%arg0: i32) -> (i32, i32) {
    %c0_i32 = arith.constant 0 : i32
    %c0_i32_0 = arith.constant 0 : i32
    %c0_i32_1 = arith.constant 0 : i32
    return %c0_i32, %c0_i32_0 : i32, i32
  }
  func.func @transform_6(%arg0: i32) -> (i32, i32) {
    %c0_i32 = arith.constant 0 : i32
    %c0_i32_0 = arith.constant 0 : i32
    %c0_i32_1 = arith.constant 0 : i32
    return %c0_i32, %c0_i32_0 : i32, i32
  }
  func.func @transform_7(%arg0: i32) -> (i32, i32) {
    %c0_i32 = arith.constant 0 : i32
    %c0_i32_0 = arith.constant 0 : i32
    %c0_i32_1 = arith.constant 0 : i32
    return %c0_i32, %c0_i32_0 : i32, i32
  }
  func.func @transform_8(%arg0: i32) -> (i32, i32) {
    %c0_i32 = arith.constant 0 : i32
    %c0_i32_0 = arith.constant 0 : i32
    %c0_i32_1 = arith.constant 0 : i32
    return %c0_i32, %c0_i32_0 : i32, i32
  }
  func.func @transform_9(%arg0: i32) -> (i32, i32) {
    %c0_i32 = arith.constant 0 : i32
    %c0_i32_0 = arith.constant 0 : i32
    %c0_i32_1 = arith.constant 0 : i32
    return %c0_i32, %c0_i32_0 : i32, i32
  }
  func.func @transform_10(%arg0: i32) -> (i32, i32) {
    %c0_i32 = arith.constant 0 : i32
    %c0_i32_0 = arith.constant 0 : i32
    %c0_i32_1 = arith.constant 0 : i32
    return %c0_i32, %c0_i32_0 : i32, i32
  }
  func.func @transform_11(%arg0: i32) -> (i32, i32) {
    %c0_i32 = arith.constant 0 : i32
    %c0_i32_0 = arith.constant 0 : i32
    %c0_i32_1 = arith.constant 0 : i32
    return %c0_i32, %c0_i32_0 : i32, i32
  }
  func.func @transform_12(%arg0: i32) -> (i32, i32) {
    %c0_i32 = arith.constant 0 : i32
    %c0_i32_0 = arith.constant 0 : i32
    %c0_i32_1 = arith.constant 0 : i32
    return %c0_i32, %c0_i32_0 : i32, i32
  }
  func.func @transform_13(%arg0: i32) -> (i32, i32) {
    %c0_i32 = arith.constant 0 : i32
    %c0_i32_0 = arith.constant 0 : i32
    %c0_i32_1 = arith.constant 0 : i32
    return %c0_i32, %c0_i32_0 : i32, i32
  }
  func.func @transform_14(%arg0: i32) -> (i32, i32) {
    %c0_i32 = arith.constant 0 : i32
    %c0_i32_0 = arith.constant 0 : i32
    %c0_i32_1 = arith.constant 0 : i32
    return %c0_i32, %c0_i32_0 : i32, i32
  }
  func.func @transform_15(%arg0: i32) -> (i32, i32) {
    %c0_i32 = arith.constant 0 : i32
    %c0_i32_0 = arith.constant 0 : i32
    %c0_i32_1 = arith.constant 0 : i32
    return %c0_i32, %c0_i32_0 : i32, i32
  }
  func.func @transform_16(%arg0: i32) -> (i32, i32) {
    %c0_i32 = arith.constant 0 : i32
    %c0_i32_0 = arith.constant 0 : i32
    %c0_i32_1 = arith.constant 0 : i32
    return %c0_i32, %c0_i32_0 : i32, i32
  }
  func.func @transform_17(%arg0: i32) -> (i32, i32) {
    %c0_i32 = arith.constant 0 : i32
    %c0_i32_0 = arith.constant 0 : i32
    %c0_i32_1 = arith.constant 0 : i32
    return %c0_i32, %c0_i32_0 : i32, i32
  }
  func.func @transform_18(%arg0: i32) -> (i32, i32) {
    %c0_i32 = arith.constant 0 : i32
    %c0_i32_0 = arith.constant 0 : i32
    %c0_i32_1 = arith.constant 0 : i32
    return %c0_i32, %c0_i32_0 : i32, i32
  }
  func.func @transform_19(%arg0: i32) -> (i32, i32, i32) {
    %c0_i32 = arith.constant 0 : i32
    %c0_i32_0 = arith.constant 0 : i32
    %c0_i32_1 = arith.constant 0 : i32
    return %arg0, %c0_i32, %c0_i32_0 : i32, i32, i32
  }
}

</mosaic_0001>

<llo_original>
// kernel: tpu_custom_call.1
$region0: #{tpu_custom_call.1}
  #allocation0 [shape = 'u32[]', space=smem, size = 0x4, offset = 0x4, fixed_abs, tag = 'smem constant byte address 0x4 - core index']
  #allocation1 [shape = 'u32[144,128]{1,0:T(1,128)}', space=vmem, size = 0x12000, scoped, tag = 'internal scratch']
  %s0 = inlined_call_operand.hbm [shape: f32[2,8,32], index: 0, kind: input, shape index: {}]
  %s1 = inlined_call_operand.vmem [shape: f32[2,16,32], index: 1, kind: input, shape index: {}]
  %s2 = inlined_call_operand.hbm [shape: f32[2,8,32], index: 2, kind: input, shape index: {}]
  %s3 = inlined_call_operand.hbm [shape: f32[2,16,32], index: 3, kind: input, shape index: {}]
  %s4 = inlined_call_operand.hbm [shape: bf16[64,96], index: 4, kind: input, shape index: {}]
  %s5 = inlined_call_operand.hbm [shape: bf16[32,32], index: 5, kind: input, shape index: {}]
  %s6 = inlined_call_operand.hbm [shape: bf16[32,32], index: 6, kind: input, shape index: {}]
  %s7 = inlined_call_operand.vmem [shape: bf16[64,64], index: 7, kind: input, shape index: {}]
  %s8 = inlined_call_operand.hbm [shape: bf16[32,32], index: 8, kind: input, shape index: {}]
  %s9 = inlined_call_operand.hbm [shape: bf16[32,64], index: 9, kind: input, shape index: {}]
  %s10 = inlined_call_operand.vmem [shape: f32[1,64], index: 10, kind: input, shape index: {}]
  %s11 = inlined_call_operand.vmem [shape: bf16[64,32], index: 11, kind: input, shape index: {}]
  %s12 = inlined_call_operand.vmem [shape: f32[1,32], index: 12, kind: input, shape index: {}]
  %s13 = inlined_call_operand.vmem [shape: f32[1,32], index: 13, kind: input, shape index: {}]
  %s14 = inlined_call_operand.vmem [shape: f32[1,32], index: 14, kind: input, shape index: {}]
  %s15 = inlined_call_operand.vmem [shape: f32[1,32], index: 15, kind: input, shape index: {}]
  %s16 = inlined_call_operand.vmem [shape: f32[1,32], index: 16, kind: input, shape index: {}]
  %s17 = inlined_call_operand.vmem [shape: f32[1,32], index: 17, kind: input, shape index: {}]
  %s18 = inlined_call_operand.vmem [shape: f32[1,32], index: 18, kind: input, shape index: {}]
  %s19 = inlined_call_operand.hbm [shape: f32[2,8,32], index: 19, kind: output, shape index: {}]
  %s20 = sld [smem:[#allocation0]]
  $region118: #{tpu_custom_call.1} parent=0
    _
  %s22 = ssub.s32 1, %s20
  %s23 = scalar_select 0, %s22, %s20
  $region1: #{tpu_custom_call.1} parent=0
    #allocation2 [shape = 'u8[8192]{0}', space=vmem, size = 0x2000, scoped, tag = 'input window, operand 0, single buffered']
    #allocation3 [shape = 's32[1]{0}', space=sflag, size = 0x4, scoped, tag = 'scoped memory for tpu_custom_call.1']
    #allocation4 [shape = 's32[1]{0}', space=sflag, size = 0x4, scoped, tag = 'scoped memory for tpu_custom_call.1']
    #allocation5 [shape = 'u8[8192]{0}', space=vmem, size = 0x2000, scoped, tag = 'input window, operand 2, single buffered']
    #allocation6 [shape = 's32[1]{0}', space=sflag, size = 0x4, scoped, tag = 'scoped memory for tpu_custom_call.1']
    #allocation7 [shape = 'u8[16384]{0}', space=vmem, size = 0x4000, scoped, tag = 'input window, operand 3, single buffered']
    #allocation8 [shape = 'u8[16384]{0}', space=vmem, size = 0x4000, scoped, tag = 'input window, operand 4, single buffered']
    #allocation9 [shape = 's32[1]{0}', space=sflag, size = 0x4, scoped, tag = 'scoped memory for tpu_custom_call.1']
    #allocation10 [shape = 'u8[8192]{0}', space=vmem, size = 0x2000, scoped, tag = 'input window, operand 5, single buffered']
    #allocation11 [shape = 'u8[8192]{0}', space=vmem, size = 0x2000, scoped, tag = 'input window, operand 6, single buffered']
    #allocation12 [shape = 's32[1]{0}', space=sflag, size = 0x4, scoped, tag = 'scoped memory for tpu_custom_call.1']
    #allocation13 [shape = 'u8[8192]{0}', space=vmem, size = 0x2000, scoped, tag = 'input window, operand 8, single buffered']
    #allocation14 [shape = 'u8[8192]{0}', space=vmem, size = 0x2000, scoped, tag = 'input window, operand 9, single buffered']
    #allocation15 [shape = 's32[1]{0}', space=sflag, size = 0x4, scoped, tag = 'scoped memory for tpu_custom_call.1']
    #allocation16 [shape = 'u8[8192]{0}', space=vmem, size = 0x2000, scoped, tag = 'output window, operand 0, single buffered']
    %24 = vsyncpa [#allocation3], 0
    %25 = vsyncpa [#allocation6], 0
    %26 = vsyncpa [#allocation9], 0
    %27 = vsyncpa [#allocation12], 0
    %28 = vsyncpa [#allocation15], 0
    %29 = vsyncpa [#allocation4], 0
    // Predicated region
    $region2: #{tpu_custom_call.1} parent=1 // pred_check
      _
    $region3: #{tpu_custom_call.1} parent=1 // pred_check_branch
      %31 = sbr.rel (0) target = $region5
    $region4: #{tpu_custom_call.1} parent=1 // pred_region
      %s33 = ssub.s32 256, 256
      %34 = vsyncadd [#allocation3], %s33
      %s35 = sshll.u32 [#allocation2], 4
      %s36 = int_to_ptr.vmem [resolvable:$true] %s35
      %41 = dma.hbm_to_vmem [thread:$0]  %s0, 256, %s36, [#allocation3], 128, 128, 8
    $region5: #{tpu_custom_call.1} parent=1 // pred_fallthru
      _
    // Predicated region
    $region6: #{tpu_custom_call.1} parent=1 // pred_check
      _
    $region7: #{tpu_custom_call.1} parent=1 // pred_check_branch
      %43 = sbr.rel (0) target = $region9
    $region8: #{tpu_custom_call.1} parent=1 // pred_region
      _
    $region9: #{tpu_custom_call.1} parent=1 // pred_fallthru
      _
    // Predicated region
    $region10: #{tpu_custom_call.1} parent=1 // pred_check
      _
    $region11: #{tpu_custom_call.1} parent=1 // pred_check_branch
      %45 = sbr.rel (0) target = $region13
    $region12: #{tpu_custom_call.1} parent=1 // pred_region
      %s47 = ssub.s32 256, 256
      %48 = vsyncadd [#allocation6], %s47
      %s49 = sshll.u32 [#allocation5], 4
      %s50 = int_to_ptr.vmem [resolvable:$true] %s49
      %55 = dma.hbm_to_vmem [thread:$0]  %s2, 256, %s50, [#allocation6], 128, 128, 8
    $region13: #{tpu_custom_call.1} parent=1 // pred_fallthru
      _
    // Predicated region
    $region14: #{tpu_custom_call.1} parent=1 // pred_check
      _
    $region15: #{tpu_custom_call.1} parent=1 // pred_check_branch
      %57 = sbr.rel (0) target = $region17
    $region16: #{tpu_custom_call.1} parent=1 // pred_region
      %s59 = ssub.s32 512, 512
      %60 = vsyncadd [#allocation6], %s59
      %s61 = sshll.u32 [#allocation7], 4
      %s62 = int_to_ptr.vmem [resolvable:$true] %s61
      %67 = dma.hbm_to_vmem [thread:$0]  %s3, 512, %s62, [#allocation6], 128, 128, 8
    $region17: #{tpu_custom_call.1} parent=1 // pred_fallthru
      _
    // Predicated region
    $region18: #{tpu_custom_call.1} parent=1 // pred_check
      _
    $region19: #{tpu_custom_call.1} parent=1 // pred_check_branch
      %69 = sbr.rel (0) target = $region21
    $region20: #{tpu_custom_call.1} parent=1 // pred_region
      %s71 = ssub.s32 512, 512
      %72 = vsyncadd [#allocation9], %s71
      %s73 = sshll.u32 [#allocation8], 4
      %s74 = int_to_ptr.vmem [resolvable:$true] %s73
      %79 = dma.hbm_to_vmem [thread:$0]  %s4, 512, %s74, [#allocation9], 64, 64, 4
    $region21: #{tpu_custom_call.1} parent=1 // pred_fallthru
      _
    // Predicated region
    $region22: #{tpu_custom_call.1} parent=1 // pred_check
      _
    $region23: #{tpu_custom_call.1} parent=1 // pred_check_branch
      %81 = sbr.rel (0) target = $region25
    $region24: #{tpu_custom_call.1} parent=1 // pred_region
      %s83 = ssub.s32 256, 256
      %84 = vsyncadd [#allocation9], %s83
      %s85 = sshll.u32 [#allocation10], 4
      %s86 = int_to_ptr.vmem [resolvable:$true] %s85
      %91 = dma.hbm_to_vmem [thread:$0]  %s5, 256, %s86, [#allocation9], 64, 64, 4
    $region25: #{tpu_custom_call.1} parent=1 // pred_fallthru
      _
    // Predicated region
    $region26: #{tpu_custom_call.1} parent=1 // pred_check
      _
    $region27: #{tpu_custom_call.1} parent=1 // pred_check_branch
      %93 = sbr.rel (0) target = $region29
    $region28: #{tpu_custom_call.1} parent=1 // pred_region
      %s95 = ssub.s32 256, 256
      %96 = vsyncadd [#allocation12], %s95
      %s97 = sshll.u32 [#allocation11], 4
      %s98 = int_to_ptr.vmem [resolvable:$true] %s97
      %103 = dma.hbm_to_vmem [thread:$0]  %s6, 256, %s98, [#allocation12], 64, 64, 4
    $region29: #{tpu_custom_call.1} parent=1 // pred_fallthru
      _
    // Predicated region
    $region30: #{tpu_custom_call.1} parent=1 // pred_check
      _
    $region31: #{tpu_custom_call.1} parent=1 // pred_check_branch
      %105 = sbr.rel (0) target = $region33
    $region32: #{tpu_custom_call.1} parent=1 // pred_region
      _
    $region33: #{tpu_custom_call.1} parent=1 // pred_fallthru
      _
    // Predicated region
    $region34: #{tpu_custom_call.1} parent=1 // pred_check
      _
    $region35: #{tpu_custom_call.1} parent=1 // pred_check_branch
      %107 = sbr.rel (0) target = $region37
    $region36: #{tpu_custom_call.1} parent=1 // pred_region
      %s109 = ssub.s32 256, 256
      %110 = vsyncadd [#allocation12], %s109
      %s111 = sshll.u32 [#allocation13], 4
      %s112 = int_to_ptr.vmem [resolvable:$true] %s111
      %117 = dma.hbm_to_vmem [thread:$0]  %s8, 256, %s112, [#allocation12], 64, 64, 4
    $region37: #{tpu_custom_call.1} parent=1 // pred_fallthru
      _
    // Predicated region
    $region38: #{tpu_custom_call.1} parent=1 // pred_check
      _
    $region39: #{tpu_custom_call.1} parent=1 // pred_check_branch
      %119 = sbr.rel (0) target = $region41
    $region40: #{tpu_custom_call.1} parent=1 // pred_region
      %s121 = ssub.s32 256, 256
      %122 = vsyncadd [#allocation15], %s121
      %s123 = sshll.u32 [#allocation14], 4
      %s124 = int_to_ptr.vmem [resolvable:$true] %s123
      %129 = dma.hbm_to_vmem [thread:$0]  %s9, 256, %s124, [#allocation15], 64, 64, 4
    $region41: #{tpu_custom_call.1} parent=1 // pred_fallthru
      _
    // Predicated region
    $region42: #{tpu_custom_call.1} parent=1 // pred_check
      _
    $region43: #{tpu_custom_call.1} parent=1 // pred_check_branch
      %131 = sbr.rel (0) target = $region45
    $region44: #{tpu_custom_call.1} parent=1 // pred_region
      _
    $region45: #{tpu_custom_call.1} parent=1 // pred_fallthru
      _
    // Predicated region
    $region46: #{tpu_custom_call.1} parent=1 // pred_check
      _
    $region47: #{tpu_custom_call.1} parent=1 // pred_check_branch
      %133 = sbr.rel (0) target = $region49
    $region48: #{tpu_custom_call.1} parent=1 // pred_region
      _
    $region49: #{tpu_custom_call.1} parent=1 // pred_fallthru
      _
    // Predicated region
    $region50: #{tpu_custom_call.1} parent=1 // pred_check
      _
    $region51: #{tpu_custom_call.1} parent=1 // pred_check_branch
      %135 = sbr.rel (0) target = $region53
    $region52: #{tpu_custom_call.1} parent=1 // pred_region
      _
    $region53: #{tpu_custom_call.1} parent=1 // pred_fallthru
      _
    // Predicated region
    $region54: #{tpu_custom_call.1} parent=1 // pred_check
      _
    $region55: #{tpu_custom_call.1} parent=1 // pred_check_branch
      %137 = sbr.rel (0) target = $region57
    $region56: #{tpu_custom_call.1} parent=1 // pred_region
      _
    $region57: #{tpu_custom_call.1} parent=1 // pred_fallthru
      _
    // Predicated region
    $region58: #{tpu_custom_call.1} parent=1 // pred_check
      _
    $region59: #{tpu_custom_call.1} parent=1 // pred_check_branch
      %139 = sbr.rel (0) target = $region61
    $region60: #{tpu_custom_call.1} parent=1 // pred_region
      _
    $region61: #{tpu_custom_call.1} parent=1 // pred_fallthru
      _
    // Predicated region
    $region62: #{tpu_custom_call.1} parent=1 // pred_check
      _
    $region63: #{tpu_custom_call.1} parent=1 // pred_check_branch
      %141 = sbr.rel (0) target = $region65
    $region64: #{tpu_custom_call.1} parent=1 // pred_region
      _
    $region65: #{tpu_custom_call.1} parent=1 // pred_fallthru
      _
    // Predicated region
    $region66: #{tpu_custom_call.1} parent=1 // pred_check
      _
    $region67: #{tpu_custom_call.1} parent=1 // pred_check_branch
      %143 = sbr.rel (0) target = $region69
    $region68: #{tpu_custom_call.1} parent=1 // pred_region
      _
    $region69: #{tpu_custom_call.1} parent=1 // pred_fallthru
      _
    // Predicated region
    $region70: #{tpu_custom_call.1} parent=1 // pred_check
      _
    $region71: #{tpu_custom_call.1} parent=1 // pred_check_branch
      %145 = sbr.rel (0) target = $region73
    $region72: #{tpu_custom_call.1} parent=1 // pred_region
      _
    $region73: #{tpu_custom_call.1} parent=1 // pred_fallthru
      _
    // Predicated region
    $region74: #{tpu_custom_call.1} parent=1 // pred_check
      _
    $region75: #{tpu_custom_call.1} parent=1 // pred_check_branch
      %147 = sbr.rel (0) target = $region77
    $region76: #{tpu_custom_call.1} parent=1 // pred_region
      _
    $region77: #{tpu_custom_call.1} parent=1 // pred_fallthru
      _
    // Predicated region
    $region78: #{tpu_custom_call.1} parent=1 // pred_check
      _
    $region79: #{tpu_custom_call.1} parent=1 // pred_check_branch
      %149 = sbr.rel (0) target = $region81
    $region80: #{tpu_custom_call.1} parent=1 // pred_region
      %150 = dma.done [#allocation3], 256
    $region81: #{tpu_custom_call.1} parent=1 // pred_fallthru
      _
    // Predicated region
    $region82: #{tpu_custom_call.1} parent=1 // pred_check
      _
    $region83: #{tpu_custom_call.1} parent=1 // pred_check_branch
      %152 = sbr.rel (0) target = $region85
    $region84: #{tpu_custom_call.1} parent=1 // pred_region
      %153 = dma.done [#allocation6], 256
    $region85: #{tpu_custom_call.1} parent=1 // pred_fallthru
      _
    // Predicated region
    $region86: #{tpu_custom_call.1} parent=1 // pred_check
      _
    $region87: #{tpu_custom_call.1} parent=1 // pred_check_branch
      %155 = sbr.rel (0) target = $region89
    $region88: #{tpu_custom_call.1} parent=1 // pred_region
      %156 = dma.done [#allocation6], 512
    $region89: #{tpu_custom_call.1} parent=1 // pred_fallthru
      _
    // Predicated region
    $region90: #{tpu_custom_call.1} parent=1 // pred_check
      _
    $region91: #{tpu_custom_call.1} parent=1 // pred_check_branch
      %158 = sbr.rel (0) target = $region93
    $region92: #{tpu_custom_call.1} parent=1 // pred_region
      %159 = dma.done [#allocation9], 512
    $region93: #{tpu_custom_call.1} parent=1 // pred_fallthru
      _
    // Predicated region
    $region94: #{tpu_custom_call.1} parent=1 // pred_check
      _
    $region95: #{tpu_custom_call.1} parent=1 // pred_check_branch
      %161 = sbr.rel (0) target = $region97
    $region96: #{tpu_custom_call.1} parent=1 // pred_region
      %162 = dma.done [#allocation9], 256
    $region97: #{tpu_custom_call.1} parent=1 // pred_fallthru
      _
    // Predicated region
    $region98: #{tpu_custom_call.1} parent=1 // pred_check
      _
    $region99: #{tpu_custom_call.1} parent=1 // pred_check_branch
      %164 = sbr.rel (0) target = $region101
    $region100: #{tpu_custom_call.1} parent=1 // pred_region
      %165 = dma.done [#allocation12], 256
    $region101: #{tpu_custom_call.1} parent=1 // pred_fallthru
      _
    // Predicated region
    $region102: #{tpu_custom_call.1} parent=1 // pred_check
      _
    $region103: #{tpu_custom_call.1} parent=1 // pred_check_branch
      %167 = sbr.rel (0) target = $region105
    $region104: #{tpu_custom_call.1} parent=1 // pred_region
      %168 = dma.done [#allocation12], 256
    $region105: #{tpu_custom_call.1} parent=1 // pred_fallthru
      _
    // Predicated region
    $region106: #{tpu_custom_call.1} parent=1 // pred_check
      _
    $region107: #{tpu_custom_call.1} parent=1 // pred_check_branch
      %170 = sbr.rel (0) target = $region109
    $region108: #{tpu_custom_call.1} parent=1 // pred_region
      %171 = dma.done [#allocation15], 256
    $region109: #{tpu_custom_call.1} parent=1 // pred_fallthru
      _
    %v173 = vld [vmem:[#allocation2] sm:$0xff]
    %v174 = vld [vmem:[#allocation2 + $0x8] sm:$0xff]
    %v175 = vld [vmem:[#allocation5] sm:$0xff]
    %v176 = vld [vmem:[#allocation5 + $0x8] sm:$0xff]
    %v177 = vld [vmem:[%s1] sm:$0xff]
    %v178 = vld [vmem:[%s1 + $0x8] sm:$0xff]
    %v179 = vld [vmem:[%s1 + $0x10] sm:$0xff]
    %v180 = vld [vmem:[%s1 + $0x18] sm:$0xff]
    %v181 = vld [vmem:[#allocation7] sm:$0xff]
    %v182 = vld [vmem:[#allocation7 + $0x8] sm:$0xff]
    %v183 = vld [vmem:[#allocation7 + $0x10] sm:$0xff]
    %v184 = vld [vmem:[#allocation7 + $0x18] sm:$0xff]
    %v185 = vld [vmem:[%s13] sm:$0x1]
    %v186 = vld [vmem:[%s14] sm:$0x1]
    %vm187 = vcmask 261120
    %v188 = vsel %vm187, %v173, 0.0
    %189 = vadd.xlane.f32.xlu0 %v188
    %v190 = vpop.xlane.xlu0 %189
    %v191 = vsel %vm187, %v174, 0.0
    %192 = vadd.xlane.f32.xlu0 %v191
    %v193 = vpop.xlane.xlu0 %192
    %v194 = vrcp.pop 32.0
    %v195 = vmul.f32 %v190, %v194
    %v196 = vmul.f32 %v193, %v194
    %v197 = vsub.f32 %v173, %v195
    %v198 = vsub.f32 %v174, %v196
    %v199 = vmul.f32 %v197, %v197
    %v200 = vmul.f32 %v198, %v198
    %v201 = vsel %vm187, %v199, 0.0
    %202 = vadd.xlane.f32.xlu0 %v201
    %v203 = vpop.xlane.xlu0 %202
    %v204 = vsel %vm187, %v200, 0.0
    %205 = vadd.xlane.f32.xlu0 %v204
    %v206 = vpop.xlane.xlu0 %205
    %v207 = vmul.f32 %v203, %v194
    %v208 = vmul.f32 %v206, %v194
    %v209 = vadd.f32 %v207, 1e-05
    %v210 = vadd.f32 %v208, 1e-05
    %v211 = vrsqrt.pop %v209
    %v212 = vrsqrt.pop %v210
    %v213 = vmul.f32 %v197, %v211
    %v214 = vmul.f32 %v198, %v212
    %v216 = vlaneseq
    %v217 = vshrl.u32 %v216, 7
    %v218 = vsub.s32 0, %v217
    %v219 = vrot.slane %v185, %v218
    %v221 = vmul.f32 %v213, %v219
    %v222 = vmul.f32 %v214, %v219
    %v224 = vlaneseq
    %v225 = vshrl.u32 %v224, 7
    %v226 = vsub.s32 0, %v225
    %v227 = vrot.slane %v186, %v226
    %v229 = vadd.f32 %v221, %v227
    %v230 = vadd.f32 %v222, %v227
    %v231 = vadd.f32 %v229, %v175
    %v232 = vadd.f32 %v230, %v176
    %235 = vrot.lane.b32.xlu0 %v229, 32
    %v236 = vpop.permute.xlu0 %235
    %237 = vrot.lane.b32.xlu0 %v230, 32
    %v238 = vpop.permute.xlu0 %237
    %v241 = vsel %vm187, %v231, %v236
    %v242 = vsel %vm187, %v232, %v238
    %v243 = vpack.c.bf16 %v242, %v241
    %v244 = vld [vmem:[#allocation8] sm:$0xf]
    %v245 = vld [vmem:[#allocation8 + $0x4] sm:$0xf]
    %v246 = vld [vmem:[#allocation8 + $0x8] sm:$0xf]
    %v247 = vld [vmem:[#allocation8 + $0xc] sm:$0xf]
    %v248 = vld [vmem:[#allocation8 + $0x10] sm:$0xf]
    %v249 = vld [vmem:[#allocation8 + $0x14] sm:$0xf]
    %v250 = vld [vmem:[#allocation8 + $0x18] sm:$0xf]
    %v251 = vld [vmem:[#allocation8 + $0x1c] sm:$0xf]
    %v260 = vunpack.c.l.b16 %v244
    %v261 = vunpack.c.l.b16 %v245
    %v262 = vunpack.c.l.b16 %v246
    %v263 = vunpack.c.l.b16 %v247
    %v264 = vunpack.c.l.b16 %v248
    %v265 = vunpack.c.l.b16 %v249
    %v266 = vunpack.c.l.b16 %v250
    %v267 = vunpack.c.l.b16 %v251
    %v268 = vpack.c.b16 %v261, %v260
    %v269 = vpack.c.b16 %v263, %v262
    %v270 = vpack.c.b16 %v265, %v264
    %v271 = vpack.c.b16 %v267, %v266
    %vm276 = vcmask 523264
    %v278 = vsel %vm276, %v243, 0
    %280 = vmatprep.subr.bf16.mxu0 0
    %281 = vmatpush1.bf16.msra.mxu0 %v268
    %282 = vmatprep.subr.bf16.mxu0 0
    %283 = vmatpush1.bf16.msra.mxu0 %v269
    %284 = vmatprep.subr.bf16.mxu0 0
    %285 = vmatpush1.bf16.msra.mxu0 %v270
    %286 = vmatprep.subr.bf16.mxu0 0
    %287 = vmatpush1.bf16.msra.mxu0 %v271
    %288 = vmatprep.subr.bf16.mxu0 0
    %289 = vmatpush1.bf16.msra.mxu0 0
    %290 = vmatprep.subr.bf16.mxu0 0
    %291 = vmatpush1.bf16.msra.mxu0 0
    %292 = vmatprep.subr.bf16.mxu0 0
    %293 = vmatpush1.bf16.msra.mxu0 0
    %294 = vmatprep.subr.bf16.mxu0 0
    %295 = vmatpush1.bf16.msra.mxu0 0
    %296 = vmatprep.subr.bf16.mxu0 0
    %297 = vmatpush1.bf16.msra.mxu0 0
    %298 = vmatprep.subr.bf16.mxu0 0
    %299 = vmatpush1.bf16.msra.mxu0 0
    %300 = vmatprep.subr.bf16.mxu0 0
    %301 = vmatpush1.bf16.msra.mxu0 0
    %302 = vmatprep.subr.bf16.mxu0 0
    %303 = vmatpush1.bf16.msra.mxu0 0
    %304 = vmatprep.subr.bf16.mxu0 0
    %305 = vmatpush1.bf16.msra.mxu0 0
    %306 = vmatprep.subr.bf16.mxu0 0
    %307 = vmatpush1.bf16.msra.mxu0 0
    %308 = vmatprep.subr.bf16.mxu0 0
    %309 = vmatpush1.bf16.msra.mxu0 0
    %310 = vmatprep.subr.bf16.mxu0 0
    %311 = vmatpush1.bf16.msra.mxu0 0
    %312 = vmatprep.mubr.bf16.mxu0 0
    %313 = vmatmul.mubr.bf16.gmra.mrb[0].mxu0 %v278
    %v314 = vpop.f32.mrb[0].mxu0
    %v315 = vadd.f32 0.0, %v314
    %v316 = vpop.f32.mrb[0].mxu0
    %v317 = vpop.f32.mrb[0].mxu0
    %v318 = vadd.f32 0.0, %v317
    %v319 = vpop.f32.mrb[0].mxu0
    %320 = vdwg.mxu0
    %v321 = vld [vmem:[#allocation10] sm:$0xf]
    %v322 = vld [vmem:[#allocation10 + $0x4] sm:$0xf]
    %v323 = vld [vmem:[#allocation10 + $0x8] sm:$0xf]
    %v324 = vld [vmem:[#allocation10 + $0xc] sm:$0xf]
    %v325 = vpack.c.bf16 %v315, %v315
    %v326 = vpack.c.bf16 %v318, %v318
    %328 = vrot.lane.b32.xlu0 %v325, 96
    %v329 = vpop.permute.xlu0 %328
    %vm330 = vcmask 64512
    %v332 = vsel %vm330, %v325, 0
    %v335 = vsel %vm330, %v329, 0
    %337 = vmatprep.subr.bf16.mxu0 0
    %338 = vmatpush1.bf16.xpose.msra.mxu0 %v335
    %339 = vmatprep.subr.bf16.mxu0 0
    %340 = vmatpush1.bf16.xpose.msra.mxu0 0
    %341 = vmatprep.subr.bf16.mxu0 0
    %342 = vmatpush1.bf16.xpose.msra.mxu0 0
    %343 = vmatprep.subr.bf16.mxu0 0
    %344 = vmatpush1.bf16.xpose.msra.mxu0 0
    %345 = vmatprep.subr.bf16.mxu0 0
    %346 = vmatpush1.bf16.xpose.msra.mxu0 0
    %347 = vmatprep.subr.bf16.mxu0 0
    %348 = vmatpush1.bf16.xpose.msra.mxu0 0
    %349 = vmatprep.subr.bf16.mxu0 0
    %350 = vmatpush1.bf16.xpose.msra.mxu0 0
    %351 = vmatprep.subr.bf16.mxu0 0
    %352 = vmatpush1.bf16.xpose.msra.mxu0 0
    %353 = vmatprep.subr.bf16.mxu0 0
    %354 = vmatpush1.bf16.xpose.msra.mxu0 0
    %355 = vmatprep.subr.bf16.mxu0 0
    %356 = vmatpush1.bf16.xpose.msra.mxu0 0
    %357 = vmatprep.subr.bf16.mxu0 0
    %358 = vmatpush1.bf16.xpose.msra.mxu0 0
    %359 = vmatprep.subr.bf16.mxu0 0
    %360 = vmatpush1.bf16.xpose.msra.mxu0 0
    %361 = vmatprep.subr.bf16.mxu0 0
    %362 = vmatpush1.bf16.xpose.msra.mxu0 0
    %363 = vmatprep.subr.bf16.mxu0 0
    %364 = vmatpush1.bf16.xpose.msra.mxu0 0
    %365 = vmatprep.subr.bf16.mxu0 0
    %366 = vmatpush1.bf16.xpose.msra.mxu0 0
    %367 = vmatprep.subr.bf16.mxu0 0
    %368 = vmatpush1.bf16.xpose.msra.mxu0 0
    %369 = vmatprep.mubr.bf16.mxu0 0
    %370 = vmatmul.mubr.bf16.gmra.mrb[0].mxu0 %v332
    %v371 = vpop.f32.mrb[0].mxu0
    %v372 = vadd.f32 0.0, %v371
    %v373 = vpop.f32.mrb[0].mxu0
    %v374 = vpop.f32.mrb[0].mxu0
    %v375 = vpop.f32.mrb[0].mxu0
    %376 = vdwg.mxu0
    %378 = vrot.lane.b32.xlu0 %v326, 96
    %v379 = vpop.permute.xlu0 %378
    %v381 = vsel %vm330, %v326, 0
    %v384 = vsel %vm330, %v379, 0
    %386 = vmatprep.subr.bf16.mxu0 0
    %387 = vmatpush1.bf16.xpose.msra.mxu0 %v384
    %388 = vmatprep.subr.bf16.mxu0 0
    %389 = vmatpush1.bf16.xpose.msra.mxu0 0
    %390 = vmatprep.subr.bf16.mxu0 0
    %391 = vmatpush1.bf16.xpose.msra.mxu0 0
    %392 = vmatprep.subr.bf16.mxu0 0
    %393 = vmatpush1.bf16.xpose.msra.mxu0 0
    %394 = vmatprep.subr.bf16.mxu0 0
    %395 = vmatpush1.bf16.xpose.msra.mxu0 0
    %396 = vmatprep.subr.bf16.mxu0 0
    %397 = vmatpush1.bf16.xpose.msra.mxu0 0
    %398 = vmatprep.subr.bf16.mxu0 0
    %399 = vmatpush1.bf16.xpose.msra.mxu0 0
    %400 = vmatprep.subr.bf16.mxu0 0
    %401 = vmatpush1.bf16.xpose.msra.mxu0 0
    %402 = vmatprep.subr.bf16.mxu0 0
    %403 = vmatpush1.bf16.xpose.msra.mxu0 0
    %404 = vmatprep.subr.bf16.mxu0 0
    %405 = vmatpush1.bf16.xpose.msra.mxu0 0
    %406 = vmatprep.subr.bf16.mxu0 0
    %407 = vmatpush1.bf16.xpose.msra.mxu0 0
    %408 = vmatprep.subr.bf16.mxu0 0
    %409 = vmatpush1.bf16.xpose.msra.mxu0 0
    %410 = vmatprep.subr.bf16.mxu0 0
    %411 = vmatpush1.bf16.xpose.msra.mxu0 0
    %412 = vmatprep.subr.bf16.mxu0 0
    %413 = vmatpush1.bf16.xpose.msra.mxu0 0
    %414 = vmatprep.subr.bf16.mxu0 0
    %415 = vmatpush1.bf16.xpose.msra.mxu0 0
    %416 = vmatprep.subr.bf16.mxu0 0
    %417 = vmatpush1.bf16.xpose.msra.mxu0 0
    %418 = vmatprep.mubr.bf16.mxu0 0
    %419 = vmatmul.mubr.bf16.gmra.mrb[0].mxu0 %v381
    %v420 = vpop.f32.mrb[0].mxu0
    %v421 = vadd.f32 0.0, %v420
    %v422 = vpop.f32.mrb[0].mxu0
    %v423 = vpop.f32.mrb[0].mxu0
    %v424 = vpop.f32.mrb[0].mxu0
    %425 = vdwg.mxu0
    %v426 = vsel %vm330, %v372, -inf
    %427 = vmax.xlane.f32.xlu0 %v426
    %v428 = vpop.xlane.xlu0 %427
    %v429 = vsel %vm330, %v421, -inf
    %430 = vmax.xlane.f32.xlu0 %v429
    %v431 = vpop.xlane.xlu0 %430
    %v432 = vsub.f32 %v372, %v428
    %v433 = vsub.f32 %v421, %v431
    %v434 = vmul.f32 %v432, 1.442695
    %v435 = vpow.pop %v434
    %v436 = vmul.f32 %v433, 1.442695
    %v437 = vpow.pop %v436
    %v438 = vsel %vm330, %v435, 0.0
    %439 = vadd.xlane.f32.xlu0 %v438
    %v440 = vpop.xlane.xlu0 %439
    %v441 = vsel %vm330, %v437, 0.0
    %442 = vadd.xlane.f32.xlu0 %v441
    %v443 = vpop.xlane.xlu0 %442
    %v444 = vrcp.pop %v440
    %v445 = vrcp.pop %v443
    %v446 = vmul.f32 %v435, %v444
    %v447 = vmul.f32 %v437, %v445
    %v448 = vpack.c.bf16 %v446, %v446
    %v449 = vpack.c.bf16 %v447, %v447
    %450 = vrot.lane.b32.xlu0 %v325, 64
    %v451 = vpop.permute.xlu0 %450
    %v453 = vsel %vm330, %v448, 0
    %vm455 = vcmask 1043456
    %v457 = vsel %vm455, %v451, 0
    %459 = vmatprep.subr.bf16.mxu0 0
    %460 = vmatpush1.bf16.msra.mxu0 %v457
    %461 = vmatprep.subr.bf16.mxu0 0
    %462 = vmatpush1.bf16.msra.mxu0 0
    %463 = vmatprep.subr.bf16.mxu0 0
    %464 = vmatpush1.bf16.msra.mxu0 0
    %465 = vmatprep.subr.bf16.mxu0 0
    %466 = vmatpush1.bf16.msra.mxu0 0
    %467 = vmatprep.subr.bf16.mxu0 0
    %468 = vmatpush1.bf16.msra.mxu0 0
    %469 = vmatprep.subr.bf16.mxu0 0
    %470 = vmatpush1.bf16.msra.mxu0 0
    %471 = vmatprep.subr.bf16.mxu0 0
    %472 = vmatpush1.bf16.msra.mxu0 0
    %473 = vmatprep.subr.bf16.mxu0 0
    %474 = vmatpush1.bf16.msra.mxu0 0
    %475 = vmatprep.subr.bf16.mxu0 0
    %476 = vmatpush1.bf16.msra.mxu0 0
    %477 = vmatprep.subr.bf16.mxu0 0
    %478 = vmatpush1.bf16.msra.mxu0 0
    %479 = vmatprep.subr.bf16.mxu0 0
    %480 = vmatpush1.bf16.msra.mxu0 0
    %481 = vmatprep.subr.bf16.mxu0 0
    %482 = vmatpush1.bf16.msra.mxu0 0
    %483 = vmatprep.subr.bf16.mxu0 0
    %484 = vmatpush1.bf16.msra.mxu0 0
    %485 = vmatprep.subr.bf16.mxu0 0
    %486 = vmatpush1.bf16.msra.mxu0 0
    %487 = vmatprep.subr.bf16.mxu0 0
    %488 = vmatpush1.bf16.msra.mxu0 0
    %489 = vmatprep.subr.bf16.mxu0 0
    %490 = vmatpush1.bf16.msra.mxu0 0
    %491 = vmatprep.mubr.bf16.mxu0 0
    %492 = vmatmul.mubr.bf16.gmra.mrb[0].mxu0 %v453
    %v493 = vpop.f32.mrb[0].mxu0
    %v494 = vadd.f32 0.0, %v493
    %v495 = vpop.f32.mrb[0].mxu0
    %v496 = vpop.f32.mrb[0].mxu0
    %v497 = vpop.f32.mrb[0].mxu0
    %498 = vdwg.mxu0
    %499 = vrot.lane.b32.xlu0 %v326, 64
    %v500 = vpop.permute.xlu0 %499
    %v502 = vsel %vm330, %v449, 0
    %v505 = vsel %vm455, %v500, 0
    %507 = vmatprep.subr.bf16.mxu0 0
    %508 = vmatpush1.bf16.msra.mxu0 %v505
    %509 = vmatprep.subr.bf16.mxu0 0
    %510 = vmatpush1.bf16.msra.mxu0 0
    %511 = vmatprep.subr.bf16.mxu0 0
    %512 = vmatpush1.bf16.msra.mxu0 0
    %513 = vmatprep.subr.bf16.mxu0 0
    %514 = vmatpush1.bf16.msra.mxu0 0
    %515 = vmatprep.subr.bf16.mxu0 0
    %516 = vmatpush1.bf16.msra.mxu0 0
    %517 = vmatprep.subr.bf16.mxu0 0
    %518 = vmatpush1.bf16.msra.mxu0 0
    %519 = vmatprep.subr.bf16.mxu0 0
    %520 = vmatpush1.bf16.msra.mxu0 0
    %521 = vmatprep.subr.bf16.mxu0 0
    %522 = vmatpush1.bf16.msra.mxu0 0
    %523 = vmatprep.subr.bf16.mxu0 0
    %524 = vmatpush1.bf16.msra.mxu0 0
    %525 = vmatprep.subr.bf16.mxu0 0
    %526 = vmatpush1.bf16.msra.mxu0 0
    %527 = vmatprep.subr.bf16.mxu0 0
    %528 = vmatpush1.bf16.msra.mxu0 0
    %529 = vmatprep.subr.bf16.mxu0 0
    %530 = vmatpush1.bf16.msra.mxu0 0
    %531 = vmatprep.subr.bf16.mxu0 0
    %532 = vmatpush1.bf16.msra.mxu0 0
    %533 = vmatprep.subr.bf16.mxu0 0
    %534 = vmatpush1.bf16.msra.mxu0 0
    %535 = vmatprep.subr.bf16.mxu0 0
    %536 = vmatpush1.bf16.msra.mxu0 0
    %537 = vmatprep.subr.bf16.mxu0 0
    %538 = vmatpush1.bf16.msra.mxu0 0
    %539 = vmatprep.mubr.bf16.mxu0 0
    %540 = vmatmul.mubr.bf16.gmra.mrb[0].mxu0 %v502
    %v541 = vpop.f32.mrb[0].mxu0
    %v542 = vadd.f32 0.0, %v541
    %v543 = vpop.f32.mrb[0].mxu0
    %v544 = vpop.f32.mrb[0].mxu0
    %v545 = vpop.f32.mrb[0].mxu0
    %546 = vdwg.mxu0
    %547 = vrot.lane.b32.xlu0 %v325, 120
    %v548 = vpop.permute.xlu0 %547
    %549 = vrot.lane.b32.xlu0 %v325, 88
    %v550 = vpop.permute.xlu0 %549
    %v552 = vsel %vm330, %v548, 0
    %v555 = vsel %vm330, %v550, 0
    %557 = vmatprep.subr.bf16.mxu0 0
    %558 = vmatpush1.bf16.xpose.msra.mxu0 %v555
    %559 = vmatprep.subr.bf16.mxu0 0
    %560 = vmatpush1.bf16.xpose.msra.mxu0 0
    %561 = vmatprep.subr.bf16.mxu0 0
    %562 = vmatpush1.bf16.xpose.msra.mxu0 0
    %563 = vmatprep.subr.bf16.mxu0 0
    %564 = vmatpush1.bf16.xpose.msra.mxu0 0
    %565 = vmatprep.subr.bf16.mxu0 0
    %566 = vmatpush1.bf16.xpose.msra.mxu0 0
    %567 = vmatprep.subr.bf16.mxu0 0
    %568 = vmatpush1.bf16.xpose.msra.mxu0 0
    %569 = vmatprep.subr.bf16.mxu0 0
    %570 = vmatpush1.bf16.xpose.msra.mxu0 0
    %571 = vmatprep.subr.bf16.mxu0 0
    %572 = vmatpush1.bf16.xpose.msra.mxu0 0
    %573 = vmatprep.subr.bf16.mxu0 0
    %574 = vmatpush1.bf16.xpose.msra.mxu0 0
    %575 = vmatprep.subr.bf16.mxu0 0
    %576 = vmatpush1.bf16.xpose.msra.mxu0 0
    %577 = vmatprep.subr.bf16.mxu0 0
    %578 = vmatpush1.bf16.xpose.msra.mxu0 0
    %579 = vmatprep.subr.bf16.mxu0 0
    %580 = vmatpush1.bf16.xpose.msra.mxu0 0
    %581 = vmatprep.subr.bf16.mxu0 0
    %582 = vmatpush1.bf16.xpose.msra.mxu0 0
    %583 = vmatprep.subr.bf16.mxu0 0
    %584 = vmatpush1.bf16.xpose.msra.mxu0 0
    %585 = vmatprep.subr.bf16.mxu0 0
    %586 = vmatpush1.bf16.xpose.msra.mxu0 0
    %587 = vmatprep.subr.bf16.mxu0 0
    %588 = vmatpush1.bf16.xpose.msra.mxu0 0
    %589 = vmatprep.mubr.bf16.mxu0 0
    %590 = vmatmul.mubr.bf16.gmra.mrb[0].mxu0 %v552
    %v591 = vpop.f32.mrb[0].mxu0
    %v592 = vadd.f32 0.0, %v591
    %v593 = vpop.f32.mrb[0].mxu0
    %v594 = vpop.f32.mrb[0].mxu0
    %v595 = vpop.f32.mrb[0].mxu0
    %596 = vdwg.mxu0
    %597 = vrot.lane.b32.xlu0 %v326, 120
    %v598 = vpop.permute.xlu0 %597
    %599 = vrot.lane.b32.xlu0 %v326, 88
    %v600 = vpop.permute.xlu0 %599
    %v602 = vsel %vm330, %v598, 0
    %v605 = vsel %vm330, %v600, 0
    %607 = vmatprep.subr.bf16.mxu0 0
    %608 = vmatpush1.bf16.xpose.msra.mxu0 %v605
    %609 = vmatprep.subr.bf16.mxu0 0
    %610 = vmatpush1.bf16.xpose.msra.mxu0 0
    %611 = vmatprep.subr.bf16.mxu0 0
    %612 = vmatpush1.bf16.xpose.msra.mxu0 0
    %613 = vmatprep.subr.bf16.mxu0 0
    %614 = vmatpush1.bf16.xpose.msra.mxu0 0
    %615 = vmatprep.subr.bf16.mxu0 0
    %616 = vmatpush1.bf16.xpose.msra.mxu0 0
    %617 = vmatprep.subr.bf16.mxu0 0
    %618 = vmatpush1.bf16.xpose.msra.mxu0 0
    %619 = vmatprep.subr.bf16.mxu0 0
    %620 = vmatpush1.bf16.xpose.msra.mxu0 0
    %621 = vmatprep.subr.bf16.mxu0 0
    %622 = vmatpush1.bf16.xpose.msra.mxu0 0
    %623 = vmatprep.subr.bf16.mxu0 0
    %624 = vmatpush1.bf16.xpose.msra.mxu0 0
    %625 = vmatprep.subr.bf16.mxu0 0
    %626 = vmatpush1.bf16.xpose.msra.mxu0 0
    %627 = vmatprep.subr.bf16.mxu0 0
    %628 = vmatpush1.bf16.xpose.msra.mxu0 0
    %629 = vmatprep.subr.bf16.mxu0 0
    %630 = vmatpush1.bf16.xpose.msra.mxu0 0
    %631 = vmatprep.subr.bf16.mxu0 0
    %632 = vmatpush1.bf16.xpose.msra.mxu0 0
    %633 = vmatprep.subr.bf16.mxu0 0
    %634 = vmatpush1.bf16.xpose.msra.mxu0 0
    %635 = vmatprep.subr.bf16.mxu0 0
    %636 = vmatpush1.bf16.xpose.msra.mxu0 0
    %637 = vmatprep.subr.bf16.mxu0 0
    %638 = vmatpush1.bf16.xpose.msra.mxu0 0
    %639 = vmatprep.mubr.bf16.mxu0 0
    %640 = vmatmul.mubr.bf16.gmra.mrb[0].mxu0 %v602
    %v641 = vpop.f32.mrb[0].mxu0
    %v642 = vadd.f32 0.0, %v641
    %v643 = vpop.f32.mrb[0].mxu0
    %v644 = vpop.f32.mrb[0].mxu0
    %v645 = vpop.f32.mrb[0].mxu0
    %646 = vdwg.mxu0
    %v647 = vsel %vm330, %v592, -inf
    %648 = vmax.xlane.f32.xlu0 %v647
    %v649 = vpop.xlane.xlu0 %648
    %v650 = vsel %vm330, %v642, -inf
    %651 = vmax.xlane.f32.xlu0 %v650
    %v652 = vpop.xlane.xlu0 %651
    %v653 = vsub.f32 %v592, %v649
    %v654 = vsub.f32 %v642, %v652
    %v655 = vmul.f32 %v653, 1.442695
    %v656 = vpow.pop %v655
    %v657 = vmul.f32 %v654, 1.442695
    %v658 = vpow.pop %v657
    %v659 = vsel %vm330, %v656, 0.0
    %660 = vadd.xlane.f32.xlu0 %v659
    %v661 = vpop.xlane.xlu0 %660
    %v662 = vsel %vm330, %v658, 0.0
    %663 = vadd.xlane.f32.xlu0 %v662
    %v664 = vpop.xlane.xlu0 %663
    %v665 = vrcp.pop %v661
    %v666 = vrcp.pop %v664
    %v667 = vmul.f32 %v656, %v665
    %v668 = vmul.f32 %v658, %v666
    %v669 = vpack.c.bf16 %v667, %v667
    %v670 = vpack.c.bf16 %v668, %v668
    %671 = vrot.lane.b32.xlu0 %v325, 56
    %v672 = vpop.permute.xlu0 %671
    %v674 = vsel %vm330, %v669, 0
    %v677 = vsel %vm455, %v672, 0
    %679 = vmatprep.subr.bf16.mxu0 0
    %680 = vmatpush1.bf16.msra.mxu0 %v677
    %681 = vmatprep.subr.bf16.mxu0 0
    %682 = vmatpush1.bf16.msra.mxu0 0
    %683 = vmatprep.subr.bf16.mxu0 0
    %684 = vmatpush1.bf16.msra.mxu0 0
    %685 = vmatprep.subr.bf16.mxu0 0
    %686 = vmatpush1.bf16.msra.mxu0 0
    %687 = vmatprep.subr.bf16.mxu0 0
    %688 = vmatpush1.bf16.msra.mxu0 0
    %689 = vmatprep.subr.bf16.mxu0 0
    %690 = vmatpush1.bf16.msra.mxu0 0
    %691 = vmatprep.subr.bf16.mxu0 0
    %692 = vmatpush1.bf16.msra.mxu0 0
    %693 = vmatprep.subr.bf16.mxu0 0
    %694 = vmatpush1.bf16.msra.mxu0 0
    %695 = vmatprep.subr.bf16.mxu0 0
    %696 = vmatpush1.bf16.msra.mxu0 0
    %697 = vmatprep.subr.bf16.mxu0 0
    %698 = vmatpush1.bf16.msra.mxu0 0
    %699 = vmatprep.subr.bf16.mxu0 0
    %700 = vmatpush1.bf16.msra.mxu0 0
    %701 = vmatprep.subr.bf16.mxu0 0
    %702 = vmatpush1.bf16.msra.mxu0 0
    %703 = vmatprep.subr.bf16.mxu0 0
    %704 = vmatpush1.bf16.msra.mxu0 0
    %705 = vmatprep.subr.bf16.mxu0 0
    %706 = vmatpush1.bf16.msra.mxu0 0
    %707 = vmatprep.subr.bf16.mxu0 0
    %708 = vmatpush1.bf16.msra.mxu0 0
    %709 = vmatprep.subr.bf16.mxu0 0
    %710 = vmatpush1.bf16.msra.mxu0 0
    %711 = vmatprep.mubr.bf16.mxu0 0
    %712 = vmatmul.mubr.bf16.gmra.mrb[0].mxu0 %v674
    %v713 = vpop.f32.mrb[0].mxu0
    %v714 = vadd.f32 0.0, %v713
    %v715 = vpop.f32.mrb[0].mxu0
    %v716 = vpop.f32.mrb[0].mxu0
    %v717 = vpop.f32.mrb[0].mxu0
    %718 = vdwg.mxu0
    %719 = vrot.lane.b32.xlu0 %v326, 56
    %v720 = vpop.permute.xlu0 %719
    %v722 = vsel %vm330, %v670, 0
    %v725 = vsel %vm455, %v720, 0
    %727 = vmatprep.subr.bf16.mxu0 0
    %728 = vmatpush1.bf16.msra.mxu0 %v725
    %729 = vmatprep.subr.bf16.mxu0 0
    %730 = vmatpush1.bf16.msra.mxu0 0
    %731 = vmatprep.subr.bf16.mxu0 0
    %732 = vmatpush1.bf16.msra.mxu0 0
    %733 = vmatprep.subr.bf16.mxu0 0
    %734 = vmatpush1.bf16.msra.mxu0 0
    %735 = vmatprep.subr.bf16.mxu0 0
    %736 = vmatpush1.bf16.msra.mxu0 0
    %737 = vmatprep.subr.bf16.mxu0 0
    %738 = vmatpush1.bf16.msra.mxu0 0
    %739 = vmatprep.subr.bf16.mxu0 0
    %740 = vmatpush1.bf16.msra.mxu0 0
    %741 = vmatprep.subr.bf16.mxu0 0
    %742 = vmatpush1.bf16.msra.mxu0 0
    %743 = vmatprep.subr.bf16.mxu0 0
    %744 = vmatpush1.bf16.msra.mxu0 0
    %745 = vmatprep.subr.bf16.mxu0 0
    %746 = vmatpush1.bf16.msra.mxu0 0
    %747 = vmatprep.subr.bf16.mxu0 0
    %748 = vmatpush1.bf16.msra.mxu0 0
    %749 = vmatprep.subr.bf16.mxu0 0
    %750 = vmatpush1.bf16.msra.mxu0 0
    %751 = vmatprep.subr.bf16.mxu0 0
    %752 = vmatpush1.bf16.msra.mxu0 0
    %753 = vmatprep.subr.bf16.mxu0 0
    %754 = vmatpush1.bf16.msra.mxu0 0
    %755 = vmatprep.subr.bf16.mxu0 0
    %756 = vmatpush1.bf16.msra.mxu0 0
    %757 = vmatprep.subr.bf16.mxu0 0
    %758 = vmatpush1.bf16.msra.mxu0 0
    %759 = vmatprep.mubr.bf16.mxu0 0
    %760 = vmatmul.mubr.bf16.gmra.mrb[0].mxu0 %v722
    %v761 = vpop.f32.mrb[0].mxu0
    %v762 = vadd.f32 0.0, %v761
    %v763 = vpop.f32.mrb[0].mxu0
    %v764 = vpop.f32.mrb[0].mxu0
    %v765 = vpop.f32.mrb[0].mxu0
    %766 = vdwg.mxu0
    %767 = vrot.lane.b32.xlu0 %v325, 112
    %v768 = vpop.permute.xlu0 %767
    %769 = vrot.lane.b32.xlu0 %v325, 80
    %v770 = vpop.permute.xlu0 %769
    %v772 = vsel %vm330, %v768, 0
    %v775 = vsel %vm330, %v770, 0
    %777 = vmatprep.subr.bf16.mxu0 0
    %778 = vmatpush1.bf16.xpose.msra.mxu0 %v775
    %779 = vmatprep.subr.bf16.mxu0 0
    %780 = vmatpush1.bf16.xpose.msra.mxu0 0
    %781 = vmatprep.subr.bf16.mxu0 0
    %782 = vmatpush1.bf16.xpose.msra.mxu0 0
    %783 = vmatprep.subr.bf16.mxu0 0
    %784 = vmatpush1.bf16.xpose.msra.mxu0 0
    %785 = vmatprep.subr.bf16.mxu0 0
    %786 = vmatpush1.bf16.xpose.msra.mxu0 0
    %787 = vmatprep.subr.bf16.mxu0 0
    %788 = vmatpush1.bf16.xpose.msra.mxu0 0
    %789 = vmatprep.subr.bf16.mxu0 0
    %790 = vmatpush1.bf16.xpose.msra.mxu0 0
    %791 = vmatprep.subr.bf16.mxu0 0
    %792 = vmatpush1.bf16.xpose.msra.mxu0 0
    %793 = vmatprep.subr.bf16.mxu0 0
    %794 = vmatpush1.bf16.xpose.msra.mxu0 0
    %795 = vmatprep.subr.bf16.mxu0 0
    %796 = vmatpush1.bf16.xpose.msra.mxu0 0
    %797 = vmatprep.subr.bf16.mxu0 0
    %798 = vmatpush1.bf16.xpose.msra.mxu0 0
    %799 = vmatprep.subr.bf16.mxu0 0
    %800 = vmatpush1.bf16.xpose.msra.mxu0 0
    %801 = vmatprep.subr.bf16.mxu0 0
    %802 = vmatpush1.bf16.xpose.msra.mxu0 0
    %803 = vmatprep.subr.bf16.mxu0 0
    %804 = vmatpush1.bf16.xpose.msra.mxu0 0
    %805 = vmatprep.subr.bf16.mxu0 0
    %806 = vmatpush1.bf16.xpose.msra.mxu0 0
    %807 = vmatprep.subr.bf16.mxu0 0
    %808 = vmatpush1.bf16.xpose.msra.mxu0 0
    %809 = vmatprep.mubr.bf16.mxu0 0
    %810 = vmatmul.mubr.bf16.gmra.mrb[0].mxu0 %v772
    %v811 = vpop.f32.mrb[0].mxu0
    %v812 = vadd.f32 0.0, %v811
    %v813 = vpop.f32.mrb[0].mxu0
    %v814 = vpop.f32.mrb[0].mxu0
    %v815 = vpop.f32.mrb[0].mxu0
    %816 = vdwg.mxu0
    %817 = vrot.lane.b32.xlu0 %v326, 112
    %v818 = vpop.permute.xlu0 %817
    %819 = vrot.lane.b32.xlu0 %v326, 80
    %v820 = vpop.permute.xlu0 %819
    %v822 = vsel %vm330, %v818, 0
    %v825 = vsel %vm330, %v820, 0
    %827 = vmatprep.subr.bf16.mxu0 0
    %828 = vmatpush1.bf16.xpose.msra.mxu0 %v825
    %829 = vmatprep.subr.bf16.mxu0 0
    %830 = vmatpush1.bf16.xpose.msra.mxu0 0
    %831 = vmatprep.subr.bf16.mxu0 0
    %832 = vmatpush1.bf16.xpose.msra.mxu0 0
    %833 = vmatprep.subr.bf16.mxu0 0
    %834 = vmatpush1.bf16.xpose.msra.mxu0 0
    %835 = vmatprep.subr.bf16.mxu0 0
    %836 = vmatpush1.bf16.xpose.msra.mxu0 0
    %837 = vmatprep.subr.bf16.mxu0 0
    %838 = vmatpush1.bf16.xpose.msra.mxu0 0
    %839 = vmatprep.subr.bf16.mxu0 0
    %840 = vmatpush1.bf16.xpose.msra.mxu0 0
    %841 = vmatprep.subr.bf16.mxu0 0
    %842 = vmatpush1.bf16.xpose.msra.mxu0 0
    %843 = vmatprep.subr.bf16.mxu0 0
    %844 = vmatpush1.bf16.xpose.msra.mxu0 0
    %845 = vmatprep.subr.bf16.mxu0 0
    %846 = vmatpush1.bf16.xpose.msra.mxu0 0
    %847 = vmatprep.subr.bf16.mxu0 0
    %848 = vmatpush1.bf16.xpose.msra.mxu0 0
    %849 = vmatprep.subr.bf16.mxu0 0
    %850 = vmatpush1.bf16.xpose.msra.mxu0 0
    %851 = vmatprep.subr.bf16.mxu0 0
    %852 = vmatpush1.bf16.xpose.msra.mxu0 0
    %853 = vmatprep.subr.bf16.mxu0 0
    %854 = vmatpush1.bf16.xpose.msra.mxu0 0
    %855 = vmatprep.subr.bf16.mxu0 0
    %856 = vmatpush1.bf16.xpose.msra.mxu0 0
    %857 = vmatprep.subr.bf16.mxu0 0
    %858 = vmatpush1.bf16.xpose.msra.mxu0 0
    %859 = vmatprep.mubr.bf16.mxu0 0
    %860 = vmatmul.mubr.bf16.gmra.mrb[0].mxu0 %v822
    %v861 = vpop.f32.mrb[0].mxu0
    %v862 = vadd.f32 0.0, %v861
    %v863 = vpop.f32.mrb[0].mxu0
    %v864 = vpop.f32.mrb[0].mxu0
    %v865 = vpop.f32.mrb[0].mxu0
    %866 = vdwg.mxu0
    %v867 = vsel %vm330, %v812, -inf
    %868 = vmax.xlane.f32.xlu0 %v867
    %v869 = vpop.xlane.xlu0 %868
    %v870 = vsel %vm330, %v862, -inf
    %871 = vmax.xlane.f32.xlu0 %v870
    %v872 = vpop.xlane.xlu0 %871
    %v873 = vsub.f32 %v812, %v869
    %v874 = vsub.f32 %v862, %v872
    %v875 = vmul.f32 %v873, 1.442695
    %v876 = vpow.pop %v875
    %v877 = vmul.f32 %v874, 1.442695
    %v878 = vpow.pop %v877
    %v879 = vsel %vm330, %v876, 0.0
    %880 = vadd.xlane.f32.xlu0 %v879
    %v881 = vpop.xlane.xlu0 %880
    %v882 = vsel %vm330, %v878, 0.0
    %883 = vadd.xlane.f32.xlu0 %v882
    %v884 = vpop.xlane.xlu0 %883
    %v885 = vrcp.pop %v881
    %v886 = vrcp.pop %v884
    %v887 = vmul.f32 %v876, %v885
    %v888 = vmul.f32 %v878, %v886
    %v889 = vpack.c.bf16 %v887, %v887
    %v890 = vpack.c.bf16 %v888, %v888
    %891 = vrot.lane.b32.xlu0 %v325, 48
    %v892 = vpop.permute.xlu0 %891
    %v894 = vsel %vm330, %v889, 0
    %v897 = vsel %vm455, %v892, 0
    %899 = vmatprep.subr.bf16.mxu0 0
    %900 = vmatpush1.bf16.msra.mxu0 %v897
    %901 = vmatprep.subr.bf16.mxu0 0
    %902 = vmatpush1.bf16.msra.mxu0 0
    %903 = vmatprep.subr.bf16.mxu0 0
    %904 = vmatpush1.bf16.msra.mxu0 0
    %905 = vmatprep.subr.bf16.mxu0 0
    %906 = vmatpush1.bf16.msra.mxu0 0
    %907 = vmatprep.subr.bf16.mxu0 0
    %908 = vmatpush1.bf16.msra.mxu0 0
    %909 = vmatprep.subr.bf16.mxu0 0
    %910 = vmatpush1.bf16.msra.mxu0 0
    %911 = vmatprep.subr.bf16.mxu0 0
    %912 = vmatpush1.bf16.msra.mxu0 0
    %913 = vmatprep.subr.bf16.mxu0 0
    %914 = vmatpush1.bf16.msra.mxu0 0
    %915 = vmatprep.subr.bf16.mxu0 0
    %916 = vmatpush1.bf16.msra.mxu0 0
    %917 = vmatprep.subr.bf16.mxu0 0
    %918 = vmatpush1.bf16.msra.mxu0 0
    %919 = vmatprep.subr.bf16.mxu0 0
    %920 = vmatpush1.bf16.msra.mxu0 0
    %921 = vmatprep.subr.bf16.mxu0 0
    %922 = vmatpush1.bf16.msra.mxu0 0
    %923 = vmatprep.subr.bf16.mxu0 0
    %924 = vmatpush1.bf16.msra.mxu0 0
    %925 = vmatprep.subr.bf16.mxu0 0
    %926 = vmatpush1.bf16.msra.mxu0 0
    %927 = vmatprep.subr.bf16.mxu0 0
    %928 = vmatpush1.bf16.msra.mxu0 0
    %929 = vmatprep.subr.bf16.mxu0 0
    %930 = vmatpush1.bf16.msra.mxu0 0
    %931 = vmatprep.mubr.bf16.mxu0 0
    %932 = vmatmul.mubr.bf16.gmra.mrb[0].mxu0 %v894
    %v933 = vpop.f32.mrb[0].mxu0
    %v934 = vadd.f32 0.0, %v933
    %v935 = vpop.f32.mrb[0].mxu0
    %v936 = vpop.f32.mrb[0].mxu0
    %v937 = vpop.f32.mrb[0].mxu0
    %938 = vdwg.mxu0
    %939 = vrot.lane.b32.xlu0 %v326, 48
    %v940 = vpop.permute.xlu0 %939
    %v942 = vsel %vm330, %v890, 0
    %v945 = vsel %vm455, %v940, 0
    %947 = vmatprep.subr.bf16.mxu0 0
    %948 = vmatpush1.bf16.msra.mxu0 %v945
    %949 = vmatprep.subr.bf16.mxu0 0
    %950 = vmatpush1.bf16.msra.mxu0 0
    %951 = vmatprep.subr.bf16.mxu0 0
    %952 = vmatpush1.bf16.msra.mxu0 0
    %953 = vmatprep.subr.bf16.mxu0 0
    %954 = vmatpush1.bf16.msra.mxu0 0
    %955 = vmatprep.subr.bf16.mxu0 0
    %956 = vmatpush1.bf16.msra.mxu0 0
    %957 = vmatprep.subr.bf16.mxu0 0
    %958 = vmatpush1.bf16.msra.mxu0 0
    %959 = vmatprep.subr.bf16.mxu0 0
    %960 = vmatpush1.bf16.msra.mxu0 0
    %961 = vmatprep.subr.bf16.mxu0 0
    %962 = vmatpush1.bf16.msra.mxu0 0
    %963 = vmatprep.subr.bf16.mxu0 0
    %964 = vmatpush1.bf16.msra.mxu0 0
    %965 = vmatprep.subr.bf16.mxu0 0
    %966 = vmatpush1.bf16.msra.mxu0 0
    %967 = vmatprep.subr.bf16.mxu0 0
    %968 = vmatpush1.bf16.msra.mxu0 0
    %969 = vmatprep.subr.bf16.mxu0 0
    %970 = vmatpush1.bf16.msra.mxu0 0
    %971 = vmatprep.subr.bf16.mxu0 0
    %972 = vmatpush1.bf16.msra.mxu0 0
    %973 = vmatprep.subr.bf16.mxu0 0
    %974 = vmatpush1.bf16.msra.mxu0 0
    %975 = vmatprep.subr.bf16.mxu0 0
    %976 = vmatpush1.bf16.msra.mxu0 0
    %977 = vmatprep.subr.bf16.mxu0 0
    %978 = vmatpush1.bf16.msra.mxu0 0
    %979 = vmatprep.mubr.bf16.mxu0 0
    %980 = vmatmul.mubr.bf16.gmra.mrb[0].mxu0 %v942
    %v981 = vpop.f32.mrb[0].mxu0
    %v982 = vadd.f32 0.0, %v981
    %v983 = vpop.f32.mrb[0].mxu0
    %v984 = vpop.f32.mrb[0].mxu0
    %v985 = vpop.f32.mrb[0].mxu0
    %986 = vdwg.mxu0
    %987 = vrot.lane.b32.xlu0 %v325, 104
    %v988 = vpop.permute.xlu0 %987
    %989 = vrot.lane.b32.xlu0 %v325, 72
    %v990 = vpop.permute.xlu0 %989
    %v992 = vsel %vm330, %v988, 0
    %v995 = vsel %vm330, %v990, 0
    %997 = vmatprep.subr.bf16.mxu0 0
    %998 = vmatpush1.bf16.xpose.msra.mxu0 %v995
    %999 = vmatprep.subr.bf16.mxu0 0
    %1000 = vmatpush1.bf16.xpose.msra.mxu0 0
    %1001 = vmatprep.subr.bf16.mxu0 0
    %1002 = vmatpush1.bf16.xpose.msra.mxu0 0
    %1003 = vmatprep.subr.bf16.mxu0 0
    %1004 = vmatpush1.bf16.xpose.msra.mxu0 0
    %1005 = vmatprep.subr.bf16.mxu0 0
    %1006 = vmatpush1.bf16.xpose.msra.mxu0 0
    %1007 = vmatprep.subr.bf16.mxu0 0
    %1008 = vmatpush1.bf16.xpose.msra.mxu0 0
    %1009 = vmatprep.subr.bf16.mxu0 0
    %1010 = vmatpush1.bf16.xpose.msra.mxu0 0
    %1011 = vmatprep.subr.bf16.mxu0 0
    %1012 = vmatpush1.bf16.xpose.msra.mxu0 0
    %1013 = vmatprep.subr.bf16.mxu0 0
    %1014 = vmatpush1.bf16.xpose.msra.mxu0 0
    %1015 = vmatprep.subr.bf16.mxu0 0
    %1016 = vmatpush1.bf16.xpose.msra.mxu0 0
    %1017 = vmatprep.subr.bf16.mxu0 0
    %1018 = vmatpush1.bf16.xpose.msra.mxu0 0
    %1019 = vmatprep.subr.bf16.mxu0 0
    %1020 = vmatpush1.bf16.xpose.msra.mxu0 0
    %1021 = vmatprep.subr.bf16.mxu0 0
    %1022 = vmatpush1.bf16.xpose.msra.mxu0 0
    %1023 = vmatprep.subr.bf16.mxu0 0
    %1024 = vmatpush1.bf16.xpose.msra.mxu0 0
    %1025 = vmatprep.subr.bf16.mxu0 0
    %1026 = vmatpush1.bf16.xpose.msra.mxu0 0
    %1027 = vmatprep.subr.bf16.mxu0 0
    %1028 = vmatpush1.bf16.xpose.msra.mxu0 0
    %1029 = vmatprep.mubr.bf16.mxu0 0
    %1030 = vmatmul.mubr.bf16.gmra.mrb[0].mxu0 %v992
    %v1031 = vpop.f32.mrb[0].mxu0
    %v1032 = vadd.f32 0.0, %v1031
    %v1033 = vpop.f32.mrb[0].mxu0
    %v1034 = vpop.f32.mrb[0].mxu0
    %v1035 = vpop.f32.mrb[0].mxu0
    %1036 = vdwg.mxu0
    %1037 = vrot.lane.b32.xlu0 %v326, 104
    %v1038 = vpop.permute.xlu0 %1037
    %1039 = vrot.lane.b32.xlu0 %v326, 72
    %v1040 = vpop.permute.xlu0 %1039
    %v1042 = vsel %vm330, %v1038, 0
    %v1045 = vsel %vm330, %v1040, 0
    %1047 = vmatprep.subr.bf16.mxu0 0
    %1048 = vmatpush1.bf16.xpose.msra.mxu0 %v1045
    %1049 = vmatprep.subr.bf16.mxu0 0
    %1050 = vmatpush1.bf16.xpose.msra.mxu0 0
    %1051 = vmatprep.subr.bf16.mxu0 0
    %1052 = vmatpush1.bf16.xpose.msra.mxu0 0
    %1053 = vmatprep.subr.bf16.mxu0 0
    %1054 = vmatpush1.bf16.xpose.msra.mxu0 0
    %1055 = vmatprep.subr.bf16.mxu0 0
    %1056 = vmatpush1.bf16.xpose.msra.mxu0 0
    %1057 = vmatprep.subr.bf16.mxu0 0
    %1058 = vmatpush1.bf16.xpose.msra.mxu0 0
    %1059 = vmatprep.subr.bf16.mxu0 0
    %1060 = vmatpush1.bf16.xpose.msra.mxu0 0
    %1061 = vmatprep.subr.bf16.mxu0 0
    %1062 = vmatpush1.bf16.xpose.msra.mxu0 0
    %1063 = vmatprep.subr.bf16.mxu0 0
    %1064 = vmatpush1.bf16.xpose.msra.mxu0 0
    %1065 = vmatprep.subr.bf16.mxu0 0
    %1066 = vmatpush1.bf16.xpose.msra.mxu0 0
    %1067 = vmatprep.subr.bf16.mxu0 0
    %1068 = vmatpush1.bf16.xpose.msra.mxu0 0
    %1069 = vmatprep.subr.bf16.mxu0 0
    %1070 = vmatpush1.bf16.xpose.msra.mxu0 0
    %1071 = vmatprep.subr.bf16.mxu0 0
    %1072 = vmatpush1.bf16.xpose.msra.mxu0 0
    %1073 = vmatprep.subr.bf16.mxu0 0
    %1074 = vmatpush1.bf16.xpose.msra.mxu0 0
    %1075 = vmatprep.subr.bf16.mxu0 0
    %1076 = vmatpush1.bf16.xpose.msra.mxu0 0
    %1077 = vmatprep.subr.bf16.mxu0 0
    %1078 = vmatpush1.bf16.xpose.msra.mxu0 0
    %1079 = vmatprep.mubr.bf16.mxu0 0
    %1080 = vmatmul.mubr.bf16.gmra.mrb[0].mxu0 %v1042
    %v1081 = vpop.f32.mrb[0].mxu0
    %v1082 = vadd.f32 0.0, %v1081
    %v1083 = vpop.f32.mrb[0].mxu0
    %v1084 = vpop.f32.mrb[0].mxu0
    %v1085 = vpop.f32.mrb[0].mxu0
    %1086 = vdwg.mxu0
    %v1087 = vsel %vm330, %v1032, -inf
    %1088 = vmax.xlane.f32.xlu0 %v1087
    %v1089 = vpop.xlane.xlu0 %1088
    %v1090 = vsel %vm330, %v1082, -inf
    %1091 = vmax.xlane.f32.xlu0 %v1090
    %v1092 = vpop.xlane.xlu0 %1091
    %v1093 = vsub.f32 %v1032, %v1089
    %v1094 = vsub.f32 %v1082, %v1092
    %v1095 = vmul.f32 %v1093, 1.442695
    %v1096 = vpow.pop %v1095
    %v1097 = vmul.f32 %v1094, 1.442695
    %v1098 = vpow.pop %v1097
    %v1099 = vsel %vm330, %v1096, 0.0
    %1100 = vadd.xlane.f32.xlu0 %v1099
    %v1101 = vpop.xlane.xlu0 %1100
    %v1102 = vsel %vm330, %v1098, 0.0
    %1103 = vadd.xlane.f32.xlu0 %v1102
    %v1104 = vpop.xlane.xlu0 %1103
    %v1105 = vrcp.pop %v1101
    %v1106 = vrcp.pop %v1104
    %v1107 = vmul.f32 %v1096, %v1105
    %v1108 = vmul.f32 %v1098, %v1106
    %v1109 = vpack.c.bf16 %v1107, %v1107
    %v1110 = vpack.c.bf16 %v1108, %v1108
    %1111 = vrot.lane.b32.xlu0 %v325, 40
    %v1112 = vpop.permute.xlu0 %1111
    %v1114 = vsel %vm330, %v1109, 0
    %v1117 = vsel %vm455, %v1112, 0
    %1119 = vmatprep.subr.bf16.mxu0 0
    %1120 = vmatpush1.bf16.msra.mxu0 %v1117
    %1121 = vmatprep.subr.bf16.mxu0 0
    %1122 = vmatpush1.bf16.msra.mxu0 0
    %1123 = vmatprep.subr.bf16.mxu0 0
    %1124 = vmatpush1.bf16.msra.mxu0 0
    %1125 = vmatprep.subr.bf16.mxu0 0
    %1126 = vmatpush1.bf16.msra.mxu0 0
    %1127 = vmatprep.subr.bf16.mxu0 0
    %1128 = vmatpush1.bf16.msra.mxu0 0
    %1129 = vmatprep.subr.bf16.mxu0 0
    %1130 = vmatpush1.bf16.msra.mxu0 0
    %1131 = vmatprep.subr.bf16.mxu0 0
    %1132 = vmatpush1.bf16.msra.mxu0 0
    %1133 = vmatprep.subr.bf16.mxu0 0
    %1134 = vmatpush1.bf16.msra.mxu0 0
    %1135 = vmatprep.subr.bf16.mxu0 0
    %1136 = vmatpush1.bf16.msra.mxu0 0
    %1137 = vmatprep.subr.bf16.mxu0 0
    %1138 = vmatpush1.bf16.msra.mxu0 0
    %1139 = vmatprep.subr.bf16.mxu0 0
    %1140 = vmatpush1.bf16.msra.mxu0 0
    %1141 = vmatprep.subr.bf16.mxu0 0
    %1142 = vmatpush1.bf16.msra.mxu0 0
    %1143 = vmatprep.subr.bf16.mxu0 0
    %1144 = vmatpush1.bf16.msra.mxu0 0
    %1145 = vmatprep.subr.bf16.mxu0 0
    %1146 = vmatpush1.bf16.msra.mxu0 0
    %1147 = vmatprep.subr.bf16.mxu0 0
    %1148 = vmatpush1.bf16.msra.mxu0 0
    %1149 = vmatprep.subr.bf16.mxu0 0
    %1150 = vmatpush1.bf16.msra.mxu0 0
    %1151 = vmatprep.mubr.bf16.mxu0 0
    %1152 = vmatmul.mubr.bf16.gmra.mrb[0].mxu0 %v1114
    %v1153 = vpop.f32.mrb[0].mxu0
    %v1154 = vadd.f32 0.0, %v1153
    %v1155 = vpop.f32.mrb[0].mxu0
    %v1156 = vpop.f32.mrb[0].mxu0
    %v1157 = vpop.f32.mrb[0].mxu0
    %1158 = vdwg.mxu0
    %1159 = vrot.lane.b32.xlu0 %v326, 40
    %v1160 = vpop.permute.xlu0 %1159
    %v1162 = vsel %vm330, %v1110, 0
    %v1165 = vsel %vm455, %v1160, 0
    %1167 = vmatprep.subr.bf16.mxu0 0
    %1168 = vmatpush1.bf16.msra.mxu0 %v1165
    %1169 = vmatprep.subr.bf16.mxu0 0
    %1170 = vmatpush1.bf16.msra.mxu0 0
    %1171 = vmatprep.subr.bf16.mxu0 0
    %1172 = vmatpush1.bf16.msra.mxu0 0
    %1173 = vmatprep.subr.bf16.mxu0 0
    %1174 = vmatpush1.bf16.msra.mxu0 0
    %1175 = vmatprep.subr.bf16.mxu0 0
    %1176 = vmatpush1.bf16.msra.mxu0 0
    %1177 = vmatprep.subr.bf16.mxu0 0
    %1178 = vmatpush1.bf16.msra.mxu0 0
    %1179 = vmatprep.subr.bf16.mxu0 0
    %1180 = vmatpush1.bf16.msra.mxu0 0
    %1181 = vmatprep.subr.bf16.mxu0 0
    %1182 = vmatpush1.bf16.msra.mxu0 0
    %1183 = vmatprep.subr.bf16.mxu0 0
    %1184 = vmatpush1.bf16.msra.mxu0 0
    %1185 = vmatprep.subr.bf16.mxu0 0
    %1186 = vmatpush1.bf16.msra.mxu0 0
    %1187 = vmatprep.subr.bf16.mxu0 0
    %1188 = vmatpush1.bf16.msra.mxu0 0
    %1189 = vmatprep.subr.bf16.mxu0 0
    %1190 = vmatpush1.bf16.msra.mxu0 0
    %1191 = vmatprep.subr.bf16.mxu0 0
    %1192 = vmatpush1.bf16.msra.mxu0 0
    %1193 = vmatprep.subr.bf16.mxu0 0
    %1194 = vmatpush1.bf16.msra.mxu0 0
    %1195 = vmatprep.subr.bf16.mxu0 0
    %1196 = vmatpush1.bf16.msra.mxu0 0
    %1197 = vmatprep.subr.bf16.mxu0 0
    %1198 = vmatpush1.bf16.msra.mxu0 0
    %1199 = vmatprep.mubr.bf16.mxu0 0
    %1200 = vmatmul.mubr.bf16.gmra.mrb[0].mxu0 %v1162
    %v1201 = vpop.f32.mrb[0].mxu0
    %v1202 = vadd.f32 0.0, %v1201
    %v1203 = vpop.f32.mrb[0].mxu0
    %v1204 = vpop.f32.mrb[0].mxu0
    %v1205 = vpop.f32.mrb[0].mxu0
    %1206 = vdwg.mxu0
    %1209 = vrot.lane.b32.xlu0 %v714, 8
    %v1210 = vpop.permute.xlu0 %1209
    %1211 = vrot.lane.b32.xlu0 %v762, 8
    %v1212 = vpop.permute.xlu0 %1211
    %1217 = vrot.lane.b32.xlu0 %v934, 16
    %v1218 = vpop.permute.xlu0 %1217
    %1219 = vrot.lane.b32.xlu0 %v982, 16
    %v1220 = vpop.permute.xlu0 %1219
    %1225 = vrot.lane.b32.xlu0 %v1154, 24
    %v1226 = vpop.permute.xlu0 %1225
    %1227 = vrot.lane.b32.xlu0 %v1202, 24
    %v1228 = vpop.permute.xlu0 %1227
    %v1231 = vsel %vm330, %v494, %v1210
    %v1232 = vsel %vm330, %v542, %v1212
    %vm1233 = vcmask 130048
    %v1234 = vsel %vm1233, %v1231, %v1218
    %v1235 = vsel %vm1233, %v1232, %v1220
    %vm1236 = vcmask 195584
    %v1237 = vsel %vm1236, %v1234, %v1226
    %v1238 = vsel %vm1236, %v1235, %v1228
    %v1239 = vpack.c.bf16 %v1238, %v1237
    %v1244 = vunpack.c.l.b16 %v321
    %v1245 = vunpack.c.l.b16 %v322
    %v1246 = vunpack.c.l.b16 %v323
    %v1247 = vunpack.c.l.b16 %v324
    %v1248 = vpack.c.b16 %v1245, %v1244
    %v1249 = vpack.c.b16 %v1247, %v1246
    %v1253 = vsel %vm187, %v1239, 0
    %1255 = vmatprep.subr.bf16.mxu0 0
    %1256 = vmatpush1.bf16.msra.mxu0 %v1248
    %1257 = vmatprep.subr.bf16.mxu0 0
    %1258 = vmatpush1.bf16.msra.mxu0 %v1249
    %1259 = vmatprep.subr.bf16.mxu0 0
    %1260 = vmatpush1.bf16.msra.mxu0 0
    %1261 = vmatprep.subr.bf16.mxu0 0
    %1262 = vmatpush1.bf16.msra.mxu0 0
    %1263 = vmatprep.subr.bf16.mxu0 0
    %1264 = vmatpush1.bf16.msra.mxu0 0
    %1265 = vmatprep.subr.bf16.mxu0 0
    %1266 = vmatpush1.bf16.msra.mxu0 0
    %1267 = vmatprep.subr.bf16.mxu0 0
    %1268 = vmatpush1.bf16.msra.mxu0 0
    %1269 = vmatprep.subr.bf16.mxu0 0
    %1270 = vmatpush1.bf16.msra.mxu0 0
    %1271 = vmatprep.subr.bf16.mxu0 0
    %1272 = vmatpush1.bf16.msra.mxu0 0
    %1273 = vmatprep.subr.bf16.mxu0 0
    %1274 = vmatpush1.bf16.msra.mxu0 0
    %1275 = vmatprep.subr.bf16.mxu0 0
    %1276 = vmatpush1.bf16.msra.mxu0 0
    %1277 = vmatprep.subr.bf16.mxu0 0
    %1278 = vmatpush1.bf16.msra.mxu0 0
    %1279 = vmatprep.subr.bf16.mxu0 0
    %1280 = vmatpush1.bf16.msra.mxu0 0
    %1281 = vmatprep.subr.bf16.mxu0 0
    %1282 = vmatpush1.bf16.msra.mxu0 0
    %1283 = vmatprep.subr.bf16.mxu0 0
    %1284 = vmatpush1.bf16.msra.mxu0 0
    %1285 = vmatprep.subr.bf16.mxu0 0
    %1286 = vmatpush1.bf16.msra.mxu0 0
    %1287 = vmatprep.mubr.bf16.mxu0 0
    %1288 = vmatmul.mubr.bf16.gmra.mrb[0].mxu0 %v1253
    %v1289 = vpop.f32.mrb[0].mxu0
    %v1290 = vadd.f32 0.0, %v1289
    %v1291 = vpop.f32.mrb[0].mxu0
    %v1292 = vpop.f32.mrb[0].mxu0
    %v1293 = vadd.f32 0.0, %v1292
    %v1294 = vpop.f32.mrb[0].mxu0
    %1295 = vdwg.mxu0
    %v1296 = vadd.f32 %v173, %v1290
    %v1297 = vadd.f32 %v174, %v1293
    %v1298 = vld [vmem:[%s15] sm:$0x1]
    %v1299 = vld [vmem:[%s16] sm:$0x1]
    %v1300 = vsel %vm187, %v1296, 0.0
    %1301 = vadd.xlane.f32.xlu0 %v1300
    %v1302 = vpop.xlane.xlu0 %1301
    %v1303 = vsel %vm187, %v1297, 0.0
    %1304 = vadd.xlane.f32.xlu0 %v1303
    %v1305 = vpop.xlane.xlu0 %1304
    %v1306 = vmul.f32 %v1302, %v194
    %v1307 = vmul.f32 %v1305, %v194
    %v1308 = vsub.f32 %v1296, %v1306
    %v1309 = vsub.f32 %v1297, %v1307
    %v1310 = vmul.f32 %v1308, %v1308
    %v1311 = vmul.f32 %v1309, %v1309
    %v1312 = vsel %vm187, %v1310, 0.0
    %1313 = vadd.xlane.f32.xlu0 %v1312
    %v1314 = vpop.xlane.xlu0 %1313
    %v1315 = vsel %vm187, %v1311, 0.0
    %1316 = vadd.xlane.f32.xlu0 %v1315
    %v1317 = vpop.xlane.xlu0 %1316
    %v1318 = vmul.f32 %v1314, %v194
    %v1319 = vmul.f32 %v1317, %v194
    %v1320 = vadd.f32 %v1318, 1e-05
    %v1321 = vadd.f32 %v1319, 1e-05
    %v1322 = vrsqrt.pop %v1320
    %v1323 = vrsqrt.pop %v1321
    %v1324 = vmul.f32 %v1308, %v1322
    %v1325 = vmul.f32 %v1309, %v1323
    %v1327 = vlaneseq
    %v1328 = vshrl.u32 %v1327, 7
    %v1329 = vsub.s32 0, %v1328
    %v1330 = vrot.slane %v1298, %v1329
    %v1332 = vmul.f32 %v1324, %v1330
    %v1333 = vmul.f32 %v1325, %v1330
    %v1335 = vlaneseq
    %v1336 = vshrl.u32 %v1335, 7
    %v1337 = vsub.s32 0, %v1336
    %v1338 = vrot.slane %v1299, %v1337
    %v1340 = vadd.f32 %v1332, %v1338
    %v1341 = vadd.f32 %v1333, %v1338
    %v1342 = vadd.f32 %v1340, %v175
    %v1343 = vadd.f32 %v1341, %v176
    %v1344 = vpack.c.bf16 %v1343, %v1342
    %v1345 = vld [vmem:[#allocation11] sm:$0xf]
    %v1346 = vld [vmem:[#allocation11 + $0x4] sm:$0xf]
    %v1347 = vld [vmem:[#allocation11 + $0x8] sm:$0xf]
    %v1348 = vld [vmem:[#allocation11 + $0xc] sm:$0xf]
    %v1353 = vunpack.c.l.b16 %v1345
    %v1354 = vunpack.c.l.b16 %v1346
    %v1355 = vunpack.c.l.b16 %v1347
    %v1356 = vunpack.c.l.b16 %v1348
    %v1357 = vpack.c.b16 %v1354, %v1353
    %v1358 = vpack.c.b16 %v1356, %v1355
    %v1362 = vsel %vm187, %v1344, 0
    %1364 = vmatprep.subr.bf16.mxu0 0
    %1365 = vmatpush1.bf16.msra.mxu0 %v1357
    %1366 = vmatprep.subr.bf16.mxu0 0
    %1367 = vmatpush1.bf16.msra.mxu0 %v1358
    %1368 = vmatprep.subr.bf16.mxu0 0
    %1369 = vmatpush1.bf16.msra.mxu0 0
    %1370 = vmatprep.subr.bf16.mxu0 0
    %1371 = vmatpush1.bf16.msra.mxu0 0
    %1372 = vmatprep.subr.bf16.mxu0 0
    %1373 = vmatpush1.bf16.msra.mxu0 0
    %1374 = vmatprep.subr.bf16.mxu0 0
    %1375 = vmatpush1.bf16.msra.mxu0 0
    %1376 = vmatprep.subr.bf16.mxu0 0
    %1377 = vmatpush1.bf16.msra.mxu0 0
    %1378 = vmatprep.subr.bf16.mxu0 0
    %1379 = vmatpush1.bf16.msra.mxu0 0
    %1380 = vmatprep.subr.bf16.mxu0 0
    %1381 = vmatpush1.bf16.msra.mxu0 0
    %1382 = vmatprep.subr.bf16.mxu0 0
    %1383 = vmatpush1.bf16.msra.mxu0 0
    %1384 = vmatprep.subr.bf16.mxu0 0
    %1385 = vmatpush1.bf16.msra.mxu0 0
    %1386 = vmatprep.subr.bf16.mxu0 0
    %1387 = vmatpush1.bf16.msra.mxu0 0
    %1388 = vmatprep.subr.bf16.mxu0 0
    %1389 = vmatpush1.bf16.msra.mxu0 0
    %1390 = vmatprep.subr.bf16.mxu0 0
    %1391 = vmatpush1.bf16.msra.mxu0 0
    %1392 = vmatprep.subr.bf16.mxu0 0
    %1393 = vmatpush1.bf16.msra.mxu0 0
    %1394 = vmatprep.subr.bf16.mxu0 0
    %1395 = vmatpush1.bf16.msra.mxu0 0
    %1396 = vmatprep.mubr.bf16.mxu0 0
    %1397 = vmatmul.mubr.bf16.gmra.mrb[0].mxu0 %v1362
    %v1398 = vpop.f32.mrb[0].mxu0
    %v1399 = vadd.f32 0.0, %v1398
    %v1400 = vpop.f32.mrb[0].mxu0
    %v1401 = vpop.f32.mrb[0].mxu0
    %v1402 = vadd.f32 0.0, %v1401
    %v1403 = vpop.f32.mrb[0].mxu0
    %1404 = vdwg.mxu0
    %v1405 = vadd.f32 %v177, %v181
    %v1406 = vadd.f32 %v178, %v182
    %v1407 = vadd.f32 %v179, %v183
    %v1408 = vadd.f32 %v180, %v184
    %1413 = vrot.lane.b32.xlu0 %v177, 32
    %v1414 = vpop.permute.xlu0 %1413
    %1415 = vrot.lane.b32.xlu0 %v178, 32
    %v1416 = vpop.permute.xlu0 %1415
    %1417 = vrot.lane.b32.xlu0 %v179, 32
    %v1418 = vpop.permute.xlu0 %1417
    %1419 = vrot.lane.b32.xlu0 %v180, 32
    %v1420 = vpop.permute.xlu0 %1419
    %v1425 = vsel %vm187, %v1405, %v1414
    %v1426 = vsel %vm187, %v1406, %v1416
    %v1427 = vsel %vm187, %v1407, %v1418
    %v1428 = vsel %vm187, %v1408, %v1420
    %v1429 = vpack.c.bf16 %v1426, %v1425
    %v1430 = vpack.c.bf16 %v1428, %v1427
    %v1431 = vld [vmem:[%s7] sm:$0xf]
    %v1432 = vld [vmem:[%s7 + $0x4] sm:$0xf]
    %v1433 = vld [vmem:[%s7 + $0x8] sm:$0xf]
    %v1434 = vld [vmem:[%s7 + $0xc] sm:$0xf]
    %v1435 = vld [vmem:[%s7 + $0x10] sm:$0xf]
    %v1436 = vld [vmem:[%s7 + $0x14] sm:$0xf]
    %v1437 = vld [vmem:[%s7 + $0x18] sm:$0xf]
    %v1438 = vld [vmem:[%s7 + $0x1c] sm:$0xf]
    %v1447 = vunpack.c.l.b16 %v1431
    %v1448 = vunpack.c.l.b16 %v1432
    %v1449 = vunpack.c.l.b16 %v1433
    %v1450 = vunpack.c.l.b16 %v1434
    %v1451 = vunpack.c.l.b16 %v1435
    %v1452 = vunpack.c.l.b16 %v1436
    %v1453 = vunpack.c.l.b16 %v1437
    %v1454 = vunpack.c.l.b16 %v1438
    %v1455 = vpack.c.b16 %v1448, %v1447
    %v1456 = vpack.c.b16 %v1450, %v1449
    %v1457 = vpack.c.b16 %v1452, %v1451
    %v1458 = vpack.c.b16 %v1454, %v1453
    %v1464 = vsel %vm276, %v1429, 0
    %v1467 = vsel %vm276, %v1430, 0
    %1469 = vmatprep.subr.bf16.mxu0 0
    %1470 = vmatpush1.bf16.msra.mxu0 %v1455
    %1471 = vmatprep.subr.bf16.mxu0 0
    %1472 = vmatpush1.bf16.msra.mxu0 %v1456
    %1473 = vmatprep.subr.bf16.mxu0 0
    %1474 = vmatpush1.bf16.msra.mxu0 %v1457
    %1475 = vmatprep.subr.bf16.mxu0 0
    %1476 = vmatpush1.bf16.msra.mxu0 %v1458
    %1477 = vmatprep.subr.bf16.mxu0 0
    %1478 = vmatpush1.bf16.msra.mxu0 0
    %1479 = vmatprep.subr.bf16.mxu0 0
    %1480 = vmatpush1.bf16.msra.mxu0 0
    %1481 = vmatprep.subr.bf16.mxu0 0
    %1482 = vmatpush1.bf16.msra.mxu0 0
    %1483 = vmatprep.subr.bf16.mxu0 0
    %1484 = vmatpush1.bf16.msra.mxu0 0
    %1485 = vmatprep.subr.bf16.mxu0 0
    %1486 = vmatpush1.bf16.msra.mxu0 0
    %1487 = vmatprep.subr.bf16.mxu0 0
    %1488 = vmatpush1.bf16.msra.mxu0 0
    %1489 = vmatprep.subr.bf16.mxu0 0
    %1490 = vmatpush1.bf16.msra.mxu0 0
    %1491 = vmatprep.subr.bf16.mxu0 0
    %1492 = vmatpush1.bf16.msra.mxu0 0
    %1493 = vmatprep.subr.bf16.mxu0 0
    %1494 = vmatpush1.bf16.msra.mxu0 0
    %1495 = vmatprep.subr.bf16.mxu0 0
    %1496 = vmatpush1.bf16.msra.mxu0 0
    %1497 = vmatprep.subr.bf16.mxu0 0
    %1498 = vmatpush1.bf16.msra.mxu0 0
    %1499 = vmatprep.subr.bf16.mxu0 0
    %1500 = vmatpush1.bf16.msra.mxu0 0
    %1501 = vmatprep.mubr.bf16.mxu0 0
    %1502 = vmatmul.mubr.bf16.gmra.mrb[0].mxu0 %v1464
    %v1503 = vpop.f32.mrb[0].mxu0
    %v1504 = vadd.f32 0.0, %v1503
    %v1505 = vpop.f32.mrb[0].mxu0
    %v1506 = vpop.f32.mrb[0].mxu0
    %v1507 = vadd.f32 0.0, %v1506
    %v1508 = vpop.f32.mrb[0].mxu0
    %1509 = vmatprep.mubr.bf16.mxu0 0
    %1510 = vmatmul.mubr.bf16.gmra.mrb[0].mxu0 %v1467
    %v1511 = vpop.f32.mrb[0].mxu0
    %v1512 = vadd.f32 0.0, %v1511
    %v1513 = vpop.f32.mrb[0].mxu0
    %v1514 = vpop.f32.mrb[0].mxu0
    %v1515 = vadd.f32 0.0, %v1514
    %v1516 = vpop.f32.mrb[0].mxu0
    %1517 = vdwg.mxu0
    %v1518 = vld [vmem:[#allocation13] sm:$0xf]
    %v1519 = vld [vmem:[#allocation13 + $0x4] sm:$0xf]
    %v1520 = vld [vmem:[#allocation13 + $0x8] sm:$0xf]
    %v1521 = vld [vmem:[#allocation13 + $0xc] sm:$0xf]
    %v1522 = vpack.c.bf16 %v1399, %v1399
    %v1523 = vpack.c.bf16 %v1402, %v1402
    %v1524 = vpack.c.bf16 %v1507, %v1504
    %v1525 = vpack.c.bf16 %v1515, %v1512
    %v1527 = vsel %vm330, %v1522, 0
    %v1530 = vsel %vm330, %v1524, 0
    %1532 = vmatprep.subr.bf16.mxu0 0
    %1533 = vmatpush1.bf16.xpose.msra.mxu0 %v1530
    %1534 = vmatprep.subr.bf16.mxu0 0
    %1535 = vmatpush1.bf16.xpose.msra.mxu0 0
    %1536 = vmatprep.subr.bf16.mxu0 0
    %1537 = vmatpush1.bf16.xpose.msra.mxu0 0
    %1538 = vmatprep.subr.bf16.mxu0 0
    %1539 = vmatpush1.bf16.xpose.msra.mxu0 0
    %1540 = vmatprep.subr.bf16.mxu0 0
    %1541 = vmatpush1.bf16.xpose.msra.mxu0 0
    %1542 = vmatprep.subr.bf16.mxu0 0
    %1543 = vmatpush1.bf16.xpose.msra.mxu0 0
    %1544 = vmatprep.subr.bf16.mxu0 0
    %1545 = vmatpush1.bf16.xpose.msra.mxu0 0
    %1546 = vmatprep.subr.bf16.mxu0 0
    %1547 = vmatpush1.bf16.xpose.msra.mxu0 0
    %1548 = vmatprep.subr.bf16.mxu0 0
    %1549 = vmatpush1.bf16.xpose.msra.mxu0 0
    %1550 = vmatprep.subr.bf16.mxu0 0
    %1551 = vmatpush1.bf16.xpose.msra.mxu0 0
    %1552 = vmatprep.subr.bf16.mxu0 0
    %1553 = vmatpush1.bf16.xpose.msra.mxu0 0
    %1554 = vmatprep.subr.bf16.mxu0 0
    %1555 = vmatpush1.bf16.xpose.msra.mxu0 0
    %1556 = vmatprep.subr.bf16.mxu0 0
    %1557 = vmatpush1.bf16.xpose.msra.mxu0 0
    %1558 = vmatprep.subr.bf16.mxu0 0
    %1559 = vmatpush1.bf16.xpose.msra.mxu0 0
    %1560 = vmatprep.subr.bf16.mxu0 0
    %1561 = vmatpush1.bf16.xpose.msra.mxu0 0
    %1562 = vmatprep.subr.bf16.mxu0 0
    %1563 = vmatpush1.bf16.xpose.msra.mxu0 0
    %1564 = vmatprep.mubr.bf16.mxu0 0
    %1565 = vmatmul.mubr.bf16.gmra.mrb[0].mxu0 %v1527
    %v1566 = vpop.f32.mrb[0].mxu0
    %v1567 = vadd.f32 0.0, %v1566
    %v1568 = vpop.f32.mrb[0].mxu0
    %v1569 = vpop.f32.mrb[0].mxu0
    %v1570 = vpop.f32.mrb[0].mxu0
    %1571 = vdwg.mxu0
    %v1573 = vsel %vm330, %v1523, 0
    %v1576 = vsel %vm330, %v1525, 0
    %1578 = vmatprep.subr.bf16.mxu0 0
    %1579 = vmatpush1.bf16.xpose.msra.mxu0 %v1576
    %1580 = vmatprep.subr.bf16.mxu0 0
    %1581 = vmatpush1.bf16.xpose.msra.mxu0 0
    %1582 = vmatprep.subr.bf16.mxu0 0
    %1583 = vmatpush1.bf16.xpose.msra.mxu0 0
    %1584 = vmatprep.subr.bf16.mxu0 0
    %1585 = vmatpush1.bf16.xpose.msra.mxu0 0
    %1586 = vmatprep.subr.bf16.mxu0 0
    %1587 = vmatpush1.bf16.xpose.msra.mxu0 0
    %1588 = vmatprep.subr.bf16.mxu0 0
    %1589 = vmatpush1.bf16.xpose.msra.mxu0 0
    %1590 = vmatprep.subr.bf16.mxu0 0
    %1591 = vmatpush1.bf16.xpose.msra.mxu0 0
    %1592 = vmatprep.subr.bf16.mxu0 0
    %1593 = vmatpush1.bf16.xpose.msra.mxu0 0
    %1594 = vmatprep.subr.bf16.mxu0 0
    %1595 = vmatpush1.bf16.xpose.msra.mxu0 0
    %1596 = vmatprep.subr.bf16.mxu0 0
    %1597 = vmatpush1.bf16.xpose.msra.mxu0 0
    %1598 = vmatprep.subr.bf16.mxu0 0
    %1599 = vmatpush1.bf16.xpose.msra.mxu0 0
    %1600 = vmatprep.subr.bf16.mxu0 0
    %1601 = vmatpush1.bf16.xpose.msra.mxu0 0
    %1602 = vmatprep.subr.bf16.mxu0 0
    %1603 = vmatpush1.bf16.xpose.msra.mxu0 0
    %1604 = vmatprep.subr.bf16.mxu0 0
    %1605 = vmatpush1.bf16.xpose.msra.mxu0 0
    %1606 = vmatprep.subr.bf16.mxu0 0
    %1607 = vmatpush1.bf16.xpose.msra.mxu0 0
    %1608 = vmatprep.subr.bf16.mxu0 0
    %1609 = vmatpush1.bf16.xpose.msra.mxu0 0
    %1610 = vmatprep.mubr.bf16.mxu0 0
    %1611 = vmatmul.mubr.bf16.gmra.mrb[0].mxu0 %v1573
    %v1612 = vpop.f32.mrb[0].mxu0
    %v1613 = vadd.f32 0.0, %v1612
    %v1614 = vpop.f32.mrb[0].mxu0
    %v1615 = vpop.f32.mrb[0].mxu0
    %v1616 = vpop.f32.mrb[0].mxu0
    %1617 = vdwg.mxu0
    %v1618 = vsel %vm1233, %v1567, -inf
    %1619 = vmax.xlane.f32.xlu0 %v1618
    %v1620 = vpop.xlane.xlu0 %1619
    %v1621 = vsel %vm1233, %v1613, -inf
    %1622 = vmax.xlane.f32.xlu0 %v1621
    %v1623 = vpop.xlane.xlu0 %1622
    %v1624 = vsub.f32 %v1567, %v1620
    %v1625 = vsub.f32 %v1613, %v1623
    %v1626 = vmul.f32 %v1624, 1.442695
    %v1627 = vpow.pop %v1626
    %v1628 = vmul.f32 %v1625, 1.442695
    %v1629 = vpow.pop %v1628
    %v1630 = vsel %vm1233, %v1627, 0.0
    %1631 = vadd.xlane.f32.xlu0 %v1630
    %v1632 = vpop.xlane.xlu0 %1631
    %v1633 = vsel %vm1233, %v1629, 0.0
    %1634 = vadd.xlane.f32.xlu0 %v1633
    %v1635 = vpop.xlane.xlu0 %1634
    %v1636 = vrcp.pop %v1632
    %v1637 = vrcp.pop %v1635
    %v1638 = vmul.f32 %v1627, %v1636
    %v1639 = vmul.f32 %v1629, %v1637
    %v1640 = vpack.c.bf16 %v1638, %v1638
    %v1641 = vpack.c.bf16 %v1639, %v1639
    %1643 = vrot.lane.b32.xlu0 %v1524, 96
    %v1644 = vpop.permute.xlu0 %1643
    %v1647 = vsel %vm1233, %v1640, 0
    %1649 = vmatprep.subr.bf16.mxu0 0
    %1650 = vmatpush1.bf16.msra.mxu0 %v1644
    %1651 = vmatprep.subr.bf16.mxu0 0
    %1652 = vmatpush1.bf16.msra.mxu0 0
    %1653 = vmatprep.subr.bf16.mxu0 0
    %1654 = vmatpush1.bf16.msra.mxu0 0
    %1655 = vmatprep.subr.bf16.mxu0 0
    %1656 = vmatpush1.bf16.msra.mxu0 0
    %1657 = vmatprep.subr.bf16.mxu0 0
    %1658 = vmatpush1.bf16.msra.mxu0 0
    %1659 = vmatprep.subr.bf16.mxu0 0
    %1660 = vmatpush1.bf16.msra.mxu0 0
    %1661 = vmatprep.subr.bf16.mxu0 0
    %1662 = vmatpush1.bf16.msra.mxu0 0
    %1663 = vmatprep.subr.bf16.mxu0 0
    %1664 = vmatpush1.bf16.msra.mxu0 0
    %1665 = vmatprep.subr.bf16.mxu0 0
    %1666 = vmatpush1.bf16.msra.mxu0 0
    %1667 = vmatprep.subr.bf16.mxu0 0
    %1668 = vmatpush1.bf16.msra.mxu0 0
    %1669 = vmatprep.subr.bf16.mxu0 0
    %1670 = vmatpush1.bf16.msra.mxu0 0
    %1671 = vmatprep.subr.bf16.mxu0 0
    %1672 = vmatpush1.bf16.msra.mxu0 0
    %1673 = vmatprep.subr.bf16.mxu0 0
    %1674 = vmatpush1.bf16.msra.mxu0 0
    %1675 = vmatprep.subr.bf16.mxu0 0
    %1676 = vmatpush1.bf16.msra.mxu0 0
    %1677 = vmatprep.subr.bf16.mxu0 0
    %1678 = vmatpush1.bf16.msra.mxu0 0
    %1679 = vmatprep.subr.bf16.mxu0 0
    %1680 = vmatpush1.bf16.msra.mxu0 0
    %1681 = vmatprep.mubr.bf16.mxu0 0
    %1682 = vmatmul.mubr.bf16.gmra.mrb[0].mxu0 %v1647
    %v1683 = vpop.f32.mrb[0].mxu0
    %v1684 = vadd.f32 0.0, %v1683
    %v1685 = vpop.f32.mrb[0].mxu0
    %v1686 = vpop.f32.mrb[0].mxu0
    %v1687 = vpop.f32.mrb[0].mxu0
    %1688 = vdwg.mxu0
    %1690 = vrot.lane.b32.xlu0 %v1525, 96
    %v1691 = vpop.permute.xlu0 %1690
    %v1694 = vsel %vm1233, %v1641, 0
    %1696 = vmatprep.subr.bf16.mxu0 0
    %1697 = vmatpush1.bf16.msra.mxu0 %v1691
    %1698 = vmatprep.subr.bf16.mxu0 0
    %1699 = vmatpush1.bf16.msra.mxu0 0
    %1700 = vmatprep.subr.bf16.mxu0 0
    %1701 = vmatpush1.bf16.msra.mxu0 0
    %1702 = vmatprep.subr.bf16.mxu0 0
    %1703 = vmatpush1.bf16.msra.mxu0 0
    %1704 = vmatprep.subr.bf16.mxu0 0
    %1705 = vmatpush1.bf16.msra.mxu0 0
    %1706 = vmatprep.subr.bf16.mxu0 0
    %1707 = vmatpush1.bf16.msra.mxu0 0
    %1708 = vmatprep.subr.bf16.mxu0 0
    %1709 = vmatpush1.bf16.msra.mxu0 0
    %1710 = vmatprep.subr.bf16.mxu0 0
    %1711 = vmatpush1.bf16.msra.mxu0 0
    %1712 = vmatprep.subr.bf16.mxu0 0
    %1713 = vmatpush1.bf16.msra.mxu0 0
    %1714 = vmatprep.subr.bf16.mxu0 0
    %1715 = vmatpush1.bf16.msra.mxu0 0
    %1716 = vmatprep.subr.bf16.mxu0 0
    %1717 = vmatpush1.bf16.msra.mxu0 0
    %1718 = vmatprep.subr.bf16.mxu0 0
    %1719 = vmatpush1.bf16.msra.mxu0 0
    %1720 = vmatprep.subr.bf16.mxu0 0
    %1721 = vmatpush1.bf16.msra.mxu0 0
    %1722 = vmatprep.subr.bf16.mxu0 0
    %1723 = vmatpush1.bf16.msra.mxu0 0
    %1724 = vmatprep.subr.bf16.mxu0 0
    %1725 = vmatpush1.bf16.msra.mxu0 0
    %1726 = vmatprep.subr.bf16.mxu0 0
    %1727 = vmatpush1.bf16.msra.mxu0 0
    %1728 = vmatprep.mubr.bf16.mxu0 0
    %1729 = vmatmul.mubr.bf16.gmra.mrb[0].mxu0 %v1694
    %v1730 = vpop.f32.mrb[0].mxu0
    %v1731 = vadd.f32 0.0, %v1730
    %v1732 = vpop.f32.mrb[0].mxu0
    %v1733 = vpop.f32.mrb[0].mxu0
    %v1734 = vpop.f32.mrb[0].mxu0
    %1735 = vdwg.mxu0
    %1737 = vrot.lane.b32.xlu0 %v1522, 120
    %v1738 = vpop.permute.xlu0 %1737
    %1739 = vrot.lane.b32.xlu0 %v1524, 120
    %v1740 = vpop.permute.xlu0 %1739
    %v1742 = vsel %vm330, %v1738, 0
    %v1745 = vsel %vm330, %v1740, 0
    %1747 = vmatprep.subr.bf16.mxu0 0
    %1748 = vmatpush1.bf16.xpose.msra.mxu0 %v1745
    %1749 = vmatprep.subr.bf16.mxu0 0
    %1750 = vmatpush1.bf16.xpose.msra.mxu0 0
    %1751 = vmatprep.subr.bf16.mxu0 0
    %1752 = vmatpush1.bf16.xpose.msra.mxu0 0
    %1753 = vmatprep.subr.bf16.mxu0 0
    %1754 = vmatpush1.bf16.xpose.msra.mxu0 0
    %1755 = vmatprep.subr.bf16.mxu0 0
    %1756 = vmatpush1.bf16.xpose.msra.mxu0 0
    %1757 = vmatprep.subr.bf16.mxu0 0
    %1758 = vmatpush1.bf16.xpose.msra.mxu0 0
    %1759 = vmatprep.subr.bf16.mxu0 0
    %1760 = vmatpush1.bf16.xpose.msra.mxu0 0
    %1761 = vmatprep.subr.bf16.mxu0 0
    %1762 = vmatpush1.bf16.xpose.msra.mxu0 0
    %1763 = vmatprep.subr.bf16.mxu0 0
    %1764 = vmatpush1.bf16.xpose.msra.mxu0 0
    %1765 = vmatprep.subr.bf16.mxu0 0
    %1766 = vmatpush1.bf16.xpose.msra.mxu0 0
    %1767 = vmatprep.subr.bf16.mxu0 0
    %1768 = vmatpush1.bf16.xpose.msra.mxu0 0
    %1769 = vmatprep.subr.bf16.mxu0 0
    %1770 = vmatpush1.bf16.xpose.msra.mxu0 0
    %1771 = vmatprep.subr.bf16.mxu0 0
    %1772 = vmatpush1.bf16.xpose.msra.mxu0 0
    %1773 = vmatprep.subr.bf16.mxu0 0
    %1774 = vmatpush1.bf16.xpose.msra.mxu0 0
    %1775 = vmatprep.subr.bf16.mxu0 0
    %1776 = vmatpush1.bf16.xpose.msra.mxu0 0
    %1777 = vmatprep.subr.bf16.mxu0 0
    %1778 = vmatpush1.bf16.xpose.msra.mxu0 0
    %1779 = vmatprep.mubr.bf16.mxu0 0
    %1780 = vmatmul.mubr.bf16.gmra.mrb[0].mxu0 %v1742
    %v1781 = vpop.f32.mrb[0].mxu0
    %v1782 = vadd.f32 0.0, %v1781
    %v1783 = vpop.f32.mrb[0].mxu0
    %v1784 = vpop.f32.mrb[0].mxu0
    %v1785 = vpop.f32.mrb[0].mxu0
    %1786 = vdwg.mxu0
    %1788 = vrot.lane.b32.xlu0 %v1523, 120
    %v1789 = vpop.permute.xlu0 %1788
    %1790 = vrot.lane.b32.xlu0 %v1525, 120
    %v1791 = vpop.permute.xlu0 %1790
    %v1793 = vsel %vm330, %v1789, 0
    %v1796 = vsel %vm330, %v1791, 0
    %1798 = vmatprep.subr.bf16.mxu0 0
    %1799 = vmatpush1.bf16.xpose.msra.mxu0 %v1796
    %1800 = vmatprep.subr.bf16.mxu0 0
    %1801 = vmatpush1.bf16.xpose.msra.mxu0 0
    %1802 = vmatprep.subr.bf16.mxu0 0
    %1803 = vmatpush1.bf16.xpose.msra.mxu0 0
    %1804 = vmatprep.subr.bf16.mxu0 0
    %1805 = vmatpush1.bf16.xpose.msra.mxu0 0
    %1806 = vmatprep.subr.bf16.mxu0 0
    %1807 = vmatpush1.bf16.xpose.msra.mxu0 0
    %1808 = vmatprep.subr.bf16.mxu0 0
    %1809 = vmatpush1.bf16.xpose.msra.mxu0 0
    %1810 = vmatprep.subr.bf16.mxu0 0
    %1811 = vmatpush1.bf16.xpose.msra.mxu0 0
    %1812 = vmatprep.subr.bf16.mxu0 0
    %1813 = vmatpush1.bf16.xpose.msra.mxu0 0
    %1814 = vmatprep.subr.bf16.mxu0 0
    %1815 = vmatpush1.bf16.xpose.msra.mxu0 0
    %1816 = vmatprep.subr.bf16.mxu0 0
    %1817 = vmatpush1.bf16.xpose.msra.mxu0 0
    %1818 = vmatprep.subr.bf16.mxu0 0
    %1819 = vmatpush1.bf16.xpose.msra.mxu0 0
    %1820 = vmatprep.subr.bf16.mxu0 0
    %1821 = vmatpush1.bf16.xpose.msra.mxu0 0
    %1822 = vmatprep.subr.bf16.mxu0 0
    %1823 = vmatpush1.bf16.xpose.msra.mxu0 0
    %1824 = vmatprep.subr.bf16.mxu0 0
    %1825 = vmatpush1.bf16.xpose.msra.mxu0 0
    %1826 = vmatprep.subr.bf16.mxu0 0
    %1827 = vmatpush1.bf16.xpose.msra.mxu0 0
    %1828 = vmatprep.subr.bf16.mxu0 0
    %1829 = vmatpush1.bf16.xpose.msra.mxu0 0
    %1830 = vmatprep.mubr.bf16.mxu0 0
    %1831 = vmatmul.mubr.bf16.gmra.mrb[0].mxu0 %v1793
    %v1832 = vpop.f32.mrb[0].mxu0
    %v1833 = vadd.f32 0.0, %v1832
    %v1834 = vpop.f32.mrb[0].mxu0
    %v1835 = vpop.f32.mrb[0].mxu0
    %v1836 = vpop.f32.mrb[0].mxu0
    %1837 = vdwg.mxu0
    %v1838 = vsel %vm1233, %v1782, -inf
    %1839 = vmax.xlane.f32.xlu0 %v1838
    %v1840 = vpop.xlane.xlu0 %1839
    %v1841 = vsel %vm1233, %v1833, -inf
    %1842 = vmax.xlane.f32.xlu0 %v1841
    %v1843 = vpop.xlane.xlu0 %1842
    %v1844 = vsub.f32 %v1782, %v1840
    %v1845 = vsub.f32 %v1833, %v1843
    %v1846 = vmul.f32 %v1844, 1.442695
    %v1847 = vpow.pop %v1846
    %v1848 = vmul.f32 %v1845, 1.442695
    %v1849 = vpow.pop %v1848
    %v1850 = vsel %vm1233, %v1847, 0.0
    %1851 = vadd.xlane.f32.xlu0 %v1850
    %v1852 = vpop.xlane.xlu0 %1851
    %v1853 = vsel %vm1233, %v1849, 0.0
    %1854 = vadd.xlane.f32.xlu0 %v1853
    %v1855 = vpop.xlane.xlu0 %1854
    %v1856 = vrcp.pop %v1852
    %v1857 = vrcp.pop %v1855
    %v1858 = vmul.f32 %v1847, %v1856
    %v1859 = vmul.f32 %v1849, %v1857
    %v1860 = vpack.c.bf16 %v1858, %v1858
    %v1861 = vpack.c.bf16 %v1859, %v1859
    %1862 = vrot.lane.b32.xlu0 %v1524, 88
    %v1863 = vpop.permute.xlu0 %1862
    %v1866 = vsel %vm1233, %v1860, 0
    %1868 = vmatprep.subr.bf16.mxu0 0
    %1869 = vmatpush1.bf16.msra.mxu0 %v1863
    %1870 = vmatprep.subr.bf16.mxu0 0
    %1871 = vmatpush1.bf16.msra.mxu0 0
    %1872 = vmatprep.subr.bf16.mxu0 0
    %1873 = vmatpush1.bf16.msra.mxu0 0
    %1874 = vmatprep.subr.bf16.mxu0 0
    %1875 = vmatpush1.bf16.msra.mxu0 0
    %1876 = vmatprep.subr.bf16.mxu0 0
    %1877 = vmatpush1.bf16.msra.mxu0 0
    %1878 = vmatprep.subr.bf16.mxu0 0
    %1879 = vmatpush1.bf16.msra.mxu0 0
    %1880 = vmatprep.subr.bf16.mxu0 0
    %1881 = vmatpush1.bf16.msra.mxu0 0
    %1882 = vmatprep.subr.bf16.mxu0 0
    %1883 = vmatpush1.bf16.msra.mxu0 0
    %1884 = vmatprep.subr.bf16.mxu0 0
    %1885 = vmatpush1.bf16.msra.mxu0 0
    %1886 = vmatprep.subr.bf16.mxu0 0
    %1887 = vmatpush1.bf16.msra.mxu0 0
    %1888 = vmatprep.subr.bf16.mxu0 0
    %1889 = vmatpush1.bf16.msra.mxu0 0
    %1890 = vmatprep.subr.bf16.mxu0 0
    %1891 = vmatpush1.bf16.msra.mxu0 0
    %1892 = vmatprep.subr.bf16.mxu0 0
    %1893 = vmatpush1.bf16.msra.mxu0 0
    %1894 = vmatprep.subr.bf16.mxu0 0
    %1895 = vmatpush1.bf16.msra.mxu0 0
    %1896 = vmatprep.subr.bf16.mxu0 0
    %1897 = vmatpush1.bf16.msra.mxu0 0
    %1898 = vmatprep.subr.bf16.mxu0 0
    %1899 = vmatpush1.bf16.msra.mxu0 0
    %1900 = vmatprep.mubr.bf16.mxu0 0
    %1901 = vmatmul.mubr.bf16.gmra.mrb[0].mxu0 %v1866
    %v1902 = vpop.f32.mrb[0].mxu0
    %v1903 = vadd.f32 0.0, %v1902
    %v1904 = vpop.f32.mrb[0].mxu0
    %v1905 = vpop.f32.mrb[0].mxu0
    %v1906 = vpop.f32.mrb[0].mxu0
    %1907 = vdwg.mxu0
    %1908 = vrot.lane.b32.xlu0 %v1525, 88
    %v1909 = vpop.permute.xlu0 %1908
    %v1912 = vsel %vm1233, %v1861, 0
    %1914 = vmatprep.subr.bf16.mxu0 0
    %1915 = vmatpush1.bf16.msra.mxu0 %v1909
    %1916 = vmatprep.subr.bf16.mxu0 0
    %1917 = vmatpush1.bf16.msra.mxu0 0
    %1918 = vmatprep.subr.bf16.mxu0 0
    %1919 = vmatpush1.bf16.msra.mxu0 0
    %1920 = vmatprep.subr.bf16.mxu0 0
    %1921 = vmatpush1.bf16.msra.mxu0 0
    %1922 = vmatprep.subr.bf16.mxu0 0
    %1923 = vmatpush1.bf16.msra.mxu0 0
    %1924 = vmatprep.subr.bf16.mxu0 0
    %1925 = vmatpush1.bf16.msra.mxu0 0
    %1926 = vmatprep.subr.bf16.mxu0 0
    %1927 = vmatpush1.bf16.msra.mxu0 0
    %1928 = vmatprep.subr.bf16.mxu0 0
    %1929 = vmatpush1.bf16.msra.mxu0 0
    %1930 = vmatprep.subr.bf16.mxu0 0
    %1931 = vmatpush1.bf16.msra.mxu0 0
    %1932 = vmatprep.subr.bf16.mxu0 0
    %1933 = vmatpush1.bf16.msra.mxu0 0
    %1934 = vmatprep.subr.bf16.mxu0 0
    %1935 = vmatpush1.bf16.msra.mxu0 0
    %1936 = vmatprep.subr.bf16.mxu0 0
    %1937 = vmatpush1.bf16.msra.mxu0 0
    %1938 = vmatprep.subr.bf16.mxu0 0
    %1939 = vmatpush1.bf16.msra.mxu0 0
    %1940 = vmatprep.subr.bf16.mxu0 0
    %1941 = vmatpush1.bf16.msra.mxu0 0
    %1942 = vmatprep.subr.bf16.mxu0 0
    %1943 = vmatpush1.bf16.msra.mxu0 0
    %1944 = vmatprep.subr.bf16.mxu0 0
    %1945 = vmatpush1.bf16.msra.mxu0 0
    %1946 = vmatprep.mubr.bf16.mxu0 0
    %1947 = vmatmul.mubr.bf16.gmra.mrb[0].mxu0 %v1912
    %v1948 = vpop.f32.mrb[0].mxu0
    %v1949 = vadd.f32 0.0, %v1948
    %v1950 = vpop.f32.mrb[0].mxu0
    %v1951 = vpop.f32.mrb[0].mxu0
    %v1952 = vpop.f32.mrb[0].mxu0
    %1953 = vdwg.mxu0
    %1954 = vrot.lane.b32.xlu0 %v1522, 112
    %v1955 = vpop.permute.xlu0 %1954
    %1956 = vrot.lane.b32.xlu0 %v1524, 112
    %v1957 = vpop.permute.xlu0 %1956
    %v1959 = vsel %vm330, %v1955, 0
    %v1962 = vsel %vm330, %v1957, 0
    %1964 = vmatprep.subr.bf16.mxu0 0
    %1965 = vmatpush1.bf16.xpose.msra.mxu0 %v1962
    %1966 = vmatprep.subr.bf16.mxu0 0
    %1967 = vmatpush1.bf16.xpose.msra.mxu0 0
    %1968 = vmatprep.subr.bf16.mxu0 0
    %1969 = vmatpush1.bf16.xpose.msra.mxu0 0
    %1970 = vmatprep.subr.bf16.mxu0 0
    %1971 = vmatpush1.bf16.xpose.msra.mxu0 0
    %1972 = vmatprep.subr.bf16.mxu0 0
    %1973 = vmatpush1.bf16.xpose.msra.mxu0 0
    %1974 = vmatprep.subr.bf16.mxu0 0
    %1975 = vmatpush1.bf16.xpose.msra.mxu0 0
    %1976 = vmatprep.subr.bf16.mxu0 0
    %1977 = vmatpush1.bf16.xpose.msra.mxu0 0
    %1978 = vmatprep.subr.bf16.mxu0 0
    %1979 = vmatpush1.bf16.xpose.msra.mxu0 0
    %1980 = vmatprep.subr.bf16.mxu0 0
    %1981 = vmatpush1.bf16.xpose.msra.mxu0 0
    %1982 = vmatprep.subr.bf16.mxu0 0
    %1983 = vmatpush1.bf16.xpose.msra.mxu0 0
    %1984 = vmatprep.subr.bf16.mxu0 0
    %1985 = vmatpush1.bf16.xpose.msra.mxu0 0
    %1986 = vmatprep.subr.bf16.mxu0 0
    %1987 = vmatpush1.bf16.xpose.msra.mxu0 0
    %1988 = vmatprep.subr.bf16.mxu0 0
    %1989 = vmatpush1.bf16.xpose.msra.mxu0 0
    %1990 = vmatprep.subr.bf16.mxu0 0
    %1991 = vmatpush1.bf16.xpose.msra.mxu0 0
    %1992 = vmatprep.subr.bf16.mxu0 0
    %1993 = vmatpush1.bf16.xpose.msra.mxu0 0
    %1994 = vmatprep.subr.bf16.mxu0 0
    %1995 = vmatpush1.bf16.xpose.msra.mxu0 0
    %1996 = vmatprep.mubr.bf16.mxu0 0
    %1997 = vmatmul.mubr.bf16.gmra.mrb[0].mxu0 %v1959
    %v1998 = vpop.f32.mrb[0].mxu0
    %v1999 = vadd.f32 0.0, %v1998
    %v2000 = vpop.f32.mrb[0].mxu0
    %v2001 = vpop.f32.mrb[0].mxu0
    %v2002 = vpop.f32.mrb[0].mxu0
    %2003 = vdwg.mxu0
    %2004 = vrot.lane.b32.xlu0 %v1523, 112
    %v2005 = vpop.permute.xlu0 %2004
    %2006 = vrot.lane.b32.xlu0 %v1525, 112
    %v2007 = vpop.permute.xlu0 %2006
    %v2009 = vsel %vm330, %v2005, 0
    %v2012 = vsel %vm330, %v2007, 0
    %2014 = vmatprep.subr.bf16.mxu0 0
    %2015 = vmatpush1.bf16.xpose.msra.mxu0 %v2012
    %2016 = vmatprep.subr.bf16.mxu0 0
    %2017 = vmatpush1.bf16.xpose.msra.mxu0 0
    %2018 = vmatprep.subr.bf16.mxu0 0
    %2019 = vmatpush1.bf16.xpose.msra.mxu0 0
    %2020 = vmatprep.subr.bf16.mxu0 0
    %2021 = vmatpush1.bf16.xpose.msra.mxu0 0
    %2022 = vmatprep.subr.bf16.mxu0 0
    %2023 = vmatpush1.bf16.xpose.msra.mxu0 0
    %2024 = vmatprep.subr.bf16.mxu0 0
    %2025 = vmatpush1.bf16.xpose.msra.mxu0 0
    %2026 = vmatprep.subr.bf16.mxu0 0
    %2027 = vmatpush1.bf16.xpose.msra.mxu0 0
    %2028 = vmatprep.subr.bf16.mxu0 0
    %2029 = vmatpush1.bf16.xpose.msra.mxu0 0
    %2030 = vmatprep.subr.bf16.mxu0 0
    %2031 = vmatpush1.bf16.xpose.msra.mxu0 0
    %2032 = vmatprep.subr.bf16.mxu0 0
    %2033 = vmatpush1.bf16.xpose.msra.mxu0 0
    %2034 = vmatprep.subr.bf16.mxu0 0
    %2035 = vmatpush1.bf16.xpose.msra.mxu0 0
    %2036 = vmatprep.subr.bf16.mxu0 0
    %2037 = vmatpush1.bf16.xpose.msra.mxu0 0
    %2038 = vmatprep.subr.bf16.mxu0 0
    %2039 = vmatpush1.bf16.xpose.msra.mxu0 0
    %2040 = vmatprep.subr.bf16.mxu0 0
    %2041 = vmatpush1.bf16.xpose.msra.mxu0 0
    %2042 = vmatprep.subr.bf16.mxu0 0
    %2043 = vmatpush1.bf16.xpose.msra.mxu0 0
    %2044 = vmatprep.subr.bf16.mxu0 0
    %2045 = vmatpush1.bf16.xpose.msra.mxu0 0
    %2046 = vmatprep.mubr.bf16.mxu0 0
    %2047 = vmatmul.mubr.bf16.gmra.mrb[0].mxu0 %v2009
    %v2048 = vpop.f32.mrb[0].mxu0
    %v2049 = vadd.f32 0.0, %v2048
    %v2050 = vpop.f32.mrb[0].mxu0
    %v2051 = vpop.f32.mrb[0].mxu0
    %v2052 = vpop.f32.mrb[0].mxu0
    %2053 = vdwg.mxu0
    %v2054 = vsel %vm1233, %v1999, -inf
    %2055 = vmax.xlane.f32.xlu0 %v2054
    %v2056 = vpop.xlane.xlu0 %2055
    %v2057 = vsel %vm1233, %v2049, -inf
    %2058 = vmax.xlane.f32.xlu0 %v2057
    %v2059 = vpop.xlane.xlu0 %2058
    %v2060 = vsub.f32 %v1999, %v2056
    %v2061 = vsub.f32 %v2049, %v2059
    %v2062 = vmul.f32 %v2060, 1.442695
    %v2063 = vpow.pop %v2062
    %v2064 = vmul.f32 %v2061, 1.442695
    %v2065 = vpow.pop %v2064
    %v2066 = vsel %vm1233, %v2063, 0.0
    %2067 = vadd.xlane.f32.xlu0 %v2066
    %v2068 = vpop.xlane.xlu0 %2067
    %v2069 = vsel %vm1233, %v2065, 0.0
    %2070 = vadd.xlane.f32.xlu0 %v2069
    %v2071 = vpop.xlane.xlu0 %2070
    %v2072 = vrcp.pop %v2068
    %v2073 = vrcp.pop %v2071
    %v2074 = vmul.f32 %v2063, %v2072
    %v2075 = vmul.f32 %v2065, %v2073
    %v2076 = vpack.c.bf16 %v2074, %v2074
    %v2077 = vpack.c.bf16 %v2075, %v2075
    %2078 = vrot.lane.b32.xlu0 %v1524, 80
    %v2079 = vpop.permute.xlu0 %2078
    %v2082 = vsel %vm1233, %v2076, 0
    %2084 = vmatprep.subr.bf16.mxu0 0
    %2085 = vmatpush1.bf16.msra.mxu0 %v2079
    %2086 = vmatprep.subr.bf16.mxu0 0
    %2087 = vmatpush1.bf16.msra.mxu0 0
    %2088 = vmatprep.subr.bf16.mxu0 0
    %2089 = vmatpush1.bf16.msra.mxu0 0
    %2090 = vmatprep.subr.bf16.mxu0 0
    %2091 = vmatpush1.bf16.msra.mxu0 0
    %2092 = vmatprep.subr.bf16.mxu0 0
    %2093 = vmatpush1.bf16.msra.mxu0 0
    %2094 = vmatprep.subr.bf16.mxu0 0
    %2095 = vmatpush1.bf16.msra.mxu0 0
    %2096 = vmatprep.subr.bf16.mxu0 0
    %2097 = vmatpush1.bf16.msra.mxu0 0
    %2098 = vmatprep.subr.bf16.mxu0 0
    %2099 = vmatpush1.bf16.msra.mxu0 0
    %2100 = vmatprep.subr.bf16.mxu0 0
    %2101 = vmatpush1.bf16.msra.mxu0 0
    %2102 = vmatprep.subr.bf16.mxu0 0
    %2103 = vmatpush1.bf16.msra.mxu0 0
    %2104 = vmatprep.subr.bf16.mxu0 0
    %2105 = vmatpush1.bf16.msra.mxu0 0
    %2106 = vmatprep.subr.bf16.mxu0 0
    %2107 = vmatpush1.bf16.msra.mxu0 0
    %2108 = vmatprep.subr.bf16.mxu0 0
    %2109 = vmatpush1.bf16.msra.mxu0 0
    %2110 = vmatprep.subr.bf16.mxu0 0
    %2111 = vmatpush1.bf16.msra.mxu0 0
    %2112 = vmatprep.subr.bf16.mxu0 0
    %2113 = vmatpush1.bf16.msra.mxu0 0
    %2114 = vmatprep.subr.bf16.mxu0 0
    %2115 = vmatpush1.bf16.msra.mxu0 0
    %2116 = vmatprep.mubr.bf16.mxu0 0
    %2117 = vmatmul.mubr.bf16.gmra.mrb[0].mxu0 %v2082
    %v2118 = vpop.f32.mrb[0].mxu0
    %v2119 = vadd.f32 0.0, %v2118
    %v2120 = vpop.f32.mrb[0].mxu0
    %v2121 = vpop.f32.mrb[0].mxu0
    %v2122 = vpop.f32.mrb[0].mxu0
    %2123 = vdwg.mxu0
    %2124 = vrot.lane.b32.xlu0 %v1525, 80
    %v2125 = vpop.permute.xlu0 %2124
    %v2128 = vsel %vm1233, %v2077, 0
    %2130 = vmatprep.subr.bf16.mxu0 0
    %2131 = vmatpush1.bf16.msra.mxu0 %v2125
    %2132 = vmatprep.subr.bf16.mxu0 0
    %2133 = vmatpush1.bf16.msra.mxu0 0
    %2134 = vmatprep.subr.bf16.mxu0 0
    %2135 = vmatpush1.bf16.msra.mxu0 0
    %2136 = vmatprep.subr.bf16.mxu0 0
    %2137 = vmatpush1.bf16.msra.mxu0 0
    %2138 = vmatprep.subr.bf16.mxu0 0
    %2139 = vmatpush1.bf16.msra.mxu0 0
    %2140 = vmatprep.subr.bf16.mxu0 0
    %2141 = vmatpush1.bf16.msra.mxu0 0
    %2142 = vmatprep.subr.bf16.mxu0 0
    %2143 = vmatpush1.bf16.msra.mxu0 0
    %2144 = vmatprep.subr.bf16.mxu0 0
    %2145 = vmatpush1.bf16.msra.mxu0 0
    %2146 = vmatprep.subr.bf16.mxu0 0
    %2147 = vmatpush1.bf16.msra.mxu0 0
    %2148 = vmatprep.subr.bf16.mxu0 0
    %2149 = vmatpush1.bf16.msra.mxu0 0
    %2150 = vmatprep.subr.bf16.mxu0 0
    %2151 = vmatpush1.bf16.msra.mxu0 0
    %2152 = vmatprep.subr.bf16.mxu0 0
    %2153 = vmatpush1.bf16.msra.mxu0 0
    %2154 = vmatprep.subr.bf16.mxu0 0
    %2155 = vmatpush1.bf16.msra.mxu0 0
    %2156 = vmatprep.subr.bf16.mxu0 0
    %2157 = vmatpush1.bf16.msra.mxu0 0
    %2158 = vmatprep.subr.bf16.mxu0 0
    %2159 = vmatpush1.bf16.msra.mxu0 0
    %2160 = vmatprep.subr.bf16.mxu0 0
    %2161 = vmatpush1.bf16.msra.mxu0 0
    %2162 = vmatprep.mubr.bf16.mxu0 0
    %2163 = vmatmul.mubr.bf16.gmra.mrb[0].mxu0 %v2128
    %v2164 = vpop.f32.mrb[0].mxu0
    %v2165 = vadd.f32 0.0, %v2164
    %v2166 = vpop.f32.mrb[0].mxu0
    %v2167 = vpop.f32.mrb[0].mxu0
    %v2168 = vpop.f32.mrb[0].mxu0
    %2169 = vdwg.mxu0
    %2170 = vrot.lane.b32.xlu0 %v1522, 104
    %v2171 = vpop.permute.xlu0 %2170
    %2172 = vrot.lane.b32.xlu0 %v1524, 104
    %v2173 = vpop.permute.xlu0 %2172
    %v2175 = vsel %vm330, %v2171, 0
    %v2178 = vsel %vm330, %v2173, 0
    %2180 = vmatprep.subr.bf16.mxu0 0
    %2181 = vmatpush1.bf16.xpose.msra.mxu0 %v2178
    %2182 = vmatprep.subr.bf16.mxu0 0
    %2183 = vmatpush1.bf16.xpose.msra.mxu0 0
    %2184 = vmatprep.subr.bf16.mxu0 0
    %2185 = vmatpush1.bf16.xpose.msra.mxu0 0
    %2186 = vmatprep.subr.bf16.mxu0 0
    %2187 = vmatpush1.bf16.xpose.msra.mxu0 0
    %2188 = vmatprep.subr.bf16.mxu0 0
    %2189 = vmatpush1.bf16.xpose.msra.mxu0 0
    %2190 = vmatprep.subr.bf16.mxu0 0
    %2191 = vmatpush1.bf16.xpose.msra.mxu0 0
    %2192 = vmatprep.subr.bf16.mxu0 0
    %2193 = vmatpush1.bf16.xpose.msra.mxu0 0
    %2194 = vmatprep.subr.bf16.mxu0 0
    %2195 = vmatpush1.bf16.xpose.msra.mxu0 0
    %2196 = vmatprep.subr.bf16.mxu0 0
    %2197 = vmatpush1.bf16.xpose.msra.mxu0 0
    %2198 = vmatprep.subr.bf16.mxu0 0
    %2199 = vmatpush1.bf16.xpose.msra.mxu0 0
    %2200 = vmatprep.subr.bf16.mxu0 0
    %2201 = vmatpush1.bf16.xpose.msra.mxu0 0
    %2202 = vmatprep.subr.bf16.mxu0 0
    %2203 = vmatpush1.bf16.xpose.msra.mxu0 0
    %2204 = vmatprep.subr.bf16.mxu0 0
    %2205 = vmatpush1.bf16.xpose.msra.mxu0 0
    %2206 = vmatprep.subr.bf16.mxu0 0
    %2207 = vmatpush1.bf16.xpose.msra.mxu0 0
    %2208 = vmatprep.subr.bf16.mxu0 0
    %2209 = vmatpush1.bf16.xpose.msra.mxu0 0
    %2210 = vmatprep.subr.bf16.mxu0 0
    %2211 = vmatpush1.bf16.xpose.msra.mxu0 0
    %2212 = vmatprep.mubr.bf16.mxu0 0
    %2213 = vmatmul.mubr.bf16.gmra.mrb[0].mxu0 %v2175
    %v2214 = vpop.f32.mrb[0].mxu0
    %v2215 = vadd.f32 0.0, %v2214
    %v2216 = vpop.f32.mrb[0].mxu0
    %v2217 = vpop.f32.mrb[0].mxu0
    %v2218 = vpop.f32.mrb[0].mxu0
    %2219 = vdwg.mxu0
    %2220 = vrot.lane.b32.xlu0 %v1523, 104
    %v2221 = vpop.permute.xlu0 %2220
    %2222 = vrot.lane.b32.xlu0 %v1525, 104
    %v2223 = vpop.permute.xlu0 %2222
    %v2225 = vsel %vm330, %v2221, 0
    %v2228 = vsel %vm330, %v2223, 0
    %2230 = vmatprep.subr.bf16.mxu0 0
    %2231 = vmatpush1.bf16.xpose.msra.mxu0 %v2228
    %2232 = vmatprep.subr.bf16.mxu0 0
    %2233 = vmatpush1.bf16.xpose.msra.mxu0 0
    %2234 = vmatprep.subr.bf16.mxu0 0
    %2235 = vmatpush1.bf16.xpose.msra.mxu0 0
    %2236 = vmatprep.subr.bf16.mxu0 0
    %2237 = vmatpush1.bf16.xpose.msra.mxu0 0
    %2238 = vmatprep.subr.bf16.mxu0 0
    %2239 = vmatpush1.bf16.xpose.msra.mxu0 0
    %2240 = vmatprep.subr.bf16.mxu0 0
    %2241 = vmatpush1.bf16.xpose.msra.mxu0 0
    %2242 = vmatprep.subr.bf16.mxu0 0
    %2243 = vmatpush1.bf16.xpose.msra.mxu0 0
    %2244 = vmatprep.subr.bf16.mxu0 0
    %2245 = vmatpush1.bf16.xpose.msra.mxu0 0
    %2246 = vmatprep.subr.bf16.mxu0 0
    %2247 = vmatpush1.bf16.xpose.msra.mxu0 0
    %2248 = vmatprep.subr.bf16.mxu0 0
    %2249 = vmatpush1.bf16.xpose.msra.mxu0 0
    %2250 = vmatprep.subr.bf16.mxu0 0
    %2251 = vmatpush1.bf16.xpose.msra.mxu0 0
    %2252 = vmatprep.subr.bf16.mxu0 0
    %2253 = vmatpush1.bf16.xpose.msra.mxu0 0
    %2254 = vmatprep.subr.bf16.mxu0 0
    %2255 = vmatpush1.bf16.xpose.msra.mxu0 0
    %2256 = vmatprep.subr.bf16.mxu0 0
    %2257 = vmatpush1.bf16.xpose.msra.mxu0 0
    %2258 = vmatprep.subr.bf16.mxu0 0
    %2259 = vmatpush1.bf16.xpose.msra.mxu0 0
    %2260 = vmatprep.subr.bf16.mxu0 0
    %2261 = vmatpush1.bf16.xpose.msra.mxu0 0
    %2262 = vmatprep.mubr.bf16.mxu0 0
    %2263 = vmatmul.mubr.bf16.gmra.mrb[0].mxu0 %v2225
    %v2264 = vpop.f32.mrb[0].mxu0
    %v2265 = vadd.f32 0.0, %v2264
    %v2266 = vpop.f32.mrb[0].mxu0
    %v2267 = vpop.f32.mrb[0].mxu0
    %v2268 = vpop.f32.mrb[0].mxu0
    %2269 = vdwg.mxu0
    %v2270 = vsel %vm1233, %v2215, -inf
    %2271 = vmax.xlane.f32.xlu0 %v2270
    %v2272 = vpop.xlane.xlu0 %2271
    %v2273 = vsel %vm1233, %v2265, -inf
    %2274 = vmax.xlane.f32.xlu0 %v2273
    %v2275 = vpop.xlane.xlu0 %2274
    %v2276 = vsub.f32 %v2215, %v2272
    %v2277 = vsub.f32 %v2265, %v2275
    %v2278 = vmul.f32 %v2276, 1.442695
    %v2279 = vpow.pop %v2278
    %v2280 = vmul.f32 %v2277, 1.442695
    %v2281 = vpow.pop %v2280
    %v2282 = vsel %vm1233, %v2279, 0.0
    %2283 = vadd.xlane.f32.xlu0 %v2282
    %v2284 = vpop.xlane.xlu0 %2283
    %v2285 = vsel %vm1233, %v2281, 0.0
    %2286 = vadd.xlane.f32.xlu0 %v2285
    %v2287 = vpop.xlane.xlu0 %2286
    %v2288 = vrcp.pop %v2284
    %v2289 = vrcp.pop %v2287
    %v2290 = vmul.f32 %v2279, %v2288
    %v2291 = vmul.f32 %v2281, %v2289
    %v2292 = vpack.c.bf16 %v2290, %v2290
    %v2293 = vpack.c.bf16 %v2291, %v2291
    %2294 = vrot.lane.b32.xlu0 %v1524, 72
    %v2295 = vpop.permute.xlu0 %2294
    %v2298 = vsel %vm1233, %v2292, 0
    %2300 = vmatprep.subr.bf16.mxu0 0
    %2301 = vmatpush1.bf16.msra.mxu0 %v2295
    %2302 = vmatprep.subr.bf16.mxu0 0
    %2303 = vmatpush1.bf16.msra.mxu0 0
    %2304 = vmatprep.subr.bf16.mxu0 0
    %2305 = vmatpush1.bf16.msra.mxu0 0
    %2306 = vmatprep.subr.bf16.mxu0 0
    %2307 = vmatpush1.bf16.msra.mxu0 0
    %2308 = vmatprep.subr.bf16.mxu0 0
    %2309 = vmatpush1.bf16.msra.mxu0 0
    %2310 = vmatprep.subr.bf16.mxu0 0
    %2311 = vmatpush1.bf16.msra.mxu0 0
    %2312 = vmatprep.subr.bf16.mxu0 0
    %2313 = vmatpush1.bf16.msra.mxu0 0
    %2314 = vmatprep.subr.bf16.mxu0 0
    %2315 = vmatpush1.bf16.msra.mxu0 0
    %2316 = vmatprep.subr.bf16.mxu0 0
    %2317 = vmatpush1.bf16.msra.mxu0 0
    %2318 = vmatprep.subr.bf16.mxu0 0
    %2319 = vmatpush1.bf16.msra.mxu0 0
    %2320 = vmatprep.subr.bf16.mxu0 0
    %2321 = vmatpush1.bf16.msra.mxu0 0
    %2322 = vmatprep.subr.bf16.mxu0 0
    %2323 = vmatpush1.bf16.msra.mxu0 0
    %2324 = vmatprep.subr.bf16.mxu0 0
    %2325 = vmatpush1.bf16.msra.mxu0 0
    %2326 = vmatprep.subr.bf16.mxu0 0
    %2327 = vmatpush1.bf16.msra.mxu0 0
    %2328 = vmatprep.subr.bf16.mxu0 0
    %2329 = vmatpush1.bf16.msra.mxu0 0
    %2330 = vmatprep.subr.bf16.mxu0 0
    %2331 = vmatpush1.bf16.msra.mxu0 0
    %2332 = vmatprep.mubr.bf16.mxu0 0
    %2333 = vmatmul.mubr.bf16.gmra.mrb[0].mxu0 %v2298
    %v2334 = vpop.f32.mrb[0].mxu0
    %v2335 = vadd.f32 0.0, %v2334
    %v2336 = vpop.f32.mrb[0].mxu0
    %v2337 = vpop.f32.mrb[0].mxu0
    %v2338 = vpop.f32.mrb[0].mxu0
    %2339 = vdwg.mxu0
    %2340 = vrot.lane.b32.xlu0 %v1525, 72
    %v2341 = vpop.permute.xlu0 %2340
    %v2344 = vsel %vm1233, %v2293, 0
    %2346 = vmatprep.subr.bf16.mxu0 0
    %2347 = vmatpush1.bf16.msra.mxu0 %v2341
    %2348 = vmatprep.subr.bf16.mxu0 0
    %2349 = vmatpush1.bf16.msra.mxu0 0
    %2350 = vmatprep.subr.bf16.mxu0 0
    %2351 = vmatpush1.bf16.msra.mxu0 0
    %2352 = vmatprep.subr.bf16.mxu0 0
    %2353 = vmatpush1.bf16.msra.mxu0 0
    %2354 = vmatprep.subr.bf16.mxu0 0
    %2355 = vmatpush1.bf16.msra.mxu0 0
    %2356 = vmatprep.subr.bf16.mxu0 0
    %2357 = vmatpush1.bf16.msra.mxu0 0
    %2358 = vmatprep.subr.bf16.mxu0 0
    %2359 = vmatpush1.bf16.msra.mxu0 0
    %2360 = vmatprep.subr.bf16.mxu0 0
    %2361 = vmatpush1.bf16.msra.mxu0 0
    %2362 = vmatprep.subr.bf16.mxu0 0
    %2363 = vmatpush1.bf16.msra.mxu0 0
    %2364 = vmatprep.subr.bf16.mxu0 0
    %2365 = vmatpush1.bf16.msra.mxu0 0
    %2366 = vmatprep.subr.bf16.mxu0 0
    %2367 = vmatpush1.bf16.msra.mxu0 0
    %2368 = vmatprep.subr.bf16.mxu0 0
    %2369 = vmatpush1.bf16.msra.mxu0 0
    %2370 = vmatprep.subr.bf16.mxu0 0
    %2371 = vmatpush1.bf16.msra.mxu0 0
    %2372 = vmatprep.subr.bf16.mxu0 0
    %2373 = vmatpush1.bf16.msra.mxu0 0
    %2374 = vmatprep.subr.bf16.mxu0 0
    %2375 = vmatpush1.bf16.msra.mxu0 0
    %2376 = vmatprep.subr.bf16.mxu0 0
    %2377 = vmatpush1.bf16.msra.mxu0 0
    %2378 = vmatprep.mubr.bf16.mxu0 0
    %2379 = vmatmul.mubr.bf16.gmra.mrb[0].mxu0 %v2344
    %v2380 = vpop.f32.mrb[0].mxu0
    %v2381 = vadd.f32 0.0, %v2380
    %v2382 = vpop.f32.mrb[0].mxu0
    %v2383 = vpop.f32.mrb[0].mxu0
    %v2384 = vpop.f32.mrb[0].mxu0
    %2385 = vdwg.mxu0
    %2388 = vrot.lane.b32.xlu0 %v1903, 8
    %v2389 = vpop.permute.xlu0 %2388
    %2390 = vrot.lane.b32.xlu0 %v1949, 8
    %v2391 = vpop.permute.xlu0 %2390
    %2396 = vrot.lane.b32.xlu0 %v2119, 16
    %v2397 = vpop.permute.xlu0 %2396
    %2398 = vrot.lane.b32.xlu0 %v2165, 16
    %v2399 = vpop.permute.xlu0 %2398
    %2404 = vrot.lane.b32.xlu0 %v2335, 24
    %v2405 = vpop.permute.xlu0 %2404
    %2406 = vrot.lane.b32.xlu0 %v2381, 24
    %v2407 = vpop.permute.xlu0 %2406
    %v2410 = vsel %vm330, %v1684, %v2389
    %v2411 = vsel %vm330, %v1731, %v2391
    %v2412 = vsel %vm1233, %v2410, %v2397
    %v2413 = vsel %vm1233, %v2411, %v2399
    %v2414 = vsel %vm1236, %v2412, %v2405
    %v2415 = vsel %vm1236, %v2413, %v2407
    %v2416 = vpack.c.bf16 %v2415, %v2414
    %v2421 = vunpack.c.l.b16 %v1518
    %v2422 = vunpack.c.l.b16 %v1519
    %v2423 = vunpack.c.l.b16 %v1520
    %v2424 = vunpack.c.l.b16 %v1521
    %v2425 = vpack.c.b16 %v2422, %v2421
    %v2426 = vpack.c.b16 %v2424, %v2423
    %v2430 = vsel %vm187, %v2416, 0
    %2432 = vmatprep.subr.bf16.mxu0 0
    %2433 = vmatpush1.bf16.msra.mxu0 %v2425
    %2434 = vmatprep.subr.bf16.mxu0 0
    %2435 = vmatpush1.bf16.msra.mxu0 %v2426
    %2436 = vmatprep.subr.bf16.mxu0 0
    %2437 = vmatpush1.bf16.msra.mxu0 0
    %2438 = vmatprep.subr.bf16.mxu0 0
    %2439 = vmatpush1.bf16.msra.mxu0 0
    %2440 = vmatprep.subr.bf16.mxu0 0
    %2441 = vmatpush1.bf16.msra.mxu0 0
    %2442 = vmatprep.subr.bf16.mxu0 0
    %2443 = vmatpush1.bf16.msra.mxu0 0
    %2444 = vmatprep.subr.bf16.mxu0 0
    %2445 = vmatpush1.bf16.msra.mxu0 0
    %2446 = vmatprep.subr.bf16.mxu0 0
    %2447 = vmatpush1.bf16.msra.mxu0 0
    %2448 = vmatprep.subr.bf16.mxu0 0
    %2449 = vmatpush1.bf16.msra.mxu0 0
    %2450 = vmatprep.subr.bf16.mxu0 0
    %2451 = vmatpush1.bf16.msra.mxu0 0
    %2452 = vmatprep.subr.bf16.mxu0 0
    %2453 = vmatpush1.bf16.msra.mxu0 0
    %2454 = vmatprep.subr.bf16.mxu0 0
    %2455 = vmatpush1.bf16.msra.mxu0 0
    %2456 = vmatprep.subr.bf16.mxu0 0
    %2457 = vmatpush1.bf16.msra.mxu0 0
    %2458 = vmatprep.subr.bf16.mxu0 0
    %2459 = vmatpush1.bf16.msra.mxu0 0
    %2460 = vmatprep.subr.bf16.mxu0 0
    %2461 = vmatpush1.bf16.msra.mxu0 0
    %2462 = vmatprep.subr.bf16.mxu0 0
    %2463 = vmatpush1.bf16.msra.mxu0 0
    %2464 = vmatprep.mubr.bf16.mxu0 0
    %2465 = vmatmul.mubr.bf16.gmra.mrb[0].mxu0 %v2430
    %v2466 = vpop.f32.mrb[0].mxu0
    %v2467 = vadd.f32 0.0, %v2466
    %v2468 = vpop.f32.mrb[0].mxu0
    %v2469 = vpop.f32.mrb[0].mxu0
    %v2470 = vadd.f32 0.0, %v2469
    %v2471 = vpop.f32.mrb[0].mxu0
    %2472 = vdwg.mxu0
    %v2473 = vadd.f32 %v1296, %v2467
    %v2474 = vadd.f32 %v1297, %v2470
    %v2475 = vld [vmem:[%s17] sm:$0x1]
    %v2476 = vld [vmem:[%s18] sm:$0x1]
    %v2477 = vsel %vm187, %v2473, 0.0
    %2478 = vadd.xlane.f32.xlu0 %v2477
    %v2479 = vpop.xlane.xlu0 %2478
    %v2480 = vsel %vm187, %v2474, 0.0
    %2481 = vadd.xlane.f32.xlu0 %v2480
    %v2482 = vpop.xlane.xlu0 %2481
    %v2483 = vmul.f32 %v2479, %v194
    %v2484 = vmul.f32 %v2482, %v194
    %v2485 = vsub.f32 %v2473, %v2483
    %v2486 = vsub.f32 %v2474, %v2484
    %v2487 = vmul.f32 %v2485, %v2485
    %v2488 = vmul.f32 %v2486, %v2486
    %v2489 = vsel %vm187, %v2487, 0.0
    %2490 = vadd.xlane.f32.xlu0 %v2489
    %v2491 = vpop.xlane.xlu0 %2490
    %v2492 = vsel %vm187, %v2488, 0.0
    %2493 = vadd.xlane.f32.xlu0 %v2492
    %v2494 = vpop.xlane.xlu0 %2493
    %v2495 = vmul.f32 %v2491, %v194
    %v2496 = vmul.f32 %v2494, %v194
    %v2497 = vadd.f32 %v2495, 1e-05
    %v2498 = vadd.f32 %v2496, 1e-05
    %v2499 = vrsqrt.pop %v2497
    %v2500 = vrsqrt.pop %v2498
    %v2501 = vmul.f32 %v2485, %v2499
    %v2502 = vmul.f32 %v2486, %v2500
    %v2504 = vlaneseq
    %v2505 = vshrl.u32 %v2504, 7
    %v2506 = vsub.s32 0, %v2505
    %v2507 = vrot.slane %v2475, %v2506
    %v2509 = vmul.f32 %v2501, %v2507
    %v2510 = vmul.f32 %v2502, %v2507
    %v2512 = vlaneseq
    %v2513 = vshrl.u32 %v2512, 7
    %v2514 = vsub.s32 0, %v2513
    %v2515 = vrot.slane %v2476, %v2514
    %v2517 = vadd.f32 %v2509, %v2515
    %v2518 = vadd.f32 %v2510, %v2515
    %v2519 = vpack.c.bf16 %v2518, %v2517
    %v2520 = vld [vmem:[#allocation14] sm:$0xf]
    %v2521 = vld [vmem:[#allocation14 + $0x4] sm:$0xf]
    %v2522 = vld [vmem:[#allocation14 + $0x8] sm:$0xf]
    %v2523 = vld [vmem:[#allocation14 + $0xc] sm:$0xf]
    %v2524 = vld [vmem:[%s10] sm:$0x1]
    %v2526 = vlaneseq
    %v2527 = vshrl.u32 %v2526, 7
    %v2528 = vsub.s32 0, %v2527
    %v2529 = vrot.slane %v2524, %v2528
    %v2535 = vunpack.c.l.b16 %v2520
    %v2536 = vunpack.c.l.b16 %v2521
    %v2537 = vunpack.c.l.b16 %v2522
    %v2538 = vunpack.c.l.b16 %v2523
    %v2539 = vpack.c.b16 %v2536, %v2535
    %v2540 = vpack.c.b16 %v2538, %v2537
    %v2544 = vsel %vm187, %v2519, 0
    %2546 = vmatprep.subr.bf16.mxu0 0
    %2547 = vmatpush1.bf16.msra.mxu0 %v2539
    %2548 = vmatprep.subr.bf16.mxu0 0
    %2549 = vmatpush1.bf16.msra.mxu0 %v2540
    %2550 = vmatprep.subr.bf16.mxu0 0
    %2551 = vmatpush1.bf16.msra.mxu0 0
    %2552 = vmatprep.subr.bf16.mxu0 0
    %2553 = vmatpush1.bf16.msra.mxu0 0
    %2554 = vmatprep.subr.bf16.mxu0 0
    %2555 = vmatpush1.bf16.msra.mxu0 0
    %2556 = vmatprep.subr.bf16.mxu0 0
    %2557 = vmatpush1.bf16.msra.mxu0 0
    %2558 = vmatprep.subr.bf16.mxu0 0
    %2559 = vmatpush1.bf16.msra.mxu0 0
    %2560 = vmatprep.subr.bf16.mxu0 0
    %2561 = vmatpush1.bf16.msra.mxu0 0
    %2562 = vmatprep.subr.bf16.mxu0 0
    %2563 = vmatpush1.bf16.msra.mxu0 0
    %2564 = vmatprep.subr.bf16.mxu0 0
    %2565 = vmatpush1.bf16.msra.mxu0 0
    %2566 = vmatprep.subr.bf16.mxu0 0
    %2567 = vmatpush1.bf16.msra.mxu0 0
    %2568 = vmatprep.subr.bf16.mxu0 0
    %2569 = vmatpush1.bf16.msra.mxu0 0
    %2570 = vmatprep.subr.bf16.mxu0 0
    %2571 = vmatpush1.bf16.msra.mxu0 0
    %2572 = vmatprep.subr.bf16.mxu0 0
    %2573 = vmatpush1.bf16.msra.mxu0 0
    %2574 = vmatprep.subr.bf16.mxu0 0
    %2575 = vmatpush1.bf16.msra.mxu0 0
    %2576 = vmatprep.subr.bf16.mxu0 0
    %2577 = vmatpush1.bf16.msra.mxu0 0
    %2578 = vmatprep.mubr.bf16.mxu0 0
    %2579 = vmatmul.mubr.bf16.gmra.mrb[0].mxu0 %v2544
    %v2580 = vpop.f32.mrb[0].mxu0
    %v2581 = vadd.f32 %v2529, %v2580
    %v2582 = vpop.f32.mrb[0].mxu0
    %v2583 = vpop.f32.mrb[0].mxu0
    %v2584 = vadd.f32 %v2529, %v2583
    %v2585 = vpop.f32.mrb[0].mxu0
    %2586 = vdwg.mxu0
    %v2587 = vmax.f32 %v2581, 0.0
    %v2588 = vmax.f32 %v2584, 0.0
    %v2589 = vpack.c.bf16 %v2588, %v2587
    %v2590 = vld [vmem:[%s11] sm:$0xf]
    %v2591 = vld [vmem:[%s11 + $0x4] sm:$0xf]
    %v2592 = vld [vmem:[%s11 + $0x8] sm:$0xf]
    %v2593 = vld [vmem:[%s11 + $0xc] sm:$0xf]
    %v2594 = vld [vmem:[%s11 + $0x10] sm:$0xf]
    %v2595 = vld [vmem:[%s11 + $0x14] sm:$0xf]
    %v2596 = vld [vmem:[%s11 + $0x18] sm:$0xf]
    %v2597 = vld [vmem:[%s11 + $0x1c] sm:$0xf]
    %v2598 = vld [vmem:[%s12] sm:$0x1]
    %v2600 = vlaneseq
    %v2601 = vshrl.u32 %v2600, 7
    %v2602 = vsub.s32 0, %v2601
    %v2603 = vrot.slane %v2598, %v2602
    %v2613 = vunpack.c.l.b16 %v2590
    %v2614 = vunpack.c.l.b16 %v2591
    %v2615 = vunpack.c.l.b16 %v2592
    %v2616 = vunpack.c.l.b16 %v2593
    %v2617 = vunpack.c.l.b16 %v2594
    %v2618 = vunpack.c.l.b16 %v2595
    %v2619 = vunpack.c.l.b16 %v2596
    %v2620 = vunpack.c.l.b16 %v2597
    %v2621 = vpack.c.b16 %v2614, %v2613
    %v2622 = vpack.c.b16 %v2616, %v2615
    %v2623 = vpack.c.b16 %v2618, %v2617
    %v2624 = vpack.c.b16 %v2620, %v2619
    %v2630 = vsel %vm276, %v2589, 0
    %2632 = vmatprep.subr.bf16.mxu0 0
    %2633 = vmatpush1.bf16.msra.mxu0 %v2621
    %2634 = vmatprep.subr.bf16.mxu0 0
    %2635 = vmatpush1.bf16.msra.mxu0 %v2622
    %2636 = vmatprep.subr.bf16.mxu0 0
    %2637 = vmatpush1.bf16.msra.mxu0 %v2623
    %2638 = vmatprep.subr.bf16.mxu0 0
    %2639 = vmatpush1.bf16.msra.mxu0 %v2624
    %2640 = vmatprep.subr.bf16.mxu0 0
    %2641 = vmatpush1.bf16.msra.mxu0 0
    %2642 = vmatprep.subr.bf16.mxu0 0
    %2643 = vmatpush1.bf16.msra.mxu0 0
    %2644 = vmatprep.subr.bf16.mxu0 0
    %2645 = vmatpush1.bf16.msra.mxu0 0
    %2646 = vmatprep.subr.bf16.mxu0 0
    %2647 = vmatpush1.bf16.msra.mxu0 0
    %2648 = vmatprep.subr.bf16.mxu0 0
    %2649 = vmatpush1.bf16.msra.mxu0 0
    %2650 = vmatprep.subr.bf16.mxu0 0
    %2651 = vmatpush1.bf16.msra.mxu0 0
    %2652 = vmatprep.subr.bf16.mxu0 0
    %2653 = vmatpush1.bf16.msra.mxu0 0
    %2654 = vmatprep.subr.bf16.mxu0 0
    %2655 = vmatpush1.bf16.msra.mxu0 0
    %2656 = vmatprep.subr.bf16.mxu0 0
    %2657 = vmatpush1.bf16.msra.mxu0 0
    %2658 = vmatprep.subr.bf16.mxu0 0
    %2659 = vmatpush1.bf16.msra.mxu0 0
    %2660 = vmatprep.subr.bf16.mxu0 0
    %2661 = vmatpush1.bf16.msra.mxu0 0
    %2662 = vmatprep.subr.bf16.mxu0 0
    %2663 = vmatpush1.bf16.msra.mxu0 0
    %2664 = vmatprep.mubr.bf16.mxu0 0
    %2665 = vmatmul.mubr.bf16.gmra.mrb[0].mxu0 %v2630
    %v2666 = vpop.f32.mrb[0].mxu0
    %v2667 = vadd.f32 %v2603, %v2666
    %v2668 = vpop.f32.mrb[0].mxu0
    %v2669 = vpop.f32.mrb[0].mxu0
    %v2670 = vadd.f32 %v2603, %v2669
    %v2671 = vpop.f32.mrb[0].mxu0
    %2672 = vdwg.mxu0
    %v2673 = vadd.f32 %v2473, %v2667
    %v2674 = vadd.f32 %v2474, %v2670
    %2675 = vst.msk [vmem:[#allocation16] sm:$0xff] %vm187, %v2673
    %2676 = vst.msk [vmem:[#allocation16 + $0x8] sm:$0xff] %vm187, %v2674
    // Predicated region
    $region110: #{tpu_custom_call.1} parent=1 // pred_check
      _
    $region111: #{tpu_custom_call.1} parent=1 // pred_check_branch
      %2678 = sbr.rel (0) target = $region113
    $region112: #{tpu_custom_call.1} parent=1 // pred_region
      %s2680 = ssub.s32 256, 256
      %2681 = vsyncadd [#allocation4], %s2680
      %s2682 = sshll.u32 [#allocation16], 4
      %s2683 = int_to_ptr.vmem [resolvable:$true] %s2682
      %2688 = dma.vmem_to_hbm [thread:$0]  %s2683, 256, %s19, [#allocation4], 128, 128, 8
    $region113: #{tpu_custom_call.1} parent=1 // pred_fallthru
      _
    // Predicated region
    $region114: #{tpu_custom_call.1} parent=1 // pred_check
      _
    $region115: #{tpu_custom_call.1} parent=1 // pred_check_branch
      %2690 = sbr.rel (0) target = $region117
    $region116: #{tpu_custom_call.1} parent=1 // pred_region
      %2691 = dma.done [#allocation4], 256
    $region117: #{tpu_custom_call.1} parent=1 // pred_fallthru
      _
    %2692 = vsyncpa [#allocation3], 1
    %2693 = vsyncpa [#allocation6], 1
    %2694 = vsyncpa [#allocation9], 1
    %2695 = vsyncpa [#allocation12], 1
    %2696 = vsyncpa [#allocation15], 1
    %2697 = vsyncpa [#allocation4], 1

</llo_original>
